<compile_context>
chip_gen: v5e
topology: v5e:2x2
jax: 0.10.0
libtpu: 0.0.40
codegen_flags: <defaults>
</compile_context>

<pallas_src>
import functools

import jax
import jax.numpy as jnp
from jax import lax
from jax.experimental import pallas as pl
from jax.experimental.pallas import tpu as pltpu


def _fused_gru_kernel(*refs, seq_len, batch, hid_dim, n_layers):
    """All layers + all timesteps of the stacked GRU in one kernel invocation.

    refs layout:
      refs[0]                     x_ref    (T, B, D_in)
      refs[1 + 4*l : 5 + 4*l]     layer l: wih (3, Din, H), whh (3, H, H),
                                           bi  (3, 1, H),   bhn (1, H)
      refs[1 + 4*n_layers]        out_ref  (T, B, H)  last layer's output sequence
      refs[2 + 4*n_layers:]       scratch  seq_scr, gi_r, gi_z, gi_n  (T, B, H) f32
    """
    x_ref = refs[0]
    w_refs = refs[1:1 + 4 * n_layers]
    out_ref = refs[1 + 4 * n_layers]
    seq_scr, gir_scr, giz_scr, gin_scr = refs[2 + 4 * n_layers:]

    for layer in range(n_layers):
        wih_ref, whh_ref, bi_ref, bhn_ref = w_refs[4 * layer: 4 * layer + 4]
        in_ref = x_ref if layer == 0 else seq_scr
        din = in_ref.shape[-1]

        # ---- Phase 1: hoisted input projection, one big GEMM per gate. ----
        x_all = in_ref[...].astype(jnp.float32).reshape(seq_len * batch, din)
        gir_scr[...] = (jnp.dot(x_all, wih_ref[0],
                                preferred_element_type=jnp.float32)
                        + bi_ref[0]).reshape(seq_len, batch, hid_dim)
        giz_scr[...] = (jnp.dot(x_all, wih_ref[1],
                                preferred_element_type=jnp.float32)
                        + bi_ref[1]).reshape(seq_len, batch, hid_dim)
        gin_scr[...] = (jnp.dot(x_all, wih_ref[2],
                                preferred_element_type=jnp.float32)
                        + bi_ref[2]).reshape(seq_len, batch, hid_dim)

        # ---- Phase 2: sequential recurrence (only small matmuls remain). ----
        w_hr = whh_ref[0]                                   # (H, H)
        w_hz = whh_ref[1]
        w_hn = whh_ref[2]
        b_hn = jnp.broadcast_to(bhn_ref[...], (batch, hid_dim)).astype(jnp.float32)
        is_last = layer == n_layers - 1

        def step(t, h):
            g_r = gir_scr[t] + jnp.dot(h, w_hr, preferred_element_type=jnp.float32)
            g_z = giz_scr[t] + jnp.dot(h, w_hz, preferred_element_type=jnp.float32)
            g_hn = jnp.dot(h, w_hn, preferred_element_type=jnp.float32) + b_hn
            r = jax.nn.sigmoid(g_r)
            z = jax.nn.sigmoid(g_z)
            n = jnp.tanh(gin_scr[t] + r * g_hn)
            h_new = (1.0 - z) * n + z * h
            if is_last:
                out_ref[t] = h_new.astype(out_ref.dtype)
            else:
                seq_scr[t] = h_new
            return h_new

        h0 = jnp.zeros((batch, hid_dim), jnp.float32)
        _ = lax.fori_loop(0, seq_len, step, h0, unroll=True)


def _prep_layer_weights(w_ih, w_hh, b_ih, b_hh, hid_dim):
    """Restack PyTorch-layout GRU weights into lane-dense per-gate form."""
    H = hid_dim
    wih_s = jnp.stack([w_ih[0:H].T, w_ih[H:2 * H].T, w_ih[2 * H:3 * H].T])  # (3,Din,H)
    whh_s = jnp.stack([w_hh[0:H].T, w_hh[H:2 * H].T, w_hh[2 * H:3 * H].T])  # (3,H,H)
    bi_s = jnp.stack([
        (b_ih[0:H] + b_hh[0:H]).reshape(1, H),              # r: b_ir + b_hr folded
        (b_ih[H:2 * H] + b_hh[H:2 * H]).reshape(1, H),      # z: b_iz + b_hz folded
        b_ih[2 * H:3 * H].reshape(1, H),                    # n: b_in (input side)
    ])                                                       # (3, 1, H)
    bhn = b_hh[2 * H:3 * H].reshape(1, H)                    # b_hn stays gated by r
    return wih_s, whh_s, bi_s, bhn


def _gru_stack_pallas(x_tm, flat_weights, hid_dim, n_layers):
    """Run the full stacked GRU. x_tm: (T, B, D_in) time-major. Returns (T, B, H)."""
    T, B, _ = x_tm.shape
    H = hid_dim

    def full_spec(shape):
        nd = len(shape)
        return pl.BlockSpec(shape, lambda *_, nd=nd: (0,) * nd)

    kernel = functools.partial(_fused_gru_kernel, seq_len=T, batch=B,
                               hid_dim=H, n_layers=n_layers)

    return pl.pallas_call(
        kernel,
        out_shape=jax.ShapeDtypeStruct((T, B, H), x_tm.dtype),
        grid_spec=pltpu.PrefetchScalarGridSpec(
            num_scalar_prefetch=0,
            grid=(1,),
            in_specs=[full_spec(x_tm.shape)]
                     + [full_spec(w.shape) for w in flat_weights],
            out_specs=full_spec((T, B, H)),
            scratch_shapes=[
                pltpu.VMEM((T, B, H), jnp.float32),   # inter-layer sequence buffer
                pltpu.VMEM((T, B, H), jnp.float32),   # gi_r (hoisted r-gate input proj)
                pltpu.VMEM((T, B, H), jnp.float32),   # gi_z
                pltpu.VMEM((T, B, H), jnp.float32),   # gi_n
            ],
        ),
        compiler_params=pltpu.CompilerParams(
            dimension_semantics=("arbitrary",)),      # recurrence is sequential
    )(x_tm, *flat_weights)


def init_gru_params(key, in_dim, hid_dim, n_layers):
    """Deterministic init matching nn.GRU parameter shapes (uniform +-1/sqrt(H))."""
    params = []
    bound = 1.0 / float(hid_dim) ** 0.5
    for layer in range(n_layers):
        layer_in = in_dim if layer == 0 else hid_dim
        key, k1, k2, k3, k4 = jax.random.split(key, 5)
        w_ih = jax.random.uniform(k1, (3 * hid_dim, layer_in), jnp.float32,
                                  -bound, bound)
        w_hh = jax.random.uniform(k2, (3 * hid_dim, hid_dim), jnp.float32,
                                  -bound, bound)
        b_ih = jax.random.uniform(k3, (3 * hid_dim,), jnp.float32, -bound, bound)
        b_hh = jax.random.uniform(k4, (3 * hid_dim,), jnp.float32, -bound, bound)
        params.append((w_ih, w_hh, b_ih, b_hh))
    return params


def gru_layer_forward(x_bf, params, hid_dim, n_layers):
    """Equivalent of GRULayer.forward. x_bf: (B, T, in_dim) batch-first.

    Returns (out, h) with out = out_batch_first[-1, :, :] -> (T, H)
                         h   = h_n[-1, :, :]              -> (B, H)
    """
    # TODO(synk): inter-layer dropout (training mode, p>0) is not implemented;
    # this matches eval mode / dropout=0.0 exactly.
    x_tm = jnp.transpose(x_bf, (1, 0, 2))                      # (T, B, D) time-major
    flat = []
    for (w_ih, w_hh, b_ih, b_hh) in params:
        flat.extend(_prep_layer_weights(w_ih, w_hh, b_ih, b_hh, hid_dim))
    out_tm = _gru_stack_pallas(x_tm, flat, hid_dim, n_layers)  # (T, B, H)
    out = out_tm[:, -1, :]        # == out_batch_first[-1, :, :]  (T, H)
    h = out_tm[-1]                # == h_n[-1, :, :]              (B, H)
    return out, h


def _gru_reference(x_bf, params, hid_dim):
    """Pure-JAX reference (PyTorch GRU gate equations)."""
    B, T, _ = x_bf.shape
    H = hid_dim
    layer_in = jnp.transpose(x_bf, (1, 0, 2))     # (T, B, D)
    for (w_ih, w_hh, b_ih, b_hh) in params:
        h = jnp.zeros((B, H), jnp.float32)
        outs = []
        for t in range(T):
            gi = layer_in[t] @ w_ih.T + b_ih
            gh = h @ w_hh.T + b_hh
            r = jax.nn.sigmoid(gi[:, :H] + gh[:, :H])
            z = jax.nn.sigmoid(gi[:, H:2 * H] + gh[:, H:2 * H])
            n = jnp.tanh(gi[:, 2 * H:] + r * gh[:, 2 * H:])
            h = (1.0 - z) * n + z * h
            outs.append(h)
        layer_in = jnp.stack(outs)
    out_bf = jnp.transpose(layer_in, (1, 0, 2))
    return out_bf[-1, :, :], layer_in[-1]


if __name__ == "__main__":
    B, T = 2, 8
    in_dim, hid_dim, n_layers = 4, 32, 2

    key = jax.random.PRNGKey(0)
    k_x, k_p = jax.random.split(key)
    x = jax.random.normal(k_x, (B, T, in_dim), jnp.float32)    # batch-first input
    params = init_gru_params(k_p, in_dim, hid_dim, n_layers)

    forward = jax.jit(functools.partial(gru_layer_forward, hid_dim=hid_dim,
                                        n_layers=n_layers))
    out, h = forward(x, params)
    out, h = jax.block_until_ready(out), jax.block_until_ready(h)

    assert out.shape == (T, hid_dim), out.shape
    assert h.shape == (B, hid_dim), h.shape
    assert bool(jnp.all(jnp.isfinite(out))) and bool(jnp.all(jnp.isfinite(h)))

    ref_out, ref_h = _gru_reference(x, params, hid_dim)
    assert jnp.allclose(out, ref_out, rtol=1e-3, atol=1e-4), \
        float(jnp.max(jnp.abs(out - ref_out)))
    assert jnp.allclose(h, ref_h, rtol=1e-3, atol=1e-4), \
        float(jnp.max(jnp.abs(h - ref_h)))
    print("KERNEL_OK")
</pallas_src>

<mosaic_0001>
module attributes {stable_mosaic.version = 11 : i64} {
  func.func @_fused_gru_kernel(%arg0: i32, %arg1: memref<8x2x4xf32, #tpu.memory_space<vmem>>, %arg2: memref<3x4x32xf32, #tpu.memory_space<vmem>>, %arg3: memref<3x32x32xf32, #tpu.memory_space<vmem>>, %arg4: memref<3x1x32xf32, #tpu.memory_space<vmem>>, %arg5: memref<1x32xf32, #tpu.memory_space<vmem>>, %arg6: memref<3x32x32xf32, #tpu.memory_space<vmem>>, %arg7: memref<3x32x32xf32, #tpu.memory_space<vmem>>, %arg8: memref<3x1x32xf32, #tpu.memory_space<vmem>>, %arg9: memref<1x32xf32, #tpu.memory_space<vmem>>, %arg10: memref<8x2x32xf32, #tpu.memory_space<vmem>>, %arg11: memref<8x2x32xf32, #tpu.memory_space<vmem>>, %arg12: memref<8x2x32xf32, #tpu.memory_space<vmem>>, %arg13: memref<8x2x32xf32, #tpu.memory_space<vmem>>, %arg14: memref<8x2x32xf32, #tpu.memory_space<vmem>>) attributes {dimension_semantics = [#tpu.dimension_semantics<arbitrary>], iteration_bounds = array<i64: 1>, scalar_prefetch = 0 : i64, scratch_operands = 4 : i64, tpu.core_type = #tpu.core_type<tc>, window_params = [{pipeline_mode = #tpu.pipeline_mode<synchronous>, transform_indices = @transform_0, window_bounds = array<i64: 8, 2, 4>}, {pipeline_mode = #tpu.pipeline_mode<synchronous>, transform_indices = @transform_1, window_bounds = array<i64: 3, 4, 32>}, {pipeline_mode = #tpu.pipeline_mode<synchronous>, transform_indices = @transform_2, window_bounds = array<i64: 3, 32, 32>}, {pipeline_mode = #tpu.pipeline_mode<synchronous>, transform_indices = @transform_3, window_bounds = array<i64: 3, 1, 32>}, {pipeline_mode = #tpu.pipeline_mode<synchronous>, transform_indices = @transform_4, window_bounds = array<i64: 1, 32>}, {pipeline_mode = #tpu.pipeline_mode<synchronous>, transform_indices = @transform_5, window_bounds = array<i64: 3, 32, 32>}, {pipeline_mode = #tpu.pipeline_mode<synchronous>, transform_indices = @transform_6, window_bounds = array<i64: 3, 32, 32>}, {pipeline_mode = #tpu.pipeline_mode<synchronous>, transform_indices = @transform_7, window_bounds = array<i64: 3, 1, 32>}, {pipeline_mode = #tpu.pipeline_mode<synchronous>, transform_indices = @transform_8, window_bounds = array<i64: 1, 32>}, {pipeline_mode = #tpu.pipeline_mode<synchronous>, transform_indices = @transform_9, window_bounds = array<i64: 8, 2, 32>}]} {
    %c0 = arith.constant 0 : index
    %c0_0 = arith.constant 0 : index
    %c0_1 = arith.constant 0 : index
    %0 = vector.load %arg1[%c0, %c0_0, %c0_1] : memref<8x2x4xf32, #tpu.memory_space<vmem>>, vector<8x2x4xf32>
    %1 = vector.shape_cast %0 : vector<8x2x4xf32> to vector<16x4xf32>
    %c0_2 = arith.constant 0 : index
    %c0_3 = arith.constant 0 : index
    %c0_4 = arith.constant 0 : index
    %2 = vector.load %arg2[%c0_2, %c0_3, %c0_4] : memref<3x4x32xf32, #tpu.memory_space<vmem>>, vector<1x4x32xf32>
    %3 = vector.shape_cast %2 : vector<1x4x32xf32> to vector<4x32xf32>
    %cst = arith.constant dense<0.000000e+00> : vector<16x32xf32>
    %4 = tpu.matmul %1, %3, %cst {dimension_numbers = #tpu.dot_dimension_numbers<[1], [0], [0], [1], [0, 0, 1, 1], [], []>} : vector<16x4xf32>, vector<4x32xf32>, vector<16x32xf32> -> vector<16x32xf32>
    %c0_5 = arith.constant 0 : index
    %c0_6 = arith.constant 0 : index
    %c0_7 = arith.constant 0 : index
    %5 = vector.load %arg4[%c0_5, %c0_6, %c0_7] : memref<3x1x32xf32, #tpu.memory_space<vmem>>, vector<1x1x32xf32>
    %6 = vector.shape_cast %5 : vector<1x1x32xf32> to vector<1x32xf32>
    %7 = vector.broadcast %6 : vector<1x32xf32> to vector<16x32xf32>
    %8 = arith.addf %4, %7 : vector<16x32xf32>
    %9 = vector.shape_cast %8 : vector<16x32xf32> to vector<8x2x32xf32>
    %c0_8 = arith.constant 0 : index
    %c0_9 = arith.constant 0 : index
    %c0_10 = arith.constant 0 : index
    %10 = vector.load %arg12[%c0_8, %c0_9, %c0_10] : memref<8x2x32xf32, #tpu.memory_space<vmem>>, vector<8x2x32xf32>
    tpu.vector_store %arg12[%c0_8, %c0_9, %c0_10], %9 {strides = array<i32>} : memref<8x2x32xf32, #tpu.memory_space<vmem>>, vector<8x2x32xf32>,
    %c1 = arith.constant 1 : index
    %c0_11 = arith.constant 0 : index
    %c0_12 = arith.constant 0 : index
    %11 = vector.load %arg2[%c1, %c0_11, %c0_12] : memref<3x4x32xf32, #tpu.memory_space<vmem>>, vector<1x4x32xf32>
    %12 = vector.shape_cast %11 : vector<1x4x32xf32> to vector<4x32xf32>
    %cst_13 = arith.constant dense<0.000000e+00> : vector<16x32xf32>
    %13 = tpu.matmul %1, %12, %cst_13 {dimension_numbers = #tpu.dot_dimension_numbers<[1], [0], [0], [1], [0, 0, 1, 1], [], []>} : vector<16x4xf32>, vector<4x32xf32>, vector<16x32xf32> -> vector<16x32xf32>
    %c1_14 = arith.constant 1 : index
    %c0_15 = arith.constant 0 : index
    %c0_16 = arith.constant 0 : index
    %14 = vector.load %arg4[%c1_14, %c0_15, %c0_16] : memref<3x1x32xf32, #tpu.memory_space<vmem>>, vector<1x1x32xf32>
    %15 = vector.shape_cast %14 : vector<1x1x32xf32> to vector<1x32xf32>
    %16 = vector.broadcast %15 : vector<1x32xf32> to vector<16x32xf32>
    %17 = arith.addf %13, %16 : vector<16x32xf32>
    %18 = vector.shape_cast %17 : vector<16x32xf32> to vector<8x2x32xf32>
    %c0_17 = arith.constant 0 : index
    %c0_18 = arith.constant 0 : index
    %c0_19 = arith.constant 0 : index
    %19 = vector.load %arg13[%c0_17, %c0_18, %c0_19] : memref<8x2x32xf32, #tpu.memory_space<vmem>>, vector<8x2x32xf32>
    tpu.vector_store %arg13[%c0_17, %c0_18, %c0_19], %18 {strides = array<i32>} : memref<8x2x32xf32, #tpu.memory_space<vmem>>, vector<8x2x32xf32>,
    %c2 = arith.constant 2 : index
    %c0_20 = arith.constant 0 : index
    %c0_21 = arith.constant 0 : index
    %20 = vector.load %arg2[%c2, %c0_20, %c0_21] : memref<3x4x32xf32, #tpu.memory_space<vmem>>, vector<1x4x32xf32>
    %21 = vector.shape_cast %20 : vector<1x4x32xf32> to vector<4x32xf32>
    %cst_22 = arith.constant dense<0.000000e+00> : vector<16x32xf32>
    %22 = tpu.matmul %1, %21, %cst_22 {dimension_numbers = #tpu.dot_dimension_numbers<[1], [0], [0], [1], [0, 0, 1, 1], [], []>} : vector<16x4xf32>, vector<4x32xf32>, vector<16x32xf32> -> vector<16x32xf32>
    %c2_23 = arith.constant 2 : index
    %c0_24 = arith.constant 0 : index
    %c0_25 = arith.constant 0 : index
    %23 = vector.load %arg4[%c2_23, %c0_24, %c0_25] : memref<3x1x32xf32, #tpu.memory_space<vmem>>, vector<1x1x32xf32>
    %24 = vector.shape_cast %23 : vector<1x1x32xf32> to vector<1x32xf32>
    %25 = vector.broadcast %24 : vector<1x32xf32> to vector<16x32xf32>
    %26 = arith.addf %22, %25 : vector<16x32xf32>
    %27 = vector.shape_cast %26 : vector<16x32xf32> to vector<8x2x32xf32>
    %c0_26 = arith.constant 0 : index
    %c0_27 = arith.constant 0 : index
    %c0_28 = arith.constant 0 : index
    %28 = vector.load %arg14[%c0_26, %c0_27, %c0_28] : memref<8x2x32xf32, #tpu.memory_space<vmem>>, vector<8x2x32xf32>
    tpu.vector_store %arg14[%c0_26, %c0_27, %c0_28], %27 {strides = array<i32>} : memref<8x2x32xf32, #tpu.memory_space<vmem>>, vector<8x2x32xf32>,
    %c0_29 = arith.constant 0 : index
    %c0_30 = arith.constant 0 : index
    %c0_31 = arith.constant 0 : index
    %29 = vector.load %arg3[%c0_29, %c0_30, %c0_31] : memref<3x32x32xf32, #tpu.memory_space<vmem>>, vector<1x32x32xf32>
    %30 = vector.shape_cast %29 : vector<1x32x32xf32> to vector<32x32xf32>
    %c1_32 = arith.constant 1 : index
    %c0_33 = arith.constant 0 : index
    %c0_34 = arith.constant 0 : index
    %31 = vector.load %arg3[%c1_32, %c0_33, %c0_34] : memref<3x32x32xf32, #tpu.memory_space<vmem>>, vector<1x32x32xf32>
    %32 = vector.shape_cast %31 : vector<1x32x32xf32> to vector<32x32xf32>
    %c2_35 = arith.constant 2 : index
    %c0_36 = arith.constant 0 : index
    %c0_37 = arith.constant 0 : index
    %33 = vector.load %arg3[%c2_35, %c0_36, %c0_37] : memref<3x32x32xf32, #tpu.memory_space<vmem>>, vector<1x32x32xf32>
    %34 = vector.shape_cast %33 : vector<1x32x32xf32> to vector<32x32xf32>
    %c0_38 = arith.constant 0 : index
    %c0_39 = arith.constant 0 : index
    %35 = vector.load %arg5[%c0_38, %c0_39] : memref<1x32xf32, #tpu.memory_space<vmem>>, vector<1x32xf32>
    %36 = vector.shape_cast %35 : vector<1x32xf32> to vector<1x32xf32>
    %37 = vector.broadcast %36 : vector<1x32xf32> to vector<2x32xf32>
    %cst_40 = arith.constant 0.000000e+00 : f32
    %38 = vector.broadcast %cst_40 : f32 to vector<2x32xf32>
    %c0_i32 = arith.constant 0 : i32
    %39 = arith.index_cast %c0_i32 : i32 to index
    %c0_41 = arith.constant 0 : index
    %c0_42 = arith.constant 0 : index
    %40 = vector.load %arg12[%39, %c0_41, %c0_42] : memref<8x2x32xf32, #tpu.memory_space<vmem>>, vector<1x2x32xf32>
    %41 = vector.shape_cast %40 : vector<1x2x32xf32> to vector<2x32xf32>
    %cst_43 = arith.constant dense<0.000000e+00> : vector<2x32xf32>
    %42 = tpu.matmul %38, %30, %cst_43 {dimension_numbers = #tpu.dot_dimension_numbers<[1], [0], [0], [1], [0, 0, 1, 1], [], []>} : vector<2x32xf32>, vector<32x32xf32>, vector<2x32xf32> -> vector<2x32xf32>
    %43 = arith.addf %41, %42 : vector<2x32xf32>
    %44 = arith.index_cast %c0_i32 : i32 to index
    %c0_44 = arith.constant 0 : index
    %c0_45 = arith.constant 0 : index
    %45 = vector.load %arg13[%44, %c0_44, %c0_45] : memref<8x2x32xf32, #tpu.memory_space<vmem>>, vector<1x2x32xf32>
    %46 = vector.shape_cast %45 : vector<1x2x32xf32> to vector<2x32xf32>
    %cst_46 = arith.constant dense<0.000000e+00> : vector<2x32xf32>
    %47 = tpu.matmul %38, %32, %cst_46 {dimension_numbers = #tpu.dot_dimension_numbers<[1], [0], [0], [1], [0, 0, 1, 1], [], []>} : vector<2x32xf32>, vector<32x32xf32>, vector<2x32xf32> -> vector<2x32xf32>
    %48 = arith.addf %46, %47 : vector<2x32xf32>
    %cst_47 = arith.constant dense<0.000000e+00> : vector<2x32xf32>
    %49 = tpu.matmul %38, %34, %cst_47 {dimension_numbers = #tpu.dot_dimension_numbers<[1], [0], [0], [1], [0, 0, 1, 1], [], []>} : vector<2x32xf32>, vector<32x32xf32>, vector<2x32xf32> -> vector<2x32xf32>
    %50 = arith.addf %49, %37 : vector<2x32xf32>
    %51 = arith.negf %43 : vector<2x32xf32>
    %52 = math.exp %51 : vector<2x32xf32>
    %cst_48 = arith.constant 1.000000e+00 : f32
    %53 = vector.broadcast %cst_48 : f32 to vector<2x32xf32>
    %54 = arith.addf %53, %52 : vector<2x32xf32>
    %55 = arith.divf %53, %54 : vector<2x32xf32>
    %56 = arith.negf %48 : vector<2x32xf32>
    %57 = math.exp %56 : vector<2x32xf32>
    %cst_49 = arith.constant 1.000000e+00 : f32
    %58 = vector.broadcast %cst_49 : f32 to vector<2x32xf32>
    %59 = arith.addf %58, %57 : vector<2x32xf32>
    %60 = arith.divf %58, %59 : vector<2x32xf32>
    %61 = arith.index_cast %c0_i32 : i32 to index
    %c0_50 = arith.constant 0 : index
    %c0_51 = arith.constant 0 : index
    %62 = vector.load %arg14[%61, %c0_50, %c0_51] : memref<8x2x32xf32, #tpu.memory_space<vmem>>, vector<1x2x32xf32>
    %63 = vector.shape_cast %62 : vector<1x2x32xf32> to vector<2x32xf32>
    %64 = arith.mulf %55, %50 : vector<2x32xf32>
    %65 = arith.addf %63, %64 : vector<2x32xf32>
    %66 = math.tanh %65 : vector<2x32xf32>
    %cst_52 = arith.constant 1.000000e+00 : f32
    %67 = vector.broadcast %cst_52 : f32 to vector<2x32xf32>
    %68 = arith.subf %67, %60 : vector<2x32xf32>
    %69 = arith.mulf %68, %66 : vector<2x32xf32>
    %70 = arith.mulf %60, %38 : vector<2x32xf32>
    %71 = arith.addf %69, %70 : vector<2x32xf32>
    %72 = arith.index_cast %c0_i32 : i32 to index
    %c0_53 = arith.constant 0 : index
    %c0_54 = arith.constant 0 : index
    %73 = vector.load %arg11[%72, %c0_53, %c0_54] : memref<8x2x32xf32, #tpu.memory_space<vmem>>, vector<1x2x32xf32>
    %74 = vector.shape_cast %73 : vector<1x2x32xf32> to vector<2x32xf32>
    %75 = vector.shape_cast %71 : vector<2x32xf32> to vector<1x2x32xf32>
    tpu.vector_store %arg11[%72, %c0_53, %c0_54], %75 {strides = array<i32>} : memref<8x2x32xf32, #tpu.memory_space<vmem>>, vector<1x2x32xf32>,
    %c1_i32 = arith.constant 1 : i32
    %76 = arith.index_cast %c1_i32 : i32 to index
    %c0_55 = arith.constant 0 : index
    %c0_56 = arith.constant 0 : index
    %77 = vector.load %arg12[%76, %c0_55, %c0_56] : memref<8x2x32xf32, #tpu.memory_space<vmem>>, vector<1x2x32xf32>
    %78 = vector.shape_cast %77 : vector<1x2x32xf32> to vector<2x32xf32>
    %cst_57 = arith.constant dense<0.000000e+00> : vector<2x32xf32>
    %79 = tpu.matmul %71, %30, %cst_57 {dimension_numbers = #tpu.dot_dimension_numbers<[1], [0], [0], [1], [0, 0, 1, 1], [], []>} : vector<2x32xf32>, vector<32x32xf32>, vector<2x32xf32> -> vector<2x32xf32>
    %80 = arith.addf %78, %79 : vector<2x32xf32>
    %81 = arith.index_cast %c1_i32 : i32 to index
    %c0_58 = arith.constant 0 : index
    %c0_59 = arith.constant 0 : index
    %82 = vector.load %arg13[%81, %c0_58, %c0_59] : memref<8x2x32xf32, #tpu.memory_space<vmem>>, vector<1x2x32xf32>
    %83 = vector.shape_cast %82 : vector<1x2x32xf32> to vector<2x32xf32>
    %cst_60 = arith.constant dense<0.000000e+00> : vector<2x32xf32>
    %84 = tpu.matmul %71, %32, %cst_60 {dimension_numbers = #tpu.dot_dimension_numbers<[1], [0], [0], [1], [0, 0, 1, 1], [], []>} : vector<2x32xf32>, vector<32x32xf32>, vector<2x32xf32> -> vector<2x32xf32>
    %85 = arith.addf %83, %84 : vector<2x32xf32>
    %cst_61 = arith.constant dense<0.000000e+00> : vector<2x32xf32>
    %86 = tpu.matmul %71, %34, %cst_61 {dimension_numbers = #tpu.dot_dimension_numbers<[1], [0], [0], [1], [0, 0, 1, 1], [], []>} : vector<2x32xf32>, vector<32x32xf32>, vector<2x32xf32> -> vector<2x32xf32>
    %87 = arith.addf %86, %37 : vector<2x32xf32>
    %88 = arith.negf %80 : vector<2x32xf32>
    %89 = math.exp %88 : vector<2x32xf32>
    %cst_62 = arith.constant 1.000000e+00 : f32
    %90 = vector.broadcast %cst_62 : f32 to vector<2x32xf32>
    %91 = arith.addf %90, %89 : vector<2x32xf32>
    %92 = arith.divf %90, %91 : vector<2x32xf32>
    %93 = arith.negf %85 : vector<2x32xf32>
    %94 = math.exp %93 : vector<2x32xf32>
    %cst_63 = arith.constant 1.000000e+00 : f32
    %95 = vector.broadcast %cst_63 : f32 to vector<2x32xf32>
    %96 = arith.addf %95, %94 : vector<2x32xf32>
    %97 = arith.divf %95, %96 : vector<2x32xf32>
    %98 = arith.index_cast %c1_i32 : i32 to index
    %c0_64 = arith.constant 0 : index
    %c0_65 = arith.constant 0 : index
    %99 = vector.load %arg14[%98, %c0_64, %c0_65] : memref<8x2x32xf32, #tpu.memory_space<vmem>>, vector<1x2x32xf32>
    %100 = vector.shape_cast %99 : vector<1x2x32xf32> to vector<2x32xf32>
    %101 = arith.mulf %92, %87 : vector<2x32xf32>
    %102 = arith.addf %100, %101 : vector<2x32xf32>
    %103 = math.tanh %102 : vector<2x32xf32>
    %cst_66 = arith.constant 1.000000e+00 : f32
    %104 = vector.broadcast %cst_66 : f32 to vector<2x32xf32>
    %105 = arith.subf %104, %97 : vector<2x32xf32>
    %106 = arith.mulf %105, %103 : vector<2x32xf32>
    %107 = arith.mulf %97, %71 : vector<2x32xf32>
    %108 = arith.addf %106, %107 : vector<2x32xf32>
    %109 = arith.index_cast %c1_i32 : i32 to index
    %c0_67 = arith.constant 0 : index
    %c0_68 = arith.constant 0 : index
    %110 = vector.load %arg11[%109, %c0_67, %c0_68] : memref<8x2x32xf32, #tpu.memory_space<vmem>>, vector<1x2x32xf32>
    %111 = vector.shape_cast %110 : vector<1x2x32xf32> to vector<2x32xf32>
    %112 = vector.shape_cast %108 : vector<2x32xf32> to vector<1x2x32xf32>
    tpu.vector_store %arg11[%109, %c0_67, %c0_68], %112 {strides = array<i32>} : memref<8x2x32xf32, #tpu.memory_space<vmem>>, vector<1x2x32xf32>,
    %c2_i32 = arith.constant 2 : i32
    %113 = arith.index_cast %c2_i32 : i32 to index
    %c0_69 = arith.constant 0 : index
    %c0_70 = arith.constant 0 : index
    %114 = vector.load %arg12[%113, %c0_69, %c0_70] : memref<8x2x32xf32, #tpu.memory_space<vmem>>, vector<1x2x32xf32>
    %115 = vector.shape_cast %114 : vector<1x2x32xf32> to vector<2x32xf32>
    %cst_71 = arith.constant dense<0.000000e+00> : vector<2x32xf32>
    %116 = tpu.matmul %108, %30, %cst_71 {dimension_numbers = #tpu.dot_dimension_numbers<[1], [0], [0], [1], [0, 0, 1, 1], [], []>} : vector<2x32xf32>, vector<32x32xf32>, vector<2x32xf32> -> vector<2x32xf32>
    %117 = arith.addf %115, %116 : vector<2x32xf32>
    %118 = arith.index_cast %c2_i32 : i32 to index
    %c0_72 = arith.constant 0 : index
    %c0_73 = arith.constant 0 : index
    %119 = vector.load %arg13[%118, %c0_72, %c0_73] : memref<8x2x32xf32, #tpu.memory_space<vmem>>, vector<1x2x32xf32>
    %120 = vector.shape_cast %119 : vector<1x2x32xf32> to vector<2x32xf32>
    %cst_74 = arith.constant dense<0.000000e+00> : vector<2x32xf32>
    %121 = tpu.matmul %108, %32, %cst_74 {dimension_numbers = #tpu.dot_dimension_numbers<[1], [0], [0], [1], [0, 0, 1, 1], [], []>} : vector<2x32xf32>, vector<32x32xf32>, vector<2x32xf32> -> vector<2x32xf32>
    %122 = arith.addf %120, %121 : vector<2x32xf32>
    %cst_75 = arith.constant dense<0.000000e+00> : vector<2x32xf32>
    %123 = tpu.matmul %108, %34, %cst_75 {dimension_numbers = #tpu.dot_dimension_numbers<[1], [0], [0], [1], [0, 0, 1, 1], [], []>} : vector<2x32xf32>, vector<32x32xf32>, vector<2x32xf32> -> vector<2x32xf32>
    %124 = arith.addf %123, %37 : vector<2x32xf32>
    %125 = arith.negf %117 : vector<2x32xf32>
    %126 = math.exp %125 : vector<2x32xf32>
    %cst_76 = arith.constant 1.000000e+00 : f32
    %127 = vector.broadcast %cst_76 : f32 to vector<2x32xf32>
    %128 = arith.addf %127, %126 : vector<2x32xf32>
    %129 = arith.divf %127, %128 : vector<2x32xf32>
    %130 = arith.negf %122 : vector<2x32xf32>
    %131 = math.exp %130 : vector<2x32xf32>
    %cst_77 = arith.constant 1.000000e+00 : f32
    %132 = vector.broadcast %cst_77 : f32 to vector<2x32xf32>
    %133 = arith.addf %132, %131 : vector<2x32xf32>
    %134 = arith.divf %132, %133 : vector<2x32xf32>
    %135 = arith.index_cast %c2_i32 : i32 to index
    %c0_78 = arith.constant 0 : index
    %c0_79 = arith.constant 0 : index
    %136 = vector.load %arg14[%135, %c0_78, %c0_79] : memref<8x2x32xf32, #tpu.memory_space<vmem>>, vector<1x2x32xf32>
    %137 = vector.shape_cast %136 : vector<1x2x32xf32> to vector<2x32xf32>
    %138 = arith.mulf %129, %124 : vector<2x32xf32>
    %139 = arith.addf %137, %138 : vector<2x32xf32>
    %140 = math.tanh %139 : vector<2x32xf32>
    %cst_80 = arith.constant 1.000000e+00 : f32
    %141 = vector.broadcast %cst_80 : f32 to vector<2x32xf32>
    %142 = arith.subf %141, %134 : vector<2x32xf32>
    %143 = arith.mulf %142, %140 : vector<2x32xf32>
    %144 = arith.mulf %134, %108 : vector<2x32xf32>
    %145 = arith.addf %143, %144 : vector<2x32xf32>
    %146 = arith.index_cast %c2_i32 : i32 to index
    %c0_81 = arith.constant 0 : index
    %c0_82 = arith.constant 0 : index
    %147 = vector.load %arg11[%146, %c0_81, %c0_82] : memref<8x2x32xf32, #tpu.memory_space<vmem>>, vector<1x2x32xf32>
    %148 = vector.shape_cast %147 : vector<1x2x32xf32> to vector<2x32xf32>
    %149 = vector.shape_cast %145 : vector<2x32xf32> to vector<1x2x32xf32>
    tpu.vector_store %arg11[%146, %c0_81, %c0_82], %149 {strides = array<i32>} : memref<8x2x32xf32, #tpu.memory_space<vmem>>, vector<1x2x32xf32>,
    %c3_i32 = arith.constant 3 : i32
    %150 = arith.index_cast %c3_i32 : i32 to index
    %c0_83 = arith.constant 0 : index
    %c0_84 = arith.constant 0 : index
    %151 = vector.load %arg12[%150, %c0_83, %c0_84] : memref<8x2x32xf32, #tpu.memory_space<vmem>>, vector<1x2x32xf32>
    %152 = vector.shape_cast %151 : vector<1x2x32xf32> to vector<2x32xf32>
    %cst_85 = arith.constant dense<0.000000e+00> : vector<2x32xf32>
    %153 = tpu.matmul %145, %30, %cst_85 {dimension_numbers = #tpu.dot_dimension_numbers<[1], [0], [0], [1], [0, 0, 1, 1], [], []>} : vector<2x32xf32>, vector<32x32xf32>, vector<2x32xf32> -> vector<2x32xf32>
    %154 = arith.addf %152, %153 : vector<2x32xf32>
    %155 = arith.index_cast %c3_i32 : i32 to index
    %c0_86 = arith.constant 0 : index
    %c0_87 = arith.constant 0 : index
    %156 = vector.load %arg13[%155, %c0_86, %c0_87] : memref<8x2x32xf32, #tpu.memory_space<vmem>>, vector<1x2x32xf32>
    %157 = vector.shape_cast %156 : vector<1x2x32xf32> to vector<2x32xf32>
    %cst_88 = arith.constant dense<0.000000e+00> : vector<2x32xf32>
    %158 = tpu.matmul %145, %32, %cst_88 {dimension_numbers = #tpu.dot_dimension_numbers<[1], [0], [0], [1], [0, 0, 1, 1], [], []>} : vector<2x32xf32>, vector<32x32xf32>, vector<2x32xf32> -> vector<2x32xf32>
    %159 = arith.addf %157, %158 : vector<2x32xf32>
    %cst_89 = arith.constant dense<0.000000e+00> : vector<2x32xf32>
    %160 = tpu.matmul %145, %34, %cst_89 {dimension_numbers = #tpu.dot_dimension_numbers<[1], [0], [0], [1], [0, 0, 1, 1], [], []>} : vector<2x32xf32>, vector<32x32xf32>, vector<2x32xf32> -> vector<2x32xf32>
    %161 = arith.addf %160, %37 : vector<2x32xf32>
    %162 = arith.negf %154 : vector<2x32xf32>
    %163 = math.exp %162 : vector<2x32xf32>
    %cst_90 = arith.constant 1.000000e+00 : f32
    %164 = vector.broadcast %cst_90 : f32 to vector<2x32xf32>
    %165 = arith.addf %164, %163 : vector<2x32xf32>
    %166 = arith.divf %164, %165 : vector<2x32xf32>
    %167 = arith.negf %159 : vector<2x32xf32>
    %168 = math.exp %167 : vector<2x32xf32>
    %cst_91 = arith.constant 1.000000e+00 : f32
    %169 = vector.broadcast %cst_91 : f32 to vector<2x32xf32>
    %170 = arith.addf %169, %168 : vector<2x32xf32>
    %171 = arith.divf %169, %170 : vector<2x32xf32>
    %172 = arith.index_cast %c3_i32 : i32 to index
    %c0_92 = arith.constant 0 : index
    %c0_93 = arith.constant 0 : index
    %173 = vector.load %arg14[%172, %c0_92, %c0_93] : memref<8x2x32xf32, #tpu.memory_space<vmem>>, vector<1x2x32xf32>
    %174 = vector.shape_cast %173 : vector<1x2x32xf32> to vector<2x32xf32>
    %175 = arith.mulf %166, %161 : vector<2x32xf32>
    %176 = arith.addf %174, %175 : vector<2x32xf32>
    %177 = math.tanh %176 : vector<2x32xf32>
    %cst_94 = arith.constant 1.000000e+00 : f32
    %178 = vector.broadcast %cst_94 : f32 to vector<2x32xf32>
    %179 = arith.subf %178, %171 : vector<2x32xf32>
    %180 = arith.mulf %179, %177 : vector<2x32xf32>
    %181 = arith.mulf %171, %145 : vector<2x32xf32>
    %182 = arith.addf %180, %181 : vector<2x32xf32>
    %183 = arith.index_cast %c3_i32 : i32 to index
    %c0_95 = arith.constant 0 : index
    %c0_96 = arith.constant 0 : index
    %184 = vector.load %arg11[%183, %c0_95, %c0_96] : memref<8x2x32xf32, #tpu.memory_space<vmem>>, vector<1x2x32xf32>
    %185 = vector.shape_cast %184 : vector<1x2x32xf32> to vector<2x32xf32>
    %186 = vector.shape_cast %182 : vector<2x32xf32> to vector<1x2x32xf32>
    tpu.vector_store %arg11[%183, %c0_95, %c0_96], %186 {strides = array<i32>} : memref<8x2x32xf32, #tpu.memory_space<vmem>>, vector<1x2x32xf32>,
    %c4_i32 = arith.constant 4 : i32
    %187 = arith.index_cast %c4_i32 : i32 to index
    %c0_97 = arith.constant 0 : index
    %c0_98 = arith.constant 0 : index
    %188 = vector.load %arg12[%187, %c0_97, %c0_98] : memref<8x2x32xf32, #tpu.memory_space<vmem>>, vector<1x2x32xf32>
    %189 = vector.shape_cast %188 : vector<1x2x32xf32> to vector<2x32xf32>
    %cst_99 = arith.constant dense<0.000000e+00> : vector<2x32xf32>
    %190 = tpu.matmul %182, %30, %cst_99 {dimension_numbers = #tpu.dot_dimension_numbers<[1], [0], [0], [1], [0, 0, 1, 1], [], []>} : vector<2x32xf32>, vector<32x32xf32>, vector<2x32xf32> -> vector<2x32xf32>
    %191 = arith.addf %189, %190 : vector<2x32xf32>
    %192 = arith.index_cast %c4_i32 : i32 to index
    %c0_100 = arith.constant 0 : index
    %c0_101 = arith.constant 0 : index
    %193 = vector.load %arg13[%192, %c0_100, %c0_101] : memref<8x2x32xf32, #tpu.memory_space<vmem>>, vector<1x2x32xf32>
    %194 = vector.shape_cast %193 : vector<1x2x32xf32> to vector<2x32xf32>
    %cst_102 = arith.constant dense<0.000000e+00> : vector<2x32xf32>
    %195 = tpu.matmul %182, %32, %cst_102 {dimension_numbers = #tpu.dot_dimension_numbers<[1], [0], [0], [1], [0, 0, 1, 1], [], []>} : vector<2x32xf32>, vector<32x32xf32>, vector<2x32xf32> -> vector<2x32xf32>
    %196 = arith.addf %194, %195 : vector<2x32xf32>
    %cst_103 = arith.constant dense<0.000000e+00> : vector<2x32xf32>
    %197 = tpu.matmul %182, %34, %cst_103 {dimension_numbers = #tpu.dot_dimension_numbers<[1], [0], [0], [1], [0, 0, 1, 1], [], []>} : vector<2x32xf32>, vector<32x32xf32>, vector<2x32xf32> -> vector<2x32xf32>
    %198 = arith.addf %197, %37 : vector<2x32xf32>
    %199 = arith.negf %191 : vector<2x32xf32>
    %200 = math.exp %199 : vector<2x32xf32>
    %cst_104 = arith.constant 1.000000e+00 : f32
    %201 = vector.broadcast %cst_104 : f32 to vector<2x32xf32>
    %202 = arith.addf %201, %200 : vector<2x32xf32>
    %203 = arith.divf %201, %202 : vector<2x32xf32>
    %204 = arith.negf %196 : vector<2x32xf32>
    %205 = math.exp %204 : vector<2x32xf32>
    %cst_105 = arith.constant 1.000000e+00 : f32
    %206 = vector.broadcast %cst_105 : f32 to vector<2x32xf32>
    %207 = arith.addf %206, %205 : vector<2x32xf32>
    %208 = arith.divf %206, %207 : vector<2x32xf32>
    %209 = arith.index_cast %c4_i32 : i32 to index
    %c0_106 = arith.constant 0 : index
    %c0_107 = arith.constant 0 : index
    %210 = vector.load %arg14[%209, %c0_106, %c0_107] : memref<8x2x32xf32, #tpu.memory_space<vmem>>, vector<1x2x32xf32>
    %211 = vector.shape_cast %210 : vector<1x2x32xf32> to vector<2x32xf32>
    %212 = arith.mulf %203, %198 : vector<2x32xf32>
    %213 = arith.addf %211, %212 : vector<2x32xf32>
    %214 = math.tanh %213 : vector<2x32xf32>
    %cst_108 = arith.constant 1.000000e+00 : f32
    %215 = vector.broadcast %cst_108 : f32 to vector<2x32xf32>
    %216 = arith.subf %215, %208 : vector<2x32xf32>
    %217 = arith.mulf %216, %214 : vector<2x32xf32>
    %218 = arith.mulf %208, %182 : vector<2x32xf32>
    %219 = arith.addf %217, %218 : vector<2x32xf32>
    %220 = arith.index_cast %c4_i32 : i32 to index
    %c0_109 = arith.constant 0 : index
    %c0_110 = arith.constant 0 : index
    %221 = vector.load %arg11[%220, %c0_109, %c0_110] : memref<8x2x32xf32, #tpu.memory_space<vmem>>, vector<1x2x32xf32>
    %222 = vector.shape_cast %221 : vector<1x2x32xf32> to vector<2x32xf32>
    %223 = vector.shape_cast %219 : vector<2x32xf32> to vector<1x2x32xf32>
    tpu.vector_store %arg11[%220, %c0_109, %c0_110], %223 {strides = array<i32>} : memref<8x2x32xf32, #tpu.memory_space<vmem>>, vector<1x2x32xf32>,
    %c5_i32 = arith.constant 5 : i32
    %224 = arith.index_cast %c5_i32 : i32 to index
    %c0_111 = arith.constant 0 : index
    %c0_112 = arith.constant 0 : index
    %225 = vector.load %arg12[%224, %c0_111, %c0_112] : memref<8x2x32xf32, #tpu.memory_space<vmem>>, vector<1x2x32xf32>
    %226 = vector.shape_cast %225 : vector<1x2x32xf32> to vector<2x32xf32>
    %cst_113 = arith.constant dense<0.000000e+00> : vector<2x32xf32>
    %227 = tpu.matmul %219, %30, %cst_113 {dimension_numbers = #tpu.dot_dimension_numbers<[1], [0], [0], [1], [0, 0, 1, 1], [], []>} : vector<2x32xf32>, vector<32x32xf32>, vector<2x32xf32> -> vector<2x32xf32>
    %228 = arith.addf %226, %227 : vector<2x32xf32>
    %229 = arith.index_cast %c5_i32 : i32 to index
    %c0_114 = arith.constant 0 : index
    %c0_115 = arith.constant 0 : index
    %230 = vector.load %arg13[%229, %c0_114, %c0_115] : memref<8x2x32xf32, #tpu.memory_space<vmem>>, vector<1x2x32xf32>
    %231 = vector.shape_cast %230 : vector<1x2x32xf32> to vector<2x32xf32>
    %cst_116 = arith.constant dense<0.000000e+00> : vector<2x32xf32>
    %232 = tpu.matmul %219, %32, %cst_116 {dimension_numbers = #tpu.dot_dimension_numbers<[1], [0], [0], [1], [0, 0, 1, 1], [], []>} : vector<2x32xf32>, vector<32x32xf32>, vector<2x32xf32> -> vector<2x32xf32>
    %233 = arith.addf %231, %232 : vector<2x32xf32>
    %cst_117 = arith.constant dense<0.000000e+00> : vector<2x32xf32>
    %234 = tpu.matmul %219, %34, %cst_117 {dimension_numbers = #tpu.dot_dimension_numbers<[1], [0], [0], [1], [0, 0, 1, 1], [], []>} : vector<2x32xf32>, vector<32x32xf32>, vector<2x32xf32> -> vector<2x32xf32>
    %235 = arith.addf %234, %37 : vector<2x32xf32>
    %236 = arith.negf %228 : vector<2x32xf32>
    %237 = math.exp %236 : vector<2x32xf32>
    %cst_118 = arith.constant 1.000000e+00 : f32
    %238 = vector.broadcast %cst_118 : f32 to vector<2x32xf32>
    %239 = arith.addf %238, %237 : vector<2x32xf32>
    %240 = arith.divf %238, %239 : vector<2x32xf32>
    %241 = arith.negf %233 : vector<2x32xf32>
    %242 = math.exp %241 : vector<2x32xf32>
    %cst_119 = arith.constant 1.000000e+00 : f32
    %243 = vector.broadcast %cst_119 : f32 to vector<2x32xf32>
    %244 = arith.addf %243, %242 : vector<2x32xf32>
    %245 = arith.divf %243, %244 : vector<2x32xf32>
    %246 = arith.index_cast %c5_i32 : i32 to index
    %c0_120 = arith.constant 0 : index
    %c0_121 = arith.constant 0 : index
    %247 = vector.load %arg14[%246, %c0_120, %c0_121] : memref<8x2x32xf32, #tpu.memory_space<vmem>>, vector<1x2x32xf32>
    %248 = vector.shape_cast %247 : vector<1x2x32xf32> to vector<2x32xf32>
    %249 = arith.mulf %240, %235 : vector<2x32xf32>
    %250 = arith.addf %248, %249 : vector<2x32xf32>
    %251 = math.tanh %250 : vector<2x32xf32>
    %cst_122 = arith.constant 1.000000e+00 : f32
    %252 = vector.broadcast %cst_122 : f32 to vector<2x32xf32>
    %253 = arith.subf %252, %245 : vector<2x32xf32>
    %254 = arith.mulf %253, %251 : vector<2x32xf32>
    %255 = arith.mulf %245, %219 : vector<2x32xf32>
    %256 = arith.addf %254, %255 : vector<2x32xf32>
    %257 = arith.index_cast %c5_i32 : i32 to index
    %c0_123 = arith.constant 0 : index
    %c0_124 = arith.constant 0 : index
    %258 = vector.load %arg11[%257, %c0_123, %c0_124] : memref<8x2x32xf32, #tpu.memory_space<vmem>>, vector<1x2x32xf32>
    %259 = vector.shape_cast %258 : vector<1x2x32xf32> to vector<2x32xf32>
    %260 = vector.shape_cast %256 : vector<2x32xf32> to vector<1x2x32xf32>
    tpu.vector_store %arg11[%257, %c0_123, %c0_124], %260 {strides = array<i32>} : memref<8x2x32xf32, #tpu.memory_space<vmem>>, vector<1x2x32xf32>,
    %c6_i32 = arith.constant 6 : i32
    %261 = arith.index_cast %c6_i32 : i32 to index
    %c0_125 = arith.constant 0 : index
    %c0_126 = arith.constant 0 : index
    %262 = vector.load %arg12[%261, %c0_125, %c0_126] : memref<8x2x32xf32, #tpu.memory_space<vmem>>, vector<1x2x32xf32>
    %263 = vector.shape_cast %262 : vector<1x2x32xf32> to vector<2x32xf32>
    %cst_127 = arith.constant dense<0.000000e+00> : vector<2x32xf32>
    %264 = tpu.matmul %256, %30, %cst_127 {dimension_numbers = #tpu.dot_dimension_numbers<[1], [0], [0], [1], [0, 0, 1, 1], [], []>} : vector<2x32xf32>, vector<32x32xf32>, vector<2x32xf32> -> vector<2x32xf32>
    %265 = arith.addf %263, %264 : vector<2x32xf32>
    %266 = arith.index_cast %c6_i32 : i32 to index
    %c0_128 = arith.constant 0 : index
    %c0_129 = arith.constant 0 : index
    %267 = vector.load %arg13[%266, %c0_128, %c0_129] : memref<8x2x32xf32, #tpu.memory_space<vmem>>, vector<1x2x32xf32>
    %268 = vector.shape_cast %267 : vector<1x2x32xf32> to vector<2x32xf32>
    %cst_130 = arith.constant dense<0.000000e+00> : vector<2x32xf32>
    %269 = tpu.matmul %256, %32, %cst_130 {dimension_numbers = #tpu.dot_dimension_numbers<[1], [0], [0], [1], [0, 0, 1, 1], [], []>} : vector<2x32xf32>, vector<32x32xf32>, vector<2x32xf32> -> vector<2x32xf32>
    %270 = arith.addf %268, %269 : vector<2x32xf32>
    %cst_131 = arith.constant dense<0.000000e+00> : vector<2x32xf32>
    %271 = tpu.matmul %256, %34, %cst_131 {dimension_numbers = #tpu.dot_dimension_numbers<[1], [0], [0], [1], [0, 0, 1, 1], [], []>} : vector<2x32xf32>, vector<32x32xf32>, vector<2x32xf32> -> vector<2x32xf32>
    %272 = arith.addf %271, %37 : vector<2x32xf32>
    %273 = arith.negf %265 : vector<2x32xf32>
    %274 = math.exp %273 : vector<2x32xf32>
    %cst_132 = arith.constant 1.000000e+00 : f32
    %275 = vector.broadcast %cst_132 : f32 to vector<2x32xf32>
    %276 = arith.addf %275, %274 : vector<2x32xf32>
    %277 = arith.divf %275, %276 : vector<2x32xf32>
    %278 = arith.negf %270 : vector<2x32xf32>
    %279 = math.exp %278 : vector<2x32xf32>
    %cst_133 = arith.constant 1.000000e+00 : f32
    %280 = vector.broadcast %cst_133 : f32 to vector<2x32xf32>
    %281 = arith.addf %280, %279 : vector<2x32xf32>
    %282 = arith.divf %280, %281 : vector<2x32xf32>
    %283 = arith.index_cast %c6_i32 : i32 to index
    %c0_134 = arith.constant 0 : index
    %c0_135 = arith.constant 0 : index
    %284 = vector.load %arg14[%283, %c0_134, %c0_135] : memref<8x2x32xf32, #tpu.memory_space<vmem>>, vector<1x2x32xf32>
    %285 = vector.shape_cast %284 : vector<1x2x32xf32> to vector<2x32xf32>
    %286 = arith.mulf %277, %272 : vector<2x32xf32>
    %287 = arith.addf %285, %286 : vector<2x32xf32>
    %288 = math.tanh %287 : vector<2x32xf32>
    %cst_136 = arith.constant 1.000000e+00 : f32
    %289 = vector.broadcast %cst_136 : f32 to vector<2x32xf32>
    %290 = arith.subf %289, %282 : vector<2x32xf32>
    %291 = arith.mulf %290, %288 : vector<2x32xf32>
    %292 = arith.mulf %282, %256 : vector<2x32xf32>
    %293 = arith.addf %291, %292 : vector<2x32xf32>
    %294 = arith.index_cast %c6_i32 : i32 to index
    %c0_137 = arith.constant 0 : index
    %c0_138 = arith.constant 0 : index
    %295 = vector.load %arg11[%294, %c0_137, %c0_138] : memref<8x2x32xf32, #tpu.memory_space<vmem>>, vector<1x2x32xf32>
    %296 = vector.shape_cast %295 : vector<1x2x32xf32> to vector<2x32xf32>
    %297 = vector.shape_cast %293 : vector<2x32xf32> to vector<1x2x32xf32>
    tpu.vector_store %arg11[%294, %c0_137, %c0_138], %297 {strides = array<i32>} : memref<8x2x32xf32, #tpu.memory_space<vmem>>, vector<1x2x32xf32>,
    %c7_i32 = arith.constant 7 : i32
    %298 = arith.index_cast %c7_i32 : i32 to index
    %c0_139 = arith.constant 0 : index
    %c0_140 = arith.constant 0 : index
    %299 = vector.load %arg12[%298, %c0_139, %c0_140] : memref<8x2x32xf32, #tpu.memory_space<vmem>>, vector<1x2x32xf32>
    %300 = vector.shape_cast %299 : vector<1x2x32xf32> to vector<2x32xf32>
    %cst_141 = arith.constant dense<0.000000e+00> : vector<2x32xf32>
    %301 = tpu.matmul %293, %30, %cst_141 {dimension_numbers = #tpu.dot_dimension_numbers<[1], [0], [0], [1], [0, 0, 1, 1], [], []>} : vector<2x32xf32>, vector<32x32xf32>, vector<2x32xf32> -> vector<2x32xf32>
    %302 = arith.addf %300, %301 : vector<2x32xf32>
    %303 = arith.index_cast %c7_i32 : i32 to index
    %c0_142 = arith.constant 0 : index
    %c0_143 = arith.constant 0 : index
    %304 = vector.load %arg13[%303, %c0_142, %c0_143] : memref<8x2x32xf32, #tpu.memory_space<vmem>>, vector<1x2x32xf32>
    %305 = vector.shape_cast %304 : vector<1x2x32xf32> to vector<2x32xf32>
    %cst_144 = arith.constant dense<0.000000e+00> : vector<2x32xf32>
    %306 = tpu.matmul %293, %32, %cst_144 {dimension_numbers = #tpu.dot_dimension_numbers<[1], [0], [0], [1], [0, 0, 1, 1], [], []>} : vector<2x32xf32>, vector<32x32xf32>, vector<2x32xf32> -> vector<2x32xf32>
    %307 = arith.addf %305, %306 : vector<2x32xf32>
    %cst_145 = arith.constant dense<0.000000e+00> : vector<2x32xf32>
    %308 = tpu.matmul %293, %34, %cst_145 {dimension_numbers = #tpu.dot_dimension_numbers<[1], [0], [0], [1], [0, 0, 1, 1], [], []>} : vector<2x32xf32>, vector<32x32xf32>, vector<2x32xf32> -> vector<2x32xf32>
    %309 = arith.addf %308, %37 : vector<2x32xf32>
    %310 = arith.negf %302 : vector<2x32xf32>
    %311 = math.exp %310 : vector<2x32xf32>
    %cst_146 = arith.constant 1.000000e+00 : f32
    %312 = vector.broadcast %cst_146 : f32 to vector<2x32xf32>
    %313 = arith.addf %312, %311 : vector<2x32xf32>
    %314 = arith.divf %312, %313 : vector<2x32xf32>
    %315 = arith.negf %307 : vector<2x32xf32>
    %316 = math.exp %315 : vector<2x32xf32>
    %cst_147 = arith.constant 1.000000e+00 : f32
    %317 = vector.broadcast %cst_147 : f32 to vector<2x32xf32>
    %318 = arith.addf %317, %316 : vector<2x32xf32>
    %319 = arith.divf %317, %318 : vector<2x32xf32>
    %320 = arith.index_cast %c7_i32 : i32 to index
    %c0_148 = arith.constant 0 : index
    %c0_149 = arith.constant 0 : index
    %321 = vector.load %arg14[%320, %c0_148, %c0_149] : memref<8x2x32xf32, #tpu.memory_space<vmem>>, vector<1x2x32xf32>
    %322 = vector.shape_cast %321 : vector<1x2x32xf32> to vector<2x32xf32>
    %323 = arith.mulf %314, %309 : vector<2x32xf32>
    %324 = arith.addf %322, %323 : vector<2x32xf32>
    %325 = math.tanh %324 : vector<2x32xf32>
    %cst_150 = arith.constant 1.000000e+00 : f32
    %326 = vector.broadcast %cst_150 : f32 to vector<2x32xf32>
    %327 = arith.subf %326, %319 : vector<2x32xf32>
    %328 = arith.mulf %327, %325 : vector<2x32xf32>
    %329 = arith.mulf %319, %293 : vector<2x32xf32>
    %330 = arith.addf %328, %329 : vector<2x32xf32>
    %331 = arith.index_cast %c7_i32 : i32 to index
    %c0_151 = arith.constant 0 : index
    %c0_152 = arith.constant 0 : index
    %332 = vector.load %arg11[%331, %c0_151, %c0_152] : memref<8x2x32xf32, #tpu.memory_space<vmem>>, vector<1x2x32xf32>
    %333 = vector.shape_cast %332 : vector<1x2x32xf32> to vector<2x32xf32>
    %334 = vector.shape_cast %330 : vector<2x32xf32> to vector<1x2x32xf32>
    tpu.vector_store %arg11[%331, %c0_151, %c0_152], %334 {strides = array<i32>} : memref<8x2x32xf32, #tpu.memory_space<vmem>>, vector<1x2x32xf32>,
    %c8_i32 = arith.constant 8 : i32
    %c0_153 = arith.constant 0 : index
    %c0_154 = arith.constant 0 : index
    %c0_155 = arith.constant 0 : index
    %335 = vector.load %arg11[%c0_153, %c0_154, %c0_155] : memref<8x2x32xf32, #tpu.memory_space<vmem>>, vector<8x2x32xf32>
    %336 = vector.shape_cast %335 : vector<8x2x32xf32> to vector<16x32xf32>
    %c0_156 = arith.constant 0 : index
    %c0_157 = arith.constant 0 : index
    %c0_158 = arith.constant 0 : index
    %337 = vector.load %arg6[%c0_156, %c0_157, %c0_158] : memref<3x32x32xf32, #tpu.memory_space<vmem>>, vector<1x32x32xf32>
    %338 = vector.shape_cast %337 : vector<1x32x32xf32> to vector<32x32xf32>
    %cst_159 = arith.constant dense<0.000000e+00> : vector<16x32xf32>
    %339 = tpu.matmul %336, %338, %cst_159 {dimension_numbers = #tpu.dot_dimension_numbers<[1], [0], [0], [1], [0, 0, 1, 1], [], []>} : vector<16x32xf32>, vector<32x32xf32>, vector<16x32xf32> -> vector<16x32xf32>
    %c0_160 = arith.constant 0 : index
    %c0_161 = arith.constant 0 : index
    %c0_162 = arith.constant 0 : index
    %340 = vector.load %arg8[%c0_160, %c0_161, %c0_162] : memref<3x1x32xf32, #tpu.memory_space<vmem>>, vector<1x1x32xf32>
    %341 = vector.shape_cast %340 : vector<1x1x32xf32> to vector<1x32xf32>
    %342 = vector.broadcast %341 : vector<1x32xf32> to vector<16x32xf32>
    %343 = arith.addf %339, %342 : vector<16x32xf32>
    %344 = vector.shape_cast %343 : vector<16x32xf32> to vector<8x2x32xf32>
    %c0_163 = arith.constant 0 : index
    %c0_164 = arith.constant 0 : index
    %c0_165 = arith.constant 0 : index
    %345 = vector.load %arg12[%c0_163, %c0_164, %c0_165] : memref<8x2x32xf32, #tpu.memory_space<vmem>>, vector<8x2x32xf32>
    tpu.vector_store %arg12[%c0_163, %c0_164, %c0_165], %344 {strides = array<i32>} : memref<8x2x32xf32, #tpu.memory_space<vmem>>, vector<8x2x32xf32>,
    %c1_166 = arith.constant 1 : index
    %c0_167 = arith.constant 0 : index
    %c0_168 = arith.constant 0 : index
    %346 = vector.load %arg6[%c1_166, %c0_167, %c0_168] : memref<3x32x32xf32, #tpu.memory_space<vmem>>, vector<1x32x32xf32>
    %347 = vector.shape_cast %346 : vector<1x32x32xf32> to vector<32x32xf32>
    %cst_169 = arith.constant dense<0.000000e+00> : vector<16x32xf32>
    %348 = tpu.matmul %336, %347, %cst_169 {dimension_numbers = #tpu.dot_dimension_numbers<[1], [0], [0], [1], [0, 0, 1, 1], [], []>} : vector<16x32xf32>, vector<32x32xf32>, vector<16x32xf32> -> vector<16x32xf32>
    %c1_170 = arith.constant 1 : index
    %c0_171 = arith.constant 0 : index
    %c0_172 = arith.constant 0 : index
    %349 = vector.load %arg8[%c1_170, %c0_171, %c0_172] : memref<3x1x32xf32, #tpu.memory_space<vmem>>, vector<1x1x32xf32>
    %350 = vector.shape_cast %349 : vector<1x1x32xf32> to vector<1x32xf32>
    %351 = vector.broadcast %350 : vector<1x32xf32> to vector<16x32xf32>
    %352 = arith.addf %348, %351 : vector<16x32xf32>
    %353 = vector.shape_cast %352 : vector<16x32xf32> to vector<8x2x32xf32>
    %c0_173 = arith.constant 0 : index
    %c0_174 = arith.constant 0 : index
    %c0_175 = arith.constant 0 : index
    %354 = vector.load %arg13[%c0_173, %c0_174, %c0_175] : memref<8x2x32xf32, #tpu.memory_space<vmem>>, vector<8x2x32xf32>
    tpu.vector_store %arg13[%c0_173, %c0_174, %c0_175], %353 {strides = array<i32>} : memref<8x2x32xf32, #tpu.memory_space<vmem>>, vector<8x2x32xf32>,
    %c2_176 = arith.constant 2 : index
    %c0_177 = arith.constant 0 : index
    %c0_178 = arith.constant 0 : index
    %355 = vector.load %arg6[%c2_176, %c0_177, %c0_178] : memref<3x32x32xf32, #tpu.memory_space<vmem>>, vector<1x32x32xf32>
    %356 = vector.shape_cast %355 : vector<1x32x32xf32> to vector<32x32xf32>
    %cst_179 = arith.constant dense<0.000000e+00> : vector<16x32xf32>
    %357 = tpu.matmul %336, %356, %cst_179 {dimension_numbers = #tpu.dot_dimension_numbers<[1], [0], [0], [1], [0, 0, 1, 1], [], []>} : vector<16x32xf32>, vector<32x32xf32>, vector<16x32xf32> -> vector<16x32xf32>
    %c2_180 = arith.constant 2 : index
    %c0_181 = arith.constant 0 : index
    %c0_182 = arith.constant 0 : index
    %358 = vector.load %arg8[%c2_180, %c0_181, %c0_182] : memref<3x1x32xf32, #tpu.memory_space<vmem>>, vector<1x1x32xf32>
    %359 = vector.shape_cast %358 : vector<1x1x32xf32> to vector<1x32xf32>
    %360 = vector.broadcast %359 : vector<1x32xf32> to vector<16x32xf32>
    %361 = arith.addf %357, %360 : vector<16x32xf32>
    %362 = vector.shape_cast %361 : vector<16x32xf32> to vector<8x2x32xf32>
    %c0_183 = arith.constant 0 : index
    %c0_184 = arith.constant 0 : index
    %c0_185 = arith.constant 0 : index
    %363 = vector.load %arg14[%c0_183, %c0_184, %c0_185] : memref<8x2x32xf32, #tpu.memory_space<vmem>>, vector<8x2x32xf32>
    tpu.vector_store %arg14[%c0_183, %c0_184, %c0_185], %362 {strides = array<i32>} : memref<8x2x32xf32, #tpu.memory_space<vmem>>, vector<8x2x32xf32>,
    %c0_186 = arith.constant 0 : index
    %c0_187 = arith.constant 0 : index
    %c0_188 = arith.constant 0 : index
    %364 = vector.load %arg7[%c0_186, %c0_187, %c0_188] : memref<3x32x32xf32, #tpu.memory_space<vmem>>, vector<1x32x32xf32>
    %365 = vector.shape_cast %364 : vector<1x32x32xf32> to vector<32x32xf32>
    %c1_189 = arith.constant 1 : index
    %c0_190 = arith.constant 0 : index
    %c0_191 = arith.constant 0 : index
    %366 = vector.load %arg7[%c1_189, %c0_190, %c0_191] : memref<3x32x32xf32, #tpu.memory_space<vmem>>, vector<1x32x32xf32>
    %367 = vector.shape_cast %366 : vector<1x32x32xf32> to vector<32x32xf32>
    %c2_192 = arith.constant 2 : index
    %c0_193 = arith.constant 0 : index
    %c0_194 = arith.constant 0 : index
    %368 = vector.load %arg7[%c2_192, %c0_193, %c0_194] : memref<3x32x32xf32, #tpu.memory_space<vmem>>, vector<1x32x32xf32>
    %369 = vector.shape_cast %368 : vector<1x32x32xf32> to vector<32x32xf32>
    %c0_195 = arith.constant 0 : index
    %c0_196 = arith.constant 0 : index
    %370 = vector.load %arg9[%c0_195, %c0_196] : memref<1x32xf32, #tpu.memory_space<vmem>>, vector<1x32xf32>
    %371 = vector.shape_cast %370 : vector<1x32xf32> to vector<1x32xf32>
    %372 = vector.broadcast %371 : vector<1x32xf32> to vector<2x32xf32>
    %cst_197 = arith.constant 0.000000e+00 : f32
    %373 = vector.broadcast %cst_197 : f32 to vector<2x32xf32>
    %c0_i32_198 = arith.constant 0 : i32
    %374 = arith.index_cast %c0_i32_198 : i32 to index
    %c0_199 = arith.constant 0 : index
    %c0_200 = arith.constant 0 : index
    %375 = vector.load %arg12[%374, %c0_199, %c0_200] : memref<8x2x32xf32, #tpu.memory_space<vmem>>, vector<1x2x32xf32>
    %376 = vector.shape_cast %375 : vector<1x2x32xf32> to vector<2x32xf32>
    %cst_201 = arith.constant dense<0.000000e+00> : vector<2x32xf32>
    %377 = tpu.matmul %373, %365, %cst_201 {dimension_numbers = #tpu.dot_dimension_numbers<[1], [0], [0], [1], [0, 0, 1, 1], [], []>} : vector<2x32xf32>, vector<32x32xf32>, vector<2x32xf32> -> vector<2x32xf32>
    %378 = arith.addf %376, %377 : vector<2x32xf32>
    %379 = arith.index_cast %c0_i32_198 : i32 to index
    %c0_202 = arith.constant 0 : index
    %c0_203 = arith.constant 0 : index
    %380 = vector.load %arg13[%379, %c0_202, %c0_203] : memref<8x2x32xf32, #tpu.memory_space<vmem>>, vector<1x2x32xf32>
    %381 = vector.shape_cast %380 : vector<1x2x32xf32> to vector<2x32xf32>
    %cst_204 = arith.constant dense<0.000000e+00> : vector<2x32xf32>
    %382 = tpu.matmul %373, %367, %cst_204 {dimension_numbers = #tpu.dot_dimension_numbers<[1], [0], [0], [1], [0, 0, 1, 1], [], []>} : vector<2x32xf32>, vector<32x32xf32>, vector<2x32xf32> -> vector<2x32xf32>
    %383 = arith.addf %381, %382 : vector<2x32xf32>
    %cst_205 = arith.constant dense<0.000000e+00> : vector<2x32xf32>
    %384 = tpu.matmul %373, %369, %cst_205 {dimension_numbers = #tpu.dot_dimension_numbers<[1], [0], [0], [1], [0, 0, 1, 1], [], []>} : vector<2x32xf32>, vector<32x32xf32>, vector<2x32xf32> -> vector<2x32xf32>
    %385 = arith.addf %384, %372 : vector<2x32xf32>
    %386 = arith.negf %378 : vector<2x32xf32>
    %387 = math.exp %386 : vector<2x32xf32>
    %cst_206 = arith.constant 1.000000e+00 : f32
    %388 = vector.broadcast %cst_206 : f32 to vector<2x32xf32>
    %389 = arith.addf %388, %387 : vector<2x32xf32>
    %390 = arith.divf %388, %389 : vector<2x32xf32>
    %391 = arith.negf %383 : vector<2x32xf32>
    %392 = math.exp %391 : vector<2x32xf32>
    %cst_207 = arith.constant 1.000000e+00 : f32
    %393 = vector.broadcast %cst_207 : f32 to vector<2x32xf32>
    %394 = arith.addf %393, %392 : vector<2x32xf32>
    %395 = arith.divf %393, %394 : vector<2x32xf32>
    %396 = arith.index_cast %c0_i32_198 : i32 to index
    %c0_208 = arith.constant 0 : index
    %c0_209 = arith.constant 0 : index
    %397 = vector.load %arg14[%396, %c0_208, %c0_209] : memref<8x2x32xf32, #tpu.memory_space<vmem>>, vector<1x2x32xf32>
    %398 = vector.shape_cast %397 : vector<1x2x32xf32> to vector<2x32xf32>
    %399 = arith.mulf %390, %385 : vector<2x32xf32>
    %400 = arith.addf %398, %399 : vector<2x32xf32>
    %401 = math.tanh %400 : vector<2x32xf32>
    %cst_210 = arith.constant 1.000000e+00 : f32
    %402 = vector.broadcast %cst_210 : f32 to vector<2x32xf32>
    %403 = arith.subf %402, %395 : vector<2x32xf32>
    %404 = arith.mulf %403, %401 : vector<2x32xf32>
    %405 = arith.mulf %395, %373 : vector<2x32xf32>
    %406 = arith.addf %404, %405 : vector<2x32xf32>
    %407 = arith.index_cast %c0_i32_198 : i32 to index
    %c0_211 = arith.constant 0 : index
    %c0_212 = arith.constant 0 : index
    %408 = vector.load %arg10[%407, %c0_211, %c0_212] : memref<8x2x32xf32, #tpu.memory_space<vmem>>, vector<1x2x32xf32>
    %409 = vector.shape_cast %408 : vector<1x2x32xf32> to vector<2x32xf32>
    %410 = vector.shape_cast %406 : vector<2x32xf32> to vector<1x2x32xf32>
    tpu.vector_store %arg10[%407, %c0_211, %c0_212], %410 {strides = array<i32>} : memref<8x2x32xf32, #tpu.memory_space<vmem>>, vector<1x2x32xf32>,
    %c1_i32_213 = arith.constant 1 : i32
    %411 = arith.index_cast %c1_i32_213 : i32 to index
    %c0_214 = arith.constant 0 : index
    %c0_215 = arith.constant 0 : index
    %412 = vector.load %arg12[%411, %c0_214, %c0_215] : memref<8x2x32xf32, #tpu.memory_space<vmem>>, vector<1x2x32xf32>
    %413 = vector.shape_cast %412 : vector<1x2x32xf32> to vector<2x32xf32>
    %cst_216 = arith.constant dense<0.000000e+00> : vector<2x32xf32>
    %414 = tpu.matmul %406, %365, %cst_216 {dimension_numbers = #tpu.dot_dimension_numbers<[1], [0], [0], [1], [0, 0, 1, 1], [], []>} : vector<2x32xf32>, vector<32x32xf32>, vector<2x32xf32> -> vector<2x32xf32>
    %415 = arith.addf %413, %414 : vector<2x32xf32>
    %416 = arith.index_cast %c1_i32_213 : i32 to index
    %c0_217 = arith.constant 0 : index
    %c0_218 = arith.constant 0 : index
    %417 = vector.load %arg13[%416, %c0_217, %c0_218] : memref<8x2x32xf32, #tpu.memory_space<vmem>>, vector<1x2x32xf32>
    %418 = vector.shape_cast %417 : vector<1x2x32xf32> to vector<2x32xf32>
    %cst_219 = arith.constant dense<0.000000e+00> : vector<2x32xf32>
    %419 = tpu.matmul %406, %367, %cst_219 {dimension_numbers = #tpu.dot_dimension_numbers<[1], [0], [0], [1], [0, 0, 1, 1], [], []>} : vector<2x32xf32>, vector<32x32xf32>, vector<2x32xf32> -> vector<2x32xf32>
    %420 = arith.addf %418, %419 : vector<2x32xf32>
    %cst_220 = arith.constant dense<0.000000e+00> : vector<2x32xf32>
    %421 = tpu.matmul %406, %369, %cst_220 {dimension_numbers = #tpu.dot_dimension_numbers<[1], [0], [0], [1], [0, 0, 1, 1], [], []>} : vector<2x32xf32>, vector<32x32xf32>, vector<2x32xf32> -> vector<2x32xf32>
    %422 = arith.addf %421, %372 : vector<2x32xf32>
    %423 = arith.negf %415 : vector<2x32xf32>
    %424 = math.exp %423 : vector<2x32xf32>
    %cst_221 = arith.constant 1.000000e+00 : f32
    %425 = vector.broadcast %cst_221 : f32 to vector<2x32xf32>
    %426 = arith.addf %425, %424 : vector<2x32xf32>
    %427 = arith.divf %425, %426 : vector<2x32xf32>
    %428 = arith.negf %420 : vector<2x32xf32>
    %429 = math.exp %428 : vector<2x32xf32>
    %cst_222 = arith.constant 1.000000e+00 : f32
    %430 = vector.broadcast %cst_222 : f32 to vector<2x32xf32>
    %431 = arith.addf %430, %429 : vector<2x32xf32>
    %432 = arith.divf %430, %431 : vector<2x32xf32>
    %433 = arith.index_cast %c1_i32_213 : i32 to index
    %c0_223 = arith.constant 0 : index
    %c0_224 = arith.constant 0 : index
    %434 = vector.load %arg14[%433, %c0_223, %c0_224] : memref<8x2x32xf32, #tpu.memory_space<vmem>>, vector<1x2x32xf32>
    %435 = vector.shape_cast %434 : vector<1x2x32xf32> to vector<2x32xf32>
    %436 = arith.mulf %427, %422 : vector<2x32xf32>
    %437 = arith.addf %435, %436 : vector<2x32xf32>
    %438 = math.tanh %437 : vector<2x32xf32>
    %cst_225 = arith.constant 1.000000e+00 : f32
    %439 = vector.broadcast %cst_225 : f32 to vector<2x32xf32>
    %440 = arith.subf %439, %432 : vector<2x32xf32>
    %441 = arith.mulf %440, %438 : vector<2x32xf32>
    %442 = arith.mulf %432, %406 : vector<2x32xf32>
    %443 = arith.addf %441, %442 : vector<2x32xf32>
    %444 = arith.index_cast %c1_i32_213 : i32 to index
    %c0_226 = arith.constant 0 : index
    %c0_227 = arith.constant 0 : index
    %445 = vector.load %arg10[%444, %c0_226, %c0_227] : memref<8x2x32xf32, #tpu.memory_space<vmem>>, vector<1x2x32xf32>
    %446 = vector.shape_cast %445 : vector<1x2x32xf32> to vector<2x32xf32>
    %447 = vector.shape_cast %443 : vector<2x32xf32> to vector<1x2x32xf32>
    tpu.vector_store %arg10[%444, %c0_226, %c0_227], %447 {strides = array<i32>} : memref<8x2x32xf32, #tpu.memory_space<vmem>>, vector<1x2x32xf32>,
    %c2_i32_228 = arith.constant 2 : i32
    %448 = arith.index_cast %c2_i32_228 : i32 to index
    %c0_229 = arith.constant 0 : index
    %c0_230 = arith.constant 0 : index
    %449 = vector.load %arg12[%448, %c0_229, %c0_230] : memref<8x2x32xf32, #tpu.memory_space<vmem>>, vector<1x2x32xf32>
    %450 = vector.shape_cast %449 : vector<1x2x32xf32> to vector<2x32xf32>
    %cst_231 = arith.constant dense<0.000000e+00> : vector<2x32xf32>
    %451 = tpu.matmul %443, %365, %cst_231 {dimension_numbers = #tpu.dot_dimension_numbers<[1], [0], [0], [1], [0, 0, 1, 1], [], []>} : vector<2x32xf32>, vector<32x32xf32>, vector<2x32xf32> -> vector<2x32xf32>
    %452 = arith.addf %450, %451 : vector<2x32xf32>
    %453 = arith.index_cast %c2_i32_228 : i32 to index
    %c0_232 = arith.constant 0 : index
    %c0_233 = arith.constant 0 : index
    %454 = vector.load %arg13[%453, %c0_232, %c0_233] : memref<8x2x32xf32, #tpu.memory_space<vmem>>, vector<1x2x32xf32>
    %455 = vector.shape_cast %454 : vector<1x2x32xf32> to vector<2x32xf32>
    %cst_234 = arith.constant dense<0.000000e+00> : vector<2x32xf32>
    %456 = tpu.matmul %443, %367, %cst_234 {dimension_numbers = #tpu.dot_dimension_numbers<[1], [0], [0], [1], [0, 0, 1, 1], [], []>} : vector<2x32xf32>, vector<32x32xf32>, vector<2x32xf32> -> vector<2x32xf32>
    %457 = arith.addf %455, %456 : vector<2x32xf32>
    %cst_235 = arith.constant dense<0.000000e+00> : vector<2x32xf32>
    %458 = tpu.matmul %443, %369, %cst_235 {dimension_numbers = #tpu.dot_dimension_numbers<[1], [0], [0], [1], [0, 0, 1, 1], [], []>} : vector<2x32xf32>, vector<32x32xf32>, vector<2x32xf32> -> vector<2x32xf32>
    %459 = arith.addf %458, %372 : vector<2x32xf32>
    %460 = arith.negf %452 : vector<2x32xf32>
    %461 = math.exp %460 : vector<2x32xf32>
    %cst_236 = arith.constant 1.000000e+00 : f32
    %462 = vector.broadcast %cst_236 : f32 to vector<2x32xf32>
    %463 = arith.addf %462, %461 : vector<2x32xf32>
    %464 = arith.divf %462, %463 : vector<2x32xf32>
    %465 = arith.negf %457 : vector<2x32xf32>
    %466 = math.exp %465 : vector<2x32xf32>
    %cst_237 = arith.constant 1.000000e+00 : f32
    %467 = vector.broadcast %cst_237 : f32 to vector<2x32xf32>
    %468 = arith.addf %467, %466 : vector<2x32xf32>
    %469 = arith.divf %467, %468 : vector<2x32xf32>
    %470 = arith.index_cast %c2_i32_228 : i32 to index
    %c0_238 = arith.constant 0 : index
    %c0_239 = arith.constant 0 : index
    %471 = vector.load %arg14[%470, %c0_238, %c0_239] : memref<8x2x32xf32, #tpu.memory_space<vmem>>, vector<1x2x32xf32>
    %472 = vector.shape_cast %471 : vector<1x2x32xf32> to vector<2x32xf32>
    %473 = arith.mulf %464, %459 : vector<2x32xf32>
    %474 = arith.addf %472, %473 : vector<2x32xf32>
    %475 = math.tanh %474 : vector<2x32xf32>
    %cst_240 = arith.constant 1.000000e+00 : f32
    %476 = vector.broadcast %cst_240 : f32 to vector<2x32xf32>
    %477 = arith.subf %476, %469 : vector<2x32xf32>
    %478 = arith.mulf %477, %475 : vector<2x32xf32>
    %479 = arith.mulf %469, %443 : vector<2x32xf32>
    %480 = arith.addf %478, %479 : vector<2x32xf32>
    %481 = arith.index_cast %c2_i32_228 : i32 to index
    %c0_241 = arith.constant 0 : index
    %c0_242 = arith.constant 0 : index
    %482 = vector.load %arg10[%481, %c0_241, %c0_242] : memref<8x2x32xf32, #tpu.memory_space<vmem>>, vector<1x2x32xf32>
    %483 = vector.shape_cast %482 : vector<1x2x32xf32> to vector<2x32xf32>
    %484 = vector.shape_cast %480 : vector<2x32xf32> to vector<1x2x32xf32>
    tpu.vector_store %arg10[%481, %c0_241, %c0_242], %484 {strides = array<i32>} : memref<8x2x32xf32, #tpu.memory_space<vmem>>, vector<1x2x32xf32>,
    %c3_i32_243 = arith.constant 3 : i32
    %485 = arith.index_cast %c3_i32_243 : i32 to index
    %c0_244 = arith.constant 0 : index
    %c0_245 = arith.constant 0 : index
    %486 = vector.load %arg12[%485, %c0_244, %c0_245] : memref<8x2x32xf32, #tpu.memory_space<vmem>>, vector<1x2x32xf32>
    %487 = vector.shape_cast %486 : vector<1x2x32xf32> to vector<2x32xf32>
    %cst_246 = arith.constant dense<0.000000e+00> : vector<2x32xf32>
    %488 = tpu.matmul %480, %365, %cst_246 {dimension_numbers = #tpu.dot_dimension_numbers<[1], [0], [0], [1], [0, 0, 1, 1], [], []>} : vector<2x32xf32>, vector<32x32xf32>, vector<2x32xf32> -> vector<2x32xf32>
    %489 = arith.addf %487, %488 : vector<2x32xf32>
    %490 = arith.index_cast %c3_i32_243 : i32 to index
    %c0_247 = arith.constant 0 : index
    %c0_248 = arith.constant 0 : index
    %491 = vector.load %arg13[%490, %c0_247, %c0_248] : memref<8x2x32xf32, #tpu.memory_space<vmem>>, vector<1x2x32xf32>
    %492 = vector.shape_cast %491 : vector<1x2x32xf32> to vector<2x32xf32>
    %cst_249 = arith.constant dense<0.000000e+00> : vector<2x32xf32>
    %493 = tpu.matmul %480, %367, %cst_249 {dimension_numbers = #tpu.dot_dimension_numbers<[1], [0], [0], [1], [0, 0, 1, 1], [], []>} : vector<2x32xf32>, vector<32x32xf32>, vector<2x32xf32> -> vector<2x32xf32>
    %494 = arith.addf %492, %493 : vector<2x32xf32>
    %cst_250 = arith.constant dense<0.000000e+00> : vector<2x32xf32>
    %495 = tpu.matmul %480, %369, %cst_250 {dimension_numbers = #tpu.dot_dimension_numbers<[1], [0], [0], [1], [0, 0, 1, 1], [], []>} : vector<2x32xf32>, vector<32x32xf32>, vector<2x32xf32> -> vector<2x32xf32>
    %496 = arith.addf %495, %372 : vector<2x32xf32>
    %497 = arith.negf %489 : vector<2x32xf32>
    %498 = math.exp %497 : vector<2x32xf32>
    %cst_251 = arith.constant 1.000000e+00 : f32
    %499 = vector.broadcast %cst_251 : f32 to vector<2x32xf32>
    %500 = arith.addf %499, %498 : vector<2x32xf32>
    %501 = arith.divf %499, %500 : vector<2x32xf32>
    %502 = arith.negf %494 : vector<2x32xf32>
    %503 = math.exp %502 : vector<2x32xf32>
    %cst_252 = arith.constant 1.000000e+00 : f32
    %504 = vector.broadcast %cst_252 : f32 to vector<2x32xf32>
    %505 = arith.addf %504, %503 : vector<2x32xf32>
    %506 = arith.divf %504, %505 : vector<2x32xf32>
    %507 = arith.index_cast %c3_i32_243 : i32 to index
    %c0_253 = arith.constant 0 : index
    %c0_254 = arith.constant 0 : index
    %508 = vector.load %arg14[%507, %c0_253, %c0_254] : memref<8x2x32xf32, #tpu.memory_space<vmem>>, vector<1x2x32xf32>
    %509 = vector.shape_cast %508 : vector<1x2x32xf32> to vector<2x32xf32>
    %510 = arith.mulf %501, %496 : vector<2x32xf32>
    %511 = arith.addf %509, %510 : vector<2x32xf32>
    %512 = math.tanh %511 : vector<2x32xf32>
    %cst_255 = arith.constant 1.000000e+00 : f32
    %513 = vector.broadcast %cst_255 : f32 to vector<2x32xf32>
    %514 = arith.subf %513, %506 : vector<2x32xf32>
    %515 = arith.mulf %514, %512 : vector<2x32xf32>
    %516 = arith.mulf %506, %480 : vector<2x32xf32>
    %517 = arith.addf %515, %516 : vector<2x32xf32>
    %518 = arith.index_cast %c3_i32_243 : i32 to index
    %c0_256 = arith.constant 0 : index
    %c0_257 = arith.constant 0 : index
    %519 = vector.load %arg10[%518, %c0_256, %c0_257] : memref<8x2x32xf32, #tpu.memory_space<vmem>>, vector<1x2x32xf32>
    %520 = vector.shape_cast %519 : vector<1x2x32xf32> to vector<2x32xf32>
    %521 = vector.shape_cast %517 : vector<2x32xf32> to vector<1x2x32xf32>
    tpu.vector_store %arg10[%518, %c0_256, %c0_257], %521 {strides = array<i32>} : memref<8x2x32xf32, #tpu.memory_space<vmem>>, vector<1x2x32xf32>,
    %c4_i32_258 = arith.constant 4 : i32
    %522 = arith.index_cast %c4_i32_258 : i32 to index
    %c0_259 = arith.constant 0 : index
    %c0_260 = arith.constant 0 : index
    %523 = vector.load %arg12[%522, %c0_259, %c0_260] : memref<8x2x32xf32, #tpu.memory_space<vmem>>, vector<1x2x32xf32>
    %524 = vector.shape_cast %523 : vector<1x2x32xf32> to vector<2x32xf32>
    %cst_261 = arith.constant dense<0.000000e+00> : vector<2x32xf32>
    %525 = tpu.matmul %517, %365, %cst_261 {dimension_numbers = #tpu.dot_dimension_numbers<[1], [0], [0], [1], [0, 0, 1, 1], [], []>} : vector<2x32xf32>, vector<32x32xf32>, vector<2x32xf32> -> vector<2x32xf32>
    %526 = arith.addf %524, %525 : vector<2x32xf32>
    %527 = arith.index_cast %c4_i32_258 : i32 to index
    %c0_262 = arith.constant 0 : index
    %c0_263 = arith.constant 0 : index
    %528 = vector.load %arg13[%527, %c0_262, %c0_263] : memref<8x2x32xf32, #tpu.memory_space<vmem>>, vector<1x2x32xf32>
    %529 = vector.shape_cast %528 : vector<1x2x32xf32> to vector<2x32xf32>
    %cst_264 = arith.constant dense<0.000000e+00> : vector<2x32xf32>
    %530 = tpu.matmul %517, %367, %cst_264 {dimension_numbers = #tpu.dot_dimension_numbers<[1], [0], [0], [1], [0, 0, 1, 1], [], []>} : vector<2x32xf32>, vector<32x32xf32>, vector<2x32xf32> -> vector<2x32xf32>
    %531 = arith.addf %529, %530 : vector<2x32xf32>
    %cst_265 = arith.constant dense<0.000000e+00> : vector<2x32xf32>
    %532 = tpu.matmul %517, %369, %cst_265 {dimension_numbers = #tpu.dot_dimension_numbers<[1], [0], [0], [1], [0, 0, 1, 1], [], []>} : vector<2x32xf32>, vector<32x32xf32>, vector<2x32xf32> -> vector<2x32xf32>
    %533 = arith.addf %532, %372 : vector<2x32xf32>
    %534 = arith.negf %526 : vector<2x32xf32>
    %535 = math.exp %534 : vector<2x32xf32>
    %cst_266 = arith.constant 1.000000e+00 : f32
    %536 = vector.broadcast %cst_266 : f32 to vector<2x32xf32>
    %537 = arith.addf %536, %535 : vector<2x32xf32>
    %538 = arith.divf %536, %537 : vector<2x32xf32>
    %539 = arith.negf %531 : vector<2x32xf32>
    %540 = math.exp %539 : vector<2x32xf32>
    %cst_267 = arith.constant 1.000000e+00 : f32
    %541 = vector.broadcast %cst_267 : f32 to vector<2x32xf32>
    %542 = arith.addf %541, %540 : vector<2x32xf32>
    %543 = arith.divf %541, %542 : vector<2x32xf32>
    %544 = arith.index_cast %c4_i32_258 : i32 to index
    %c0_268 = arith.constant 0 : index
    %c0_269 = arith.constant 0 : index
    %545 = vector.load %arg14[%544, %c0_268, %c0_269] : memref<8x2x32xf32, #tpu.memory_space<vmem>>, vector<1x2x32xf32>
    %546 = vector.shape_cast %545 : vector<1x2x32xf32> to vector<2x32xf32>
    %547 = arith.mulf %538, %533 : vector<2x32xf32>
    %548 = arith.addf %546, %547 : vector<2x32xf32>
    %549 = math.tanh %548 : vector<2x32xf32>
    %cst_270 = arith.constant 1.000000e+00 : f32
    %550 = vector.broadcast %cst_270 : f32 to vector<2x32xf32>
    %551 = arith.subf %550, %543 : vector<2x32xf32>
    %552 = arith.mulf %551, %549 : vector<2x32xf32>
    %553 = arith.mulf %543, %517 : vector<2x32xf32>
    %554 = arith.addf %552, %553 : vector<2x32xf32>
    %555 = arith.index_cast %c4_i32_258 : i32 to index
    %c0_271 = arith.constant 0 : index
    %c0_272 = arith.constant 0 : index
    %556 = vector.load %arg10[%555, %c0_271, %c0_272] : memref<8x2x32xf32, #tpu.memory_space<vmem>>, vector<1x2x32xf32>
    %557 = vector.shape_cast %556 : vector<1x2x32xf32> to vector<2x32xf32>
    %558 = vector.shape_cast %554 : vector<2x32xf32> to vector<1x2x32xf32>
    tpu.vector_store %arg10[%555, %c0_271, %c0_272], %558 {strides = array<i32>} : memref<8x2x32xf32, #tpu.memory_space<vmem>>, vector<1x2x32xf32>,
    %c5_i32_273 = arith.constant 5 : i32
    %559 = arith.index_cast %c5_i32_273 : i32 to index
    %c0_274 = arith.constant 0 : index
    %c0_275 = arith.constant 0 : index
    %560 = vector.load %arg12[%559, %c0_274, %c0_275] : memref<8x2x32xf32, #tpu.memory_space<vmem>>, vector<1x2x32xf32>
    %561 = vector.shape_cast %560 : vector<1x2x32xf32> to vector<2x32xf32>
    %cst_276 = arith.constant dense<0.000000e+00> : vector<2x32xf32>
    %562 = tpu.matmul %554, %365, %cst_276 {dimension_numbers = #tpu.dot_dimension_numbers<[1], [0], [0], [1], [0, 0, 1, 1], [], []>} : vector<2x32xf32>, vector<32x32xf32>, vector<2x32xf32> -> vector<2x32xf32>
    %563 = arith.addf %561, %562 : vector<2x32xf32>
    %564 = arith.index_cast %c5_i32_273 : i32 to index
    %c0_277 = arith.constant 0 : index
    %c0_278 = arith.constant 0 : index
    %565 = vector.load %arg13[%564, %c0_277, %c0_278] : memref<8x2x32xf32, #tpu.memory_space<vmem>>, vector<1x2x32xf32>
    %566 = vector.shape_cast %565 : vector<1x2x32xf32> to vector<2x32xf32>
    %cst_279 = arith.constant dense<0.000000e+00> : vector<2x32xf32>
    %567 = tpu.matmul %554, %367, %cst_279 {dimension_numbers = #tpu.dot_dimension_numbers<[1], [0], [0], [1], [0, 0, 1, 1], [], []>} : vector<2x32xf32>, vector<32x32xf32>, vector<2x32xf32> -> vector<2x32xf32>
    %568 = arith.addf %566, %567 : vector<2x32xf32>
    %cst_280 = arith.constant dense<0.000000e+00> : vector<2x32xf32>
    %569 = tpu.matmul %554, %369, %cst_280 {dimension_numbers = #tpu.dot_dimension_numbers<[1], [0], [0], [1], [0, 0, 1, 1], [], []>} : vector<2x32xf32>, vector<32x32xf32>, vector<2x32xf32> -> vector<2x32xf32>
    %570 = arith.addf %569, %372 : vector<2x32xf32>
    %571 = arith.negf %563 : vector<2x32xf32>
    %572 = math.exp %571 : vector<2x32xf32>
    %cst_281 = arith.constant 1.000000e+00 : f32
    %573 = vector.broadcast %cst_281 : f32 to vector<2x32xf32>
    %574 = arith.addf %573, %572 : vector<2x32xf32>
    %575 = arith.divf %573, %574 : vector<2x32xf32>
    %576 = arith.negf %568 : vector<2x32xf32>
    %577 = math.exp %576 : vector<2x32xf32>
    %cst_282 = arith.constant 1.000000e+00 : f32
    %578 = vector.broadcast %cst_282 : f32 to vector<2x32xf32>
    %579 = arith.addf %578, %577 : vector<2x32xf32>
    %580 = arith.divf %578, %579 : vector<2x32xf32>
    %581 = arith.index_cast %c5_i32_273 : i32 to index
    %c0_283 = arith.constant 0 : index
    %c0_284 = arith.constant 0 : index
    %582 = vector.load %arg14[%581, %c0_283, %c0_284] : memref<8x2x32xf32, #tpu.memory_space<vmem>>, vector<1x2x32xf32>
    %583 = vector.shape_cast %582 : vector<1x2x32xf32> to vector<2x32xf32>
    %584 = arith.mulf %575, %570 : vector<2x32xf32>
    %585 = arith.addf %583, %584 : vector<2x32xf32>
    %586 = math.tanh %585 : vector<2x32xf32>
    %cst_285 = arith.constant 1.000000e+00 : f32
    %587 = vector.broadcast %cst_285 : f32 to vector<2x32xf32>
    %588 = arith.subf %587, %580 : vector<2x32xf32>
    %589 = arith.mulf %588, %586 : vector<2x32xf32>
    %590 = arith.mulf %580, %554 : vector<2x32xf32>
    %591 = arith.addf %589, %590 : vector<2x32xf32>
    %592 = arith.index_cast %c5_i32_273 : i32 to index
    %c0_286 = arith.constant 0 : index
    %c0_287 = arith.constant 0 : index
    %593 = vector.load %arg10[%592, %c0_286, %c0_287] : memref<8x2x32xf32, #tpu.memory_space<vmem>>, vector<1x2x32xf32>
    %594 = vector.shape_cast %593 : vector<1x2x32xf32> to vector<2x32xf32>
    %595 = vector.shape_cast %591 : vector<2x32xf32> to vector<1x2x32xf32>
    tpu.vector_store %arg10[%592, %c0_286, %c0_287], %595 {strides = array<i32>} : memref<8x2x32xf32, #tpu.memory_space<vmem>>, vector<1x2x32xf32>,
    %c6_i32_288 = arith.constant 6 : i32
    %596 = arith.index_cast %c6_i32_288 : i32 to index
    %c0_289 = arith.constant 0 : index
    %c0_290 = arith.constant 0 : index
    %597 = vector.load %arg12[%596, %c0_289, %c0_290] : memref<8x2x32xf32, #tpu.memory_space<vmem>>, vector<1x2x32xf32>
    %598 = vector.shape_cast %597 : vector<1x2x32xf32> to vector<2x32xf32>
    %cst_291 = arith.constant dense<0.000000e+00> : vector<2x32xf32>
    %599 = tpu.matmul %591, %365, %cst_291 {dimension_numbers = #tpu.dot_dimension_numbers<[1], [0], [0], [1], [0, 0, 1, 1], [], []>} : vector<2x32xf32>, vector<32x32xf32>, vector<2x32xf32> -> vector<2x32xf32>
    %600 = arith.addf %598, %599 : vector<2x32xf32>
    %601 = arith.index_cast %c6_i32_288 : i32 to index
    %c0_292 = arith.constant 0 : index
    %c0_293 = arith.constant 0 : index
    %602 = vector.load %arg13[%601, %c0_292, %c0_293] : memref<8x2x32xf32, #tpu.memory_space<vmem>>, vector<1x2x32xf32>
    %603 = vector.shape_cast %602 : vector<1x2x32xf32> to vector<2x32xf32>
    %cst_294 = arith.constant dense<0.000000e+00> : vector<2x32xf32>
    %604 = tpu.matmul %591, %367, %cst_294 {dimension_numbers = #tpu.dot_dimension_numbers<[1], [0], [0], [1], [0, 0, 1, 1], [], []>} : vector<2x32xf32>, vector<32x32xf32>, vector<2x32xf32> -> vector<2x32xf32>
    %605 = arith.addf %603, %604 : vector<2x32xf32>
    %cst_295 = arith.constant dense<0.000000e+00> : vector<2x32xf32>
    %606 = tpu.matmul %591, %369, %cst_295 {dimension_numbers = #tpu.dot_dimension_numbers<[1], [0], [0], [1], [0, 0, 1, 1], [], []>} : vector<2x32xf32>, vector<32x32xf32>, vector<2x32xf32> -> vector<2x32xf32>
    %607 = arith.addf %606, %372 : vector<2x32xf32>
    %608 = arith.negf %600 : vector<2x32xf32>
    %609 = math.exp %608 : vector<2x32xf32>
    %cst_296 = arith.constant 1.000000e+00 : f32
    %610 = vector.broadcast %cst_296 : f32 to vector<2x32xf32>
    %611 = arith.addf %610, %609 : vector<2x32xf32>
    %612 = arith.divf %610, %611 : vector<2x32xf32>
    %613 = arith.negf %605 : vector<2x32xf32>
    %614 = math.exp %613 : vector<2x32xf32>
    %cst_297 = arith.constant 1.000000e+00 : f32
    %615 = vector.broadcast %cst_297 : f32 to vector<2x32xf32>
    %616 = arith.addf %615, %614 : vector<2x32xf32>
    %617 = arith.divf %615, %616 : vector<2x32xf32>
    %618 = arith.index_cast %c6_i32_288 : i32 to index
    %c0_298 = arith.constant 0 : index
    %c0_299 = arith.constant 0 : index
    %619 = vector.load %arg14[%618, %c0_298, %c0_299] : memref<8x2x32xf32, #tpu.memory_space<vmem>>, vector<1x2x32xf32>
    %620 = vector.shape_cast %619 : vector<1x2x32xf32> to vector<2x32xf32>
    %621 = arith.mulf %612, %607 : vector<2x32xf32>
    %622 = arith.addf %620, %621 : vector<2x32xf32>
    %623 = math.tanh %622 : vector<2x32xf32>
    %cst_300 = arith.constant 1.000000e+00 : f32
    %624 = vector.broadcast %cst_300 : f32 to vector<2x32xf32>
    %625 = arith.subf %624, %617 : vector<2x32xf32>
    %626 = arith.mulf %625, %623 : vector<2x32xf32>
    %627 = arith.mulf %617, %591 : vector<2x32xf32>
    %628 = arith.addf %626, %627 : vector<2x32xf32>
    %629 = arith.index_cast %c6_i32_288 : i32 to index
    %c0_301 = arith.constant 0 : index
    %c0_302 = arith.constant 0 : index
    %630 = vector.load %arg10[%629, %c0_301, %c0_302] : memref<8x2x32xf32, #tpu.memory_space<vmem>>, vector<1x2x32xf32>
    %631 = vector.shape_cast %630 : vector<1x2x32xf32> to vector<2x32xf32>
    %632 = vector.shape_cast %628 : vector<2x32xf32> to vector<1x2x32xf32>
    tpu.vector_store %arg10[%629, %c0_301, %c0_302], %632 {strides = array<i32>} : memref<8x2x32xf32, #tpu.memory_space<vmem>>, vector<1x2x32xf32>,
    %c7_i32_303 = arith.constant 7 : i32
    %633 = arith.index_cast %c7_i32_303 : i32 to index
    %c0_304 = arith.constant 0 : index
    %c0_305 = arith.constant 0 : index
    %634 = vector.load %arg12[%633, %c0_304, %c0_305] : memref<8x2x32xf32, #tpu.memory_space<vmem>>, vector<1x2x32xf32>
    %635 = vector.shape_cast %634 : vector<1x2x32xf32> to vector<2x32xf32>
    %cst_306 = arith.constant dense<0.000000e+00> : vector<2x32xf32>
    %636 = tpu.matmul %628, %365, %cst_306 {dimension_numbers = #tpu.dot_dimension_numbers<[1], [0], [0], [1], [0, 0, 1, 1], [], []>} : vector<2x32xf32>, vector<32x32xf32>, vector<2x32xf32> -> vector<2x32xf32>
    %637 = arith.addf %635, %636 : vector<2x32xf32>
    %638 = arith.index_cast %c7_i32_303 : i32 to index
    %c0_307 = arith.constant 0 : index
    %c0_308 = arith.constant 0 : index
    %639 = vector.load %arg13[%638, %c0_307, %c0_308] : memref<8x2x32xf32, #tpu.memory_space<vmem>>, vector<1x2x32xf32>
    %640 = vector.shape_cast %639 : vector<1x2x32xf32> to vector<2x32xf32>
    %cst_309 = arith.constant dense<0.000000e+00> : vector<2x32xf32>
    %641 = tpu.matmul %628, %367, %cst_309 {dimension_numbers = #tpu.dot_dimension_numbers<[1], [0], [0], [1], [0, 0, 1, 1], [], []>} : vector<2x32xf32>, vector<32x32xf32>, vector<2x32xf32> -> vector<2x32xf32>
    %642 = arith.addf %640, %641 : vector<2x32xf32>
    %cst_310 = arith.constant dense<0.000000e+00> : vector<2x32xf32>
    %643 = tpu.matmul %628, %369, %cst_310 {dimension_numbers = #tpu.dot_dimension_numbers<[1], [0], [0], [1], [0, 0, 1, 1], [], []>} : vector<2x32xf32>, vector<32x32xf32>, vector<2x32xf32> -> vector<2x32xf32>
    %644 = arith.addf %643, %372 : vector<2x32xf32>
    %645 = arith.negf %637 : vector<2x32xf32>
    %646 = math.exp %645 : vector<2x32xf32>
    %cst_311 = arith.constant 1.000000e+00 : f32
    %647 = vector.broadcast %cst_311 : f32 to vector<2x32xf32>
    %648 = arith.addf %647, %646 : vector<2x32xf32>
    %649 = arith.divf %647, %648 : vector<2x32xf32>
    %650 = arith.negf %642 : vector<2x32xf32>
    %651 = math.exp %650 : vector<2x32xf32>
    %cst_312 = arith.constant 1.000000e+00 : f32
    %652 = vector.broadcast %cst_312 : f32 to vector<2x32xf32>
    %653 = arith.addf %652, %651 : vector<2x32xf32>
    %654 = arith.divf %652, %653 : vector<2x32xf32>
    %655 = arith.index_cast %c7_i32_303 : i32 to index
    %c0_313 = arith.constant 0 : index
    %c0_314 = arith.constant 0 : index
    %656 = vector.load %arg14[%655, %c0_313, %c0_314] : memref<8x2x32xf32, #tpu.memory_space<vmem>>, vector<1x2x32xf32>
    %657 = vector.shape_cast %656 : vector<1x2x32xf32> to vector<2x32xf32>
    %658 = arith.mulf %649, %644 : vector<2x32xf32>
    %659 = arith.addf %657, %658 : vector<2x32xf32>
    %660 = math.tanh %659 : vector<2x32xf32>
    %cst_315 = arith.constant 1.000000e+00 : f32
    %661 = vector.broadcast %cst_315 : f32 to vector<2x32xf32>
    %662 = arith.subf %661, %654 : vector<2x32xf32>
    %663 = arith.mulf %662, %660 : vector<2x32xf32>
    %664 = arith.mulf %654, %628 : vector<2x32xf32>
    %665 = arith.addf %663, %664 : vector<2x32xf32>
    %666 = arith.index_cast %c7_i32_303 : i32 to index
    %c0_316 = arith.constant 0 : index
    %c0_317 = arith.constant 0 : index
    %667 = vector.load %arg10[%666, %c0_316, %c0_317] : memref<8x2x32xf32, #tpu.memory_space<vmem>>, vector<1x2x32xf32>
    %668 = vector.shape_cast %667 : vector<1x2x32xf32> to vector<2x32xf32>
    %669 = vector.shape_cast %665 : vector<2x32xf32> to vector<1x2x32xf32>
    tpu.vector_store %arg10[%666, %c0_316, %c0_317], %669 {strides = array<i32>} : memref<8x2x32xf32, #tpu.memory_space<vmem>>, vector<1x2x32xf32>,
    %c8_i32_318 = arith.constant 8 : i32
    return
  }
  func.func @transform_0(%arg0: i32) -> (i32, i32, i32) {
    %c0_i32 = arith.constant 0 : i32
    %c0_i32_0 = arith.constant 0 : i32
    %c0_i32_1 = arith.constant 0 : i32
    %c0_i32_2 = arith.constant 0 : i32
    return %c0_i32, %c0_i32_0, %c0_i32_1 : i32, i32, i32
  }
  func.func @transform_1(%arg0: i32) -> (i32, i32, i32) {
    %c0_i32 = arith.constant 0 : i32
    %c0_i32_0 = arith.constant 0 : i32
    %c0_i32_1 = arith.constant 0 : i32
    %c0_i32_2 = arith.constant 0 : i32
    return %c0_i32, %c0_i32_0, %c0_i32_1 : i32, i32, i32
  }
  func.func @transform_2(%arg0: i32) -> (i32, i32, i32) {
    %c0_i32 = arith.constant 0 : i32
    %c0_i32_0 = arith.constant 0 : i32
    %c0_i32_1 = arith.constant 0 : i32
    %c0_i32_2 = arith.constant 0 : i32
    return %c0_i32, %c0_i32_0, %c0_i32_1 : i32, i32, i32
  }
  func.func @transform_3(%arg0: i32) -> (i32, i32, i32) {
    %c0_i32 = arith.constant 0 : i32
    %c0_i32_0 = arith.constant 0 : i32
    %c0_i32_1 = arith.constant 0 : i32
    %c0_i32_2 = arith.constant 0 : i32
    return %c0_i32, %c0_i32_0, %c0_i32_1 : i32, i32, i32
  }
  func.func @transform_4(%arg0: i32) -> (i32, i32) {
    %c0_i32 = arith.constant 0 : i32
    %c0_i32_0 = arith.constant 0 : i32
    %c0_i32_1 = arith.constant 0 : i32
    return %c0_i32, %c0_i32_0 : i32, i32
  }
  func.func @transform_5(%arg0: i32) -> (i32, i32, i32) {
    %c0_i32 = arith.constant 0 : i32
    %c0_i32_0 = arith.constant 0 : i32
    %c0_i32_1 = arith.constant 0 : i32
    %c0_i32_2 = arith.constant 0 : i32
    return %c0_i32, %c0_i32_0, %c0_i32_1 : i32, i32, i32
  }
  func.func @transform_6(%arg0: i32) -> (i32, i32, i32) {
    %c0_i32 = arith.constant 0 : i32
    %c0_i32_0 = arith.constant 0 : i32
    %c0_i32_1 = arith.constant 0 : i32
    %c0_i32_2 = arith.constant 0 : i32
    return %c0_i32, %c0_i32_0, %c0_i32_1 : i32, i32, i32
  }
  func.func @transform_7(%arg0: i32) -> (i32, i32, i32) {
    %c0_i32 = arith.constant 0 : i32
    %c0_i32_0 = arith.constant 0 : i32
    %c0_i32_1 = arith.constant 0 : i32
    %c0_i32_2 = arith.constant 0 : i32
    return %c0_i32, %c0_i32_0, %c0_i32_1 : i32, i32, i32
  }
  func.func @transform_8(%arg0: i32) -> (i32, i32) {
    %c0_i32 = arith.constant 0 : i32
    %c0_i32_0 = arith.constant 0 : i32
    %c0_i32_1 = arith.constant 0 : i32
    return %c0_i32, %c0_i32_0 : i32, i32
  }
  func.func @transform_9(%arg0: i32) -> (i32, i32, i32) {
    %c0_i32 = arith.constant 0 : i32
    %c0_i32_0 = arith.constant 0 : i32
    %c0_i32_1 = arith.constant 0 : i32
    %c0_i32_2 = arith.constant 0 : i32
    return %c0_i32, %c0_i32_0, %c0_i32_1 : i32, i32, i32
  }
}

</mosaic_0001>

<llo_original>
// kernel: gru_layer_forward.1
$region0: #{gru_layer_forward.1}
  #allocation0 [shape = 'u32[]', space=smem, size = 0x4, offset = 0x4, fixed_abs, tag = 'smem constant byte address 0x4 - core index']
  #allocation1 [shape = 'u32[72,128]{1,0:T(1,128)}', space=vmem, size = 0x9000, scoped, tag = 'internal scratch']
  #allocation2 [shape = 'f32[8,2,32]{2,1,0:T(2,128)}', space=vmem, size = 0x2000, scoped, tag = 'scratch operand']
  #allocation3 [shape = 'f32[8,2,32]{2,1,0:T(2,128)}', space=vmem, size = 0x2000, scoped, tag = 'scratch operand']
  #allocation4 [shape = 'f32[8,2,32]{2,1,0:T(2,128)}', space=vmem, size = 0x2000, scoped, tag = 'scratch operand']
  #allocation5 [shape = 'f32[8,2,32]{2,1,0:T(2,128)}', space=vmem, size = 0x2000, scoped, tag = 'scratch operand']
  %s0 = inlined_call_operand.vmem [shape: f32[8,2,4], index: 0, kind: input, shape index: {}]
  %s1 = inlined_call_operand.vmem [shape: f32[3,4,32], index: 1, kind: input, shape index: {}]
  %s2 = inlined_call_operand.vmem [shape: f32[3,32,32], index: 2, kind: input, shape index: {}]
  %s3 = inlined_call_operand.vmem [shape: f32[3,1,32], index: 3, kind: input, shape index: {}]
  %s4 = inlined_call_operand.vmem [shape: f32[1,32], index: 4, kind: input, shape index: {}]
  %s5 = inlined_call_operand.vmem [shape: f32[3,32,32], index: 5, kind: input, shape index: {}]
  %s6 = inlined_call_operand.vmem [shape: f32[3,32,32], index: 6, kind: input, shape index: {}]
  %s7 = inlined_call_operand.vmem [shape: f32[3,1,32], index: 7, kind: input, shape index: {}]
  %s8 = inlined_call_operand.vmem [shape: f32[1,32], index: 8, kind: input, shape index: {}]
  %s9 = inlined_call_operand.vmem [shape: f32[8,2,32], index: 9, kind: output, shape index: {}]
  %s10 = sld [smem:[#allocation0]]
  $region46: #{gru_layer_forward.1} parent=0
    _
  %s12 = ssub.s32 1, %s10
  %s13 = scalar_select 0, %s12, %s10
  // Predicated region
  $region2: #{gru_layer_forward.1} parent=0 // pred_check
    _
  $region3: #{gru_layer_forward.1} parent=0 // pred_check_branch
    %15 = sbr.rel (0) target = $region5
  $region4: #{gru_layer_forward.1} parent=0 // pred_region
    _
  $region5: #{gru_layer_forward.1} parent=0 // pred_fallthru
    _
  // Predicated region
  $region6: #{gru_layer_forward.1} parent=0 // pred_check
    _
  $region7: #{gru_layer_forward.1} parent=0 // pred_check_branch
    %17 = sbr.rel (0) target = $region9
  $region8: #{gru_layer_forward.1} parent=0 // pred_region
    _
  $region9: #{gru_layer_forward.1} parent=0 // pred_fallthru
    _
  // Predicated region
  $region10: #{gru_layer_forward.1} parent=0 // pred_check
    _
  $region11: #{gru_layer_forward.1} parent=0 // pred_check_branch
    %19 = sbr.rel (0) target = $region13
  $region12: #{gru_layer_forward.1} parent=0 // pred_region
    _
  $region13: #{gru_layer_forward.1} parent=0 // pred_fallthru
    _
  // Predicated region
  $region14: #{gru_layer_forward.1} parent=0 // pred_check
    _
  $region15: #{gru_layer_forward.1} parent=0 // pred_check_branch
    %21 = sbr.rel (0) target = $region17
  $region16: #{gru_layer_forward.1} parent=0 // pred_region
    _
  $region17: #{gru_layer_forward.1} parent=0 // pred_fallthru
    _
  // Predicated region
  $region18: #{gru_layer_forward.1} parent=0 // pred_check
    _
  $region19: #{gru_layer_forward.1} parent=0 // pred_check_branch
    %23 = sbr.rel (0) target = $region21
  $region20: #{gru_layer_forward.1} parent=0 // pred_region
    _
  $region21: #{gru_layer_forward.1} parent=0 // pred_fallthru
    _
  // Predicated region
  $region22: #{gru_layer_forward.1} parent=0 // pred_check
    _
  $region23: #{gru_layer_forward.1} parent=0 // pred_check_branch
    %25 = sbr.rel (0) target = $region25
  $region24: #{gru_layer_forward.1} parent=0 // pred_region
    _
  $region25: #{gru_layer_forward.1} parent=0 // pred_fallthru
    _
  // Predicated region
  $region26: #{gru_layer_forward.1} parent=0 // pred_check
    _
  $region27: #{gru_layer_forward.1} parent=0 // pred_check_branch
    %27 = sbr.rel (0) target = $region29
  $region28: #{gru_layer_forward.1} parent=0 // pred_region
    _
  $region29: #{gru_layer_forward.1} parent=0 // pred_fallthru
    _
  // Predicated region
  $region30: #{gru_layer_forward.1} parent=0 // pred_check
    _
  $region31: #{gru_layer_forward.1} parent=0 // pred_check_branch
    %29 = sbr.rel (0) target = $region33
  $region32: #{gru_layer_forward.1} parent=0 // pred_region
    _
  $region33: #{gru_layer_forward.1} parent=0 // pred_fallthru
    _
  // Predicated region
  $region34: #{gru_layer_forward.1} parent=0 // pred_check
    _
  $region35: #{gru_layer_forward.1} parent=0 // pred_check_branch
    %31 = sbr.rel (0) target = $region37
  $region36: #{gru_layer_forward.1} parent=0 // pred_region
    _
  $region37: #{gru_layer_forward.1} parent=0 // pred_fallthru
    _
  %v32 = vld [vmem:[%s0] sm:$0x3]
  %v33 = vld [vmem:[%s0 + $0x2] sm:$0x3]
  %v34 = vld [vmem:[%s0 + $0x4] sm:$0x3]
  %v35 = vld [vmem:[%s0 + $0x6] sm:$0x3]
  %v36 = vld [vmem:[%s0 + $0x8] sm:$0x3]
  %v37 = vld [vmem:[%s0 + $0xa] sm:$0x3]
  %v38 = vld [vmem:[%s0 + $0xc] sm:$0x3]
  %v39 = vld [vmem:[%s0 + $0xe] sm:$0x3]
  %v40 = vld [vmem:[%s1] sm:$0xf]
  %v41 = vld [vmem:[%s3] sm:$0x1]
  %v43 = vperm.slane %v41, 0
  %53 = vst [vmem:[#allocation1] ss:$4 sm:$0xff] %v32
  %s54 = scalar_lea.vmem [#allocation1], 1
  %55 = vst [vmem:[%s54] ss:$4 sm:$0xff] %v33
  %s56 = scalar_lea.vmem [#allocation1], 2
  %57 = vst [vmem:[%s56] ss:$4 sm:$0xff] %v34
  %s58 = scalar_lea.vmem [#allocation1], 3
  %59 = vst [vmem:[%s58] ss:$4 sm:$0xff] %v35
  %s60 = scalar_lea.vmem [#allocation1], 32
  %61 = vst [vmem:[%s60] ss:$4 sm:$0xff] %v36
  %s62 = scalar_lea.vmem [#allocation1], 33
  %63 = vst [vmem:[%s62] ss:$4 sm:$0xff] %v37
  %s64 = scalar_lea.vmem [#allocation1], 34
  %65 = vst [vmem:[%s64] ss:$4 sm:$0xff] %v38
  %s66 = scalar_lea.vmem [#allocation1], 35
  %67 = vst [vmem:[%s66] ss:$4 sm:$0xff] %v39
  %v68 = vld.sshfl [vmem:[#allocation1] sm:$0xff pattern:$0x73625140]
  %v69 = vld.sshfl [vmem:[#allocation1 + $0x20] sm:$0xff pattern:$0x73625140]
  %vm70 = vcmask 31744
  %v71 = vsel %vm70, %v68, 0
  %v73 = vsel %vm70, %v69, 0
  %vm75 = vcmask 1043456
  %v77 = vsel %vm75, %v40, 0
  %79 = vmatpush.msra.mxu0 0.0
  %80 = vmatpush.msra.mxu0 0.0
  %81 = vmatpush.msra.mxu0 0.0
  %82 = vmatpush.msra.mxu0 0.0
  %83 = vmatpush.msra.mxu0 0.0
  %84 = vmatpush.msra.mxu0 0.0
  %85 = vmatpush.msra.mxu0 0.0
  %86 = vmatpush.msra.mxu0 0.0
  %87 = vmatpush.msra.mxu0 0.0
  %88 = vmatpush.msra.mxu0 0.0
  %89 = vmatpush.msra.mxu0 0.0
  %90 = vmatpush.msra.mxu0 0.0
  %91 = vmatpush.msra.mxu0 0.0
  %92 = vmatpush.msra.mxu0 0.0
  %93 = vmatpush.msra.mxu0 0.0
  %94 = vmatpush.msra.mxu0 %v77
  %95 = vmatmul.f32.gmra.mxu0 %v71
  %v96 = vpop.f32.mrf.mxu0
  %v97 = vadd.f32 %v43, %v96
  %98 = vmatmul.f32.gmra.mxu0 %v73
  %v99 = vpop.f32.mrf.mxu0
  %v100 = vadd.f32 %v43, %v99
  %101 = vdwg.mxu0
  %v104 = vrot.slane %v97, 2
  %v105 = vrot.slane %v97, 4
  %v106 = vrot.slane %v97, 6
  %v107 = vrot.slane %v100, 2
  %v108 = vrot.slane %v100, 4
  %v109 = vrot.slane %v100, 6
  %vm116 = vcmask 254976
  %117 = vst.msk [vmem:[#allocation3] sm:$0x3] %vm116, %v97
  %118 = vst.msk [vmem:[#allocation3 + $0x2] sm:$0x3] %vm116, %v104
  %119 = vst.msk [vmem:[#allocation3 + $0x4] sm:$0x3] %vm116, %v105
  %120 = vst.msk [vmem:[#allocation3 + $0x6] sm:$0x3] %vm116, %v106
  %121 = vst.msk [vmem:[#allocation3 + $0x8] sm:$0x3] %vm116, %v100
  %122 = vst.msk [vmem:[#allocation3 + $0xa] sm:$0x3] %vm116, %v107
  %123 = vst.msk [vmem:[#allocation3 + $0xc] sm:$0x3] %vm116, %v108
  %124 = vst.msk [vmem:[#allocation3 + $0xe] sm:$0x3] %vm116, %v109
  %s125 = scalar_lea.vmem %s1, 4
  %v126 = vld [vmem:[%s125] sm:$0xf]
  %s127 = scalar_lea.vmem %s3, 1
  %v128 = vld [vmem:[%s127] sm:$0x1]
  %v130 = vperm.slane %v128, 0
  %132 = vst [vmem:[#allocation1] ss:$4 sm:$0xff] %v32
  %s133 = scalar_lea.vmem [#allocation1], 1
  %134 = vst [vmem:[%s133] ss:$4 sm:$0xff] %v33
  %s135 = scalar_lea.vmem [#allocation1], 2
  %136 = vst [vmem:[%s135] ss:$4 sm:$0xff] %v34
  %s137 = scalar_lea.vmem [#allocation1], 3
  %138 = vst [vmem:[%s137] ss:$4 sm:$0xff] %v35
  %s139 = scalar_lea.vmem [#allocation1], 32
  %140 = vst [vmem:[%s139] ss:$4 sm:$0xff] %v36
  %s141 = scalar_lea.vmem [#allocation1], 33
  %142 = vst [vmem:[%s141] ss:$4 sm:$0xff] %v37
  %s143 = scalar_lea.vmem [#allocation1], 34
  %144 = vst [vmem:[%s143] ss:$4 sm:$0xff] %v38
  %s145 = scalar_lea.vmem [#allocation1], 35
  %146 = vst [vmem:[%s145] ss:$4 sm:$0xff] %v39
  %v147 = vld.sshfl [vmem:[#allocation1] sm:$0xff pattern:$0x73625140]
  %v148 = vld.sshfl [vmem:[#allocation1 + $0x20] sm:$0xff pattern:$0x73625140]
  %v149 = vsel %vm70, %v147, 0
  %v151 = vsel %vm70, %v148, 0
  %v154 = vsel %vm75, %v126, 0
  %156 = vmatpush.msra.mxu0 0.0
  %157 = vmatpush.msra.mxu0 0.0
  %158 = vmatpush.msra.mxu0 0.0
  %159 = vmatpush.msra.mxu0 0.0
  %160 = vmatpush.msra.mxu0 0.0
  %161 = vmatpush.msra.mxu0 0.0
  %162 = vmatpush.msra.mxu0 0.0
  %163 = vmatpush.msra.mxu0 0.0
  %164 = vmatpush.msra.mxu0 0.0
  %165 = vmatpush.msra.mxu0 0.0
  %166 = vmatpush.msra.mxu0 0.0
  %167 = vmatpush.msra.mxu0 0.0
  %168 = vmatpush.msra.mxu0 0.0
  %169 = vmatpush.msra.mxu0 0.0
  %170 = vmatpush.msra.mxu0 0.0
  %171 = vmatpush.msra.mxu0 %v154
  %172 = vmatmul.f32.gmra.mxu0 %v149
  %v173 = vpop.f32.mrf.mxu0
  %v174 = vadd.f32 %v130, %v173
  %175 = vmatmul.f32.gmra.mxu0 %v151
  %v176 = vpop.f32.mrf.mxu0
  %v177 = vadd.f32 %v130, %v176
  %178 = vdwg.mxu0
  %v181 = vrot.slane %v174, 2
  %v182 = vrot.slane %v174, 4
  %v183 = vrot.slane %v174, 6
  %v184 = vrot.slane %v177, 2
  %v185 = vrot.slane %v177, 4
  %v186 = vrot.slane %v177, 6
  %193 = vst.msk [vmem:[#allocation4] sm:$0x3] %vm116, %v174
  %194 = vst.msk [vmem:[#allocation4 + $0x2] sm:$0x3] %vm116, %v181
  %195 = vst.msk [vmem:[#allocation4 + $0x4] sm:$0x3] %vm116, %v182
  %196 = vst.msk [vmem:[#allocation4 + $0x6] sm:$0x3] %vm116, %v183
  %197 = vst.msk [vmem:[#allocation4 + $0x8] sm:$0x3] %vm116, %v177
  %198 = vst.msk [vmem:[#allocation4 + $0xa] sm:$0x3] %vm116, %v184
  %199 = vst.msk [vmem:[#allocation4 + $0xc] sm:$0x3] %vm116, %v185
  %200 = vst.msk [vmem:[#allocation4 + $0xe] sm:$0x3] %vm116, %v186
  %s201 = scalar_lea.vmem %s1, 8
  %v202 = vld [vmem:[%s201] sm:$0xf]
  %s203 = scalar_lea.vmem %s3, 2
  %v204 = vld [vmem:[%s203] sm:$0x1]
  %v206 = vperm.slane %v204, 0
  %208 = vst [vmem:[#allocation1] ss:$4 sm:$0xff] %v32
  %s209 = scalar_lea.vmem [#allocation1], 1
  %210 = vst [vmem:[%s209] ss:$4 sm:$0xff] %v33
  %s211 = scalar_lea.vmem [#allocation1], 2
  %212 = vst [vmem:[%s211] ss:$4 sm:$0xff] %v34
  %s213 = scalar_lea.vmem [#allocation1], 3
  %214 = vst [vmem:[%s213] ss:$4 sm:$0xff] %v35
  %s215 = scalar_lea.vmem [#allocation1], 32
  %216 = vst [vmem:[%s215] ss:$4 sm:$0xff] %v36
  %s217 = scalar_lea.vmem [#allocation1], 33
  %218 = vst [vmem:[%s217] ss:$4 sm:$0xff] %v37
  %s219 = scalar_lea.vmem [#allocation1], 34
  %220 = vst [vmem:[%s219] ss:$4 sm:$0xff] %v38
  %s221 = scalar_lea.vmem [#allocation1], 35
  %222 = vst [vmem:[%s221] ss:$4 sm:$0xff] %v39
  %v223 = vld.sshfl [vmem:[#allocation1] sm:$0xff pattern:$0x73625140]
  %v224 = vld.sshfl [vmem:[#allocation1 + $0x20] sm:$0xff pattern:$0x73625140]
  %v225 = vsel %vm70, %v223, 0
  %v227 = vsel %vm70, %v224, 0
  %v230 = vsel %vm75, %v202, 0
  %232 = vmatpush.msra.mxu0 0.0
  %233 = vmatpush.msra.mxu0 0.0
  %234 = vmatpush.msra.mxu0 0.0
  %235 = vmatpush.msra.mxu0 0.0
  %236 = vmatpush.msra.mxu0 0.0
  %237 = vmatpush.msra.mxu0 0.0
  %238 = vmatpush.msra.mxu0 0.0
  %239 = vmatpush.msra.mxu0 0.0
  %240 = vmatpush.msra.mxu0 0.0
  %241 = vmatpush.msra.mxu0 0.0
  %242 = vmatpush.msra.mxu0 0.0
  %243 = vmatpush.msra.mxu0 0.0
  %244 = vmatpush.msra.mxu0 0.0
  %245 = vmatpush.msra.mxu0 0.0
  %246 = vmatpush.msra.mxu0 0.0
  %247 = vmatpush.msra.mxu0 %v230
  %248 = vmatmul.f32.gmra.mxu0 %v225
  %v249 = vpop.f32.mrf.mxu0
  %v250 = vadd.f32 %v206, %v249
  %251 = vmatmul.f32.gmra.mxu0 %v227
  %v252 = vpop.f32.mrf.mxu0
  %v253 = vadd.f32 %v206, %v252
  %254 = vdwg.mxu0
  %v257 = vrot.slane %v250, 2
  %v258 = vrot.slane %v250, 4
  %v259 = vrot.slane %v250, 6
  %v260 = vrot.slane %v253, 2
  %v261 = vrot.slane %v253, 4
  %v262 = vrot.slane %v253, 6
  %269 = vst.msk [vmem:[#allocation5] sm:$0x3] %vm116, %v250
  %270 = vst.msk [vmem:[#allocation5 + $0x2] sm:$0x3] %vm116, %v257
  %271 = vst.msk [vmem:[#allocation5 + $0x4] sm:$0x3] %vm116, %v258
  %272 = vst.msk [vmem:[#allocation5 + $0x6] sm:$0x3] %vm116, %v259
  %273 = vst.msk [vmem:[#allocation5 + $0x8] sm:$0x3] %vm116, %v253
  %274 = vst.msk [vmem:[#allocation5 + $0xa] sm:$0x3] %vm116, %v260
  %275 = vst.msk [vmem:[#allocation5 + $0xc] sm:$0x3] %vm116, %v261
  %276 = vst.msk [vmem:[#allocation5 + $0xe] sm:$0x3] %vm116, %v262
  %v277 = vld [vmem:[%s2] sm:$0xff]
  %v278 = vld [vmem:[%s2 + $0x8] sm:$0xff]
  %v279 = vld [vmem:[%s2 + $0x10] sm:$0xff]
  %v280 = vld [vmem:[%s2 + $0x18] sm:$0xff]
  %s281 = scalar_lea.vmem %s2, 32
  %v282 = vld [vmem:[%s281] sm:$0xff]
  %v283 = vld [vmem:[%s281 + $0x8] sm:$0xff]
  %v284 = vld [vmem:[%s281 + $0x10] sm:$0xff]
  %v285 = vld [vmem:[%s281 + $0x18] sm:$0xff]
  %s286 = scalar_lea.vmem %s2, 64
  %v287 = vld [vmem:[%s286] sm:$0xff]
  %v288 = vld [vmem:[%s286 + $0x8] sm:$0xff]
  %v289 = vld [vmem:[%s286 + $0x10] sm:$0xff]
  %v290 = vld [vmem:[%s286 + $0x18] sm:$0xff]
  %v291 = vld [vmem:[%s4] sm:$0x1]
  %v293 = vperm.slane %v291, 0
  %v295 = vld [vmem:[#allocation3] sm:$0x3]
  %vm296 = vcmask 261120
  %v298 = vsel %vm296, 0.0, 0
  %300 = vmatpush.msra.mxu0 0.0
  %301 = vmatpush.msra.mxu0 0.0
  %302 = vmatpush.msra.mxu0 0.0
  %303 = vmatpush.msra.mxu0 0.0
  %304 = vmatpush.msra.mxu0 0.0
  %305 = vmatpush.msra.mxu0 0.0
  %306 = vmatpush.msra.mxu0 0.0
  %307 = vmatpush.msra.mxu0 0.0
  %308 = vmatpush.msra.mxu0 0.0
  %309 = vmatpush.msra.mxu0 0.0
  %310 = vmatpush.msra.mxu0 0.0
  %311 = vmatpush.msra.mxu0 0.0
  %312 = vmatpush.msra.mxu0 %v280
  %313 = vmatpush.msra.mxu0 %v279
  %314 = vmatpush.msra.mxu0 %v278
  %315 = vmatpush.msra.mxu0 %v277
  %316 = vmatmul.f32.gmra.mxu0 %v298
  %v317 = vpop.f32.mrf.mxu0
  %v318 = vadd.f32 0.0, %v317
  %319 = vdwg.mxu0
  %v320 = vadd.f32 %v295, %v318
  %v321 = vld [vmem:[#allocation4] sm:$0x3]
  %322 = vmatpush.msra.mxu0 0.0
  %323 = vmatpush.msra.mxu0 0.0
  %324 = vmatpush.msra.mxu0 0.0
  %325 = vmatpush.msra.mxu0 0.0
  %326 = vmatpush.msra.mxu0 0.0
  %327 = vmatpush.msra.mxu0 0.0
  %328 = vmatpush.msra.mxu0 0.0
  %329 = vmatpush.msra.mxu0 0.0
  %330 = vmatpush.msra.mxu0 0.0
  %331 = vmatpush.msra.mxu0 0.0
  %332 = vmatpush.msra.mxu0 0.0
  %333 = vmatpush.msra.mxu0 0.0
  %334 = vmatpush.msra.mxu0 %v285
  %335 = vmatpush.msra.mxu0 %v284
  %336 = vmatpush.msra.mxu0 %v283
  %337 = vmatpush.msra.mxu0 %v282
  %338 = vmatmul.f32.gmra.mxu0 %v298
  %v339 = vpop.f32.mrf.mxu0
  %v340 = vadd.f32 0.0, %v339
  %341 = vdwg.mxu0
  %v342 = vadd.f32 %v321, %v340
  %343 = vmatpush.msra.mxu0 0.0
  %344 = vmatpush.msra.mxu0 0.0
  %345 = vmatpush.msra.mxu0 0.0
  %346 = vmatpush.msra.mxu0 0.0
  %347 = vmatpush.msra.mxu0 0.0
  %348 = vmatpush.msra.mxu0 0.0
  %349 = vmatpush.msra.mxu0 0.0
  %350 = vmatpush.msra.mxu0 0.0
  %351 = vmatpush.msra.mxu0 0.0
  %352 = vmatpush.msra.mxu0 0.0
  %353 = vmatpush.msra.mxu0 0.0
  %354 = vmatpush.msra.mxu0 0.0
  %355 = vmatpush.msra.mxu0 %v290
  %356 = vmatpush.msra.mxu0 %v289
  %357 = vmatpush.msra.mxu0 %v288
  %358 = vmatpush.msra.mxu0 %v287
  %359 = vmatmul.f32.gmra.mxu0 %v298
  %v360 = vpop.f32.mrf.mxu0
  %v361 = vadd.f32 %v293, %v360
  %362 = vdwg.mxu0
  %v363 = vxor.u32 %v320, 2147483648
  %v364 = vmul.f32 %v363, 1.442695
  %v365 = vpow.pop %v364
  %v366 = vadd.f32 %v365, 1.0
  %v367 = vrcp.pop %v366
  %v368 = vmul.f32 %v366, %v367
  %v369 = vsub.f32 1.0, %v368
  %v370 = vmul.f32 %v367, %v369
  %v371 = vadd.f32 %v367, %v370
  %vm372 = vweird.f32 %v366
  %vm373 = vweird.f32 %v367
  %vm374 = vmor %vm372, %vm373
  %v375 = vsel %vm374, %v367, %v371
  %v376 = vand.u32 2147483647, %v366
  %vm377 = vcmp.eq.f32.partialorder %v376, 8.507059e+37
  %v378 = vand.u32 %v366, 2147483648
  %v379 = vor.u32 1.1754944e-38, %v378
  %v380 = vsel %vm377, %v379, %v375
  %v381 = vmul.f32 1.0, %v380
  %v382 = vxor.u32 %v342, 2147483648
  %v383 = vmul.f32 %v382, 1.442695
  %v384 = vpow.pop %v383
  %v385 = vadd.f32 %v384, 1.0
  %v386 = vrcp.pop %v385
  %v387 = vmul.f32 %v385, %v386
  %v388 = vsub.f32 1.0, %v387
  %v389 = vmul.f32 %v386, %v388
  %v390 = vadd.f32 %v386, %v389
  %vm391 = vweird.f32 %v385
  %vm392 = vweird.f32 %v386
  %vm393 = vmor %vm391, %vm392
  %v394 = vsel %vm393, %v386, %v390
  %v395 = vand.u32 2147483647, %v385
  %vm396 = vcmp.eq.f32.partialorder %v395, 8.507059e+37
  %v397 = vand.u32 %v385, 2147483648
  %v398 = vor.u32 1.1754944e-38, %v397
  %v399 = vsel %vm396, %v398, %v394
  %v400 = vmul.f32 1.0, %v399
  %v401 = vld [vmem:[#allocation5] sm:$0x3]
  %v402 = vmul.f32 %v381, %v361
  %v403 = vadd.f32 %v401, %v402
  %v404 = vtanh.pop %v403
  %v405 = vsub.f32 1.0, %v400
  %v406 = vmul.f32 %v405, %v404
  %v407 = vmul.f32 %v400, 0.0
  %v408 = vadd.f32 %v406, %v407
  %409 = vst.msk [vmem:[#allocation2] sm:$0x3] %vm116, %v408
  %s410 = scalar_lea.vmem [#allocation3], 2
  %v411 = vld [vmem:[%s410] sm:$0x3]
  %v413 = vsel %vm296, %v408, 0
  %415 = vmatpush.msra.mxu0 0.0
  %416 = vmatpush.msra.mxu0 0.0
  %417 = vmatpush.msra.mxu0 0.0
  %418 = vmatpush.msra.mxu0 0.0
  %419 = vmatpush.msra.mxu0 0.0
  %420 = vmatpush.msra.mxu0 0.0
  %421 = vmatpush.msra.mxu0 0.0
  %422 = vmatpush.msra.mxu0 0.0
  %423 = vmatpush.msra.mxu0 0.0
  %424 = vmatpush.msra.mxu0 0.0
  %425 = vmatpush.msra.mxu0 0.0
  %426 = vmatpush.msra.mxu0 0.0
  %427 = vmatpush.msra.mxu0 %v280
  %428 = vmatpush.msra.mxu0 %v279
  %429 = vmatpush.msra.mxu0 %v278
  %430 = vmatpush.msra.mxu0 %v277
  %431 = vmatmul.f32.gmra.mxu0 %v413
  %v432 = vpop.f32.mrf.mxu0
  %v433 = vadd.f32 0.0, %v432
  %434 = vdwg.mxu0
  %v435 = vadd.f32 %v411, %v433
  %s436 = scalar_lea.vmem [#allocation4], 2
  %v437 = vld [vmem:[%s436] sm:$0x3]
  %438 = vmatpush.msra.mxu0 0.0
  %439 = vmatpush.msra.mxu0 0.0
  %440 = vmatpush.msra.mxu0 0.0
  %441 = vmatpush.msra.mxu0 0.0
  %442 = vmatpush.msra.mxu0 0.0
  %443 = vmatpush.msra.mxu0 0.0
  %444 = vmatpush.msra.mxu0 0.0
  %445 = vmatpush.msra.mxu0 0.0
  %446 = vmatpush.msra.mxu0 0.0
  %447 = vmatpush.msra.mxu0 0.0
  %448 = vmatpush.msra.mxu0 0.0
  %449 = vmatpush.msra.mxu0 0.0
  %450 = vmatpush.msra.mxu0 %v285
  %451 = vmatpush.msra.mxu0 %v284
  %452 = vmatpush.msra.mxu0 %v283
  %453 = vmatpush.msra.mxu0 %v282
  %454 = vmatmul.f32.gmra.mxu0 %v413
  %v455 = vpop.f32.mrf.mxu0
  %v456 = vadd.f32 0.0, %v455
  %457 = vdwg.mxu0
  %v458 = vadd.f32 %v437, %v456
  %459 = vmatpush.msra.mxu0 0.0
  %460 = vmatpush.msra.mxu0 0.0
  %461 = vmatpush.msra.mxu0 0.0
  %462 = vmatpush.msra.mxu0 0.0
  %463 = vmatpush.msra.mxu0 0.0
  %464 = vmatpush.msra.mxu0 0.0
  %465 = vmatpush.msra.mxu0 0.0
  %466 = vmatpush.msra.mxu0 0.0
  %467 = vmatpush.msra.mxu0 0.0
  %468 = vmatpush.msra.mxu0 0.0
  %469 = vmatpush.msra.mxu0 0.0
  %470 = vmatpush.msra.mxu0 0.0
  %471 = vmatpush.msra.mxu0 %v290
  %472 = vmatpush.msra.mxu0 %v289
  %473 = vmatpush.msra.mxu0 %v288
  %474 = vmatpush.msra.mxu0 %v287
  %475 = vmatmul.f32.gmra.mxu0 %v413
  %v476 = vpop.f32.mrf.mxu0
  %v477 = vadd.f32 %v293, %v476
  %478 = vdwg.mxu0
  %v479 = vxor.u32 %v435, 2147483648
  %v480 = vmul.f32 %v479, 1.442695
  %v481 = vpow.pop %v480
  %v482 = vadd.f32 %v481, 1.0
  %v483 = vrcp.pop %v482
  %v484 = vmul.f32 %v482, %v483
  %v485 = vsub.f32 1.0, %v484
  %v486 = vmul.f32 %v483, %v485
  %v487 = vadd.f32 %v483, %v486
  %vm488 = vweird.f32 %v482
  %vm489 = vweird.f32 %v483
  %vm490 = vmor %vm488, %vm489
  %v491 = vsel %vm490, %v483, %v487
  %v492 = vand.u32 2147483647, %v482
  %vm493 = vcmp.eq.f32.partialorder %v492, 8.507059e+37
  %v494 = vand.u32 %v482, 2147483648
  %v495 = vor.u32 1.1754944e-38, %v494
  %v496 = vsel %vm493, %v495, %v491
  %v497 = vmul.f32 1.0, %v496
  %v498 = vxor.u32 %v458, 2147483648
  %v499 = vmul.f32 %v498, 1.442695
  %v500 = vpow.pop %v499
  %v501 = vadd.f32 %v500, 1.0
  %v502 = vrcp.pop %v501
  %v503 = vmul.f32 %v501, %v502
  %v504 = vsub.f32 1.0, %v503
  %v505 = vmul.f32 %v502, %v504
  %v506 = vadd.f32 %v502, %v505
  %vm507 = vweird.f32 %v501
  %vm508 = vweird.f32 %v502
  %vm509 = vmor %vm507, %vm508
  %v510 = vsel %vm509, %v502, %v506
  %v511 = vand.u32 2147483647, %v501
  %vm512 = vcmp.eq.f32.partialorder %v511, 8.507059e+37
  %v513 = vand.u32 %v501, 2147483648
  %v514 = vor.u32 1.1754944e-38, %v513
  %v515 = vsel %vm512, %v514, %v510
  %v516 = vmul.f32 1.0, %v515
  %s517 = scalar_lea.vmem [#allocation5], 2
  %v518 = vld [vmem:[%s517] sm:$0x3]
  %v519 = vmul.f32 %v497, %v477
  %v520 = vadd.f32 %v518, %v519
  %v521 = vtanh.pop %v520
  %v522 = vsub.f32 1.0, %v516
  %v523 = vmul.f32 %v522, %v521
  %v524 = vmul.f32 %v516, %v408
  %v525 = vadd.f32 %v523, %v524
  %s526 = scalar_lea.vmem [#allocation2], 2
  %527 = vst.msk [vmem:[%s526] sm:$0x3] %vm116, %v525
  %s528 = scalar_lea.vmem [#allocation3], 4
  %v529 = vld [vmem:[%s528] sm:$0x3]
  %v531 = vsel %vm296, %v525, 0
  %533 = vmatpush.msra.mxu0 0.0
  %534 = vmatpush.msra.mxu0 0.0
  %535 = vmatpush.msra.mxu0 0.0
  %536 = vmatpush.msra.mxu0 0.0
  %537 = vmatpush.msra.mxu0 0.0
  %538 = vmatpush.msra.mxu0 0.0
  %539 = vmatpush.msra.mxu0 0.0
  %540 = vmatpush.msra.mxu0 0.0
  %541 = vmatpush.msra.mxu0 0.0
  %542 = vmatpush.msra.mxu0 0.0
  %543 = vmatpush.msra.mxu0 0.0
  %544 = vmatpush.msra.mxu0 0.0
  %545 = vmatpush.msra.mxu0 %v280
  %546 = vmatpush.msra.mxu0 %v279
  %547 = vmatpush.msra.mxu0 %v278
  %548 = vmatpush.msra.mxu0 %v277
  %549 = vmatmul.f32.gmra.mxu0 %v531
  %v550 = vpop.f32.mrf.mxu0
  %v551 = vadd.f32 0.0, %v550
  %552 = vdwg.mxu0
  %v553 = vadd.f32 %v529, %v551
  %s554 = scalar_lea.vmem [#allocation4], 4
  %v555 = vld [vmem:[%s554] sm:$0x3]
  %556 = vmatpush.msra.mxu0 0.0
  %557 = vmatpush.msra.mxu0 0.0
  %558 = vmatpush.msra.mxu0 0.0
  %559 = vmatpush.msra.mxu0 0.0
  %560 = vmatpush.msra.mxu0 0.0
  %561 = vmatpush.msra.mxu0 0.0
  %562 = vmatpush.msra.mxu0 0.0
  %563 = vmatpush.msra.mxu0 0.0
  %564 = vmatpush.msra.mxu0 0.0
  %565 = vmatpush.msra.mxu0 0.0
  %566 = vmatpush.msra.mxu0 0.0
  %567 = vmatpush.msra.mxu0 0.0
  %568 = vmatpush.msra.mxu0 %v285
  %569 = vmatpush.msra.mxu0 %v284
  %570 = vmatpush.msra.mxu0 %v283
  %571 = vmatpush.msra.mxu0 %v282
  %572 = vmatmul.f32.gmra.mxu0 %v531
  %v573 = vpop.f32.mrf.mxu0
  %v574 = vadd.f32 0.0, %v573
  %575 = vdwg.mxu0
  %v576 = vadd.f32 %v555, %v574
  %577 = vmatpush.msra.mxu0 0.0
  %578 = vmatpush.msra.mxu0 0.0
  %579 = vmatpush.msra.mxu0 0.0
  %580 = vmatpush.msra.mxu0 0.0
  %581 = vmatpush.msra.mxu0 0.0
  %582 = vmatpush.msra.mxu0 0.0
  %583 = vmatpush.msra.mxu0 0.0
  %584 = vmatpush.msra.mxu0 0.0
  %585 = vmatpush.msra.mxu0 0.0
  %586 = vmatpush.msra.mxu0 0.0
  %587 = vmatpush.msra.mxu0 0.0
  %588 = vmatpush.msra.mxu0 0.0
  %589 = vmatpush.msra.mxu0 %v290
  %590 = vmatpush.msra.mxu0 %v289
  %591 = vmatpush.msra.mxu0 %v288
  %592 = vmatpush.msra.mxu0 %v287
  %593 = vmatmul.f32.gmra.mxu0 %v531
  %v594 = vpop.f32.mrf.mxu0
  %v595 = vadd.f32 %v293, %v594
  %596 = vdwg.mxu0
  %v597 = vxor.u32 %v553, 2147483648
  %v598 = vmul.f32 %v597, 1.442695
  %v599 = vpow.pop %v598
  %v600 = vadd.f32 %v599, 1.0
  %v601 = vrcp.pop %v600
  %v602 = vmul.f32 %v600, %v601
  %v603 = vsub.f32 1.0, %v602
  %v604 = vmul.f32 %v601, %v603
  %v605 = vadd.f32 %v601, %v604
  %vm606 = vweird.f32 %v600
  %vm607 = vweird.f32 %v601
  %vm608 = vmor %vm606, %vm607
  %v609 = vsel %vm608, %v601, %v605
  %v610 = vand.u32 2147483647, %v600
  %vm611 = vcmp.eq.f32.partialorder %v610, 8.507059e+37
  %v612 = vand.u32 %v600, 2147483648
  %v613 = vor.u32 1.1754944e-38, %v612
  %v614 = vsel %vm611, %v613, %v609
  %v615 = vmul.f32 1.0, %v614
  %v616 = vxor.u32 %v576, 2147483648
  %v617 = vmul.f32 %v616, 1.442695
  %v618 = vpow.pop %v617
  %v619 = vadd.f32 %v618, 1.0
  %v620 = vrcp.pop %v619
  %v621 = vmul.f32 %v619, %v620
  %v622 = vsub.f32 1.0, %v621
  %v623 = vmul.f32 %v620, %v622
  %v624 = vadd.f32 %v620, %v623
  %vm625 = vweird.f32 %v619
  %vm626 = vweird.f32 %v620
  %vm627 = vmor %vm625, %vm626
  %v628 = vsel %vm627, %v620, %v624
  %v629 = vand.u32 2147483647, %v619
  %vm630 = vcmp.eq.f32.partialorder %v629, 8.507059e+37
  %v631 = vand.u32 %v619, 2147483648
  %v632 = vor.u32 1.1754944e-38, %v631
  %v633 = vsel %vm630, %v632, %v628
  %v634 = vmul.f32 1.0, %v633
  %s635 = scalar_lea.vmem [#allocation5], 4
  %v636 = vld [vmem:[%s635] sm:$0x3]
  %v637 = vmul.f32 %v615, %v595
  %v638 = vadd.f32 %v636, %v637
  %v639 = vtanh.pop %v638
  %v640 = vsub.f32 1.0, %v634
  %v641 = vmul.f32 %v640, %v639
  %v642 = vmul.f32 %v634, %v525
  %v643 = vadd.f32 %v641, %v642
  %s644 = scalar_lea.vmem [#allocation2], 4
  %645 = vst.msk [vmem:[%s644] sm:$0x3] %vm116, %v643
  %s646 = scalar_lea.vmem [#allocation3], 6
  %v647 = vld [vmem:[%s646] sm:$0x3]
  %v649 = vsel %vm296, %v643, 0
  %651 = vmatpush.msra.mxu0 0.0
  %652 = vmatpush.msra.mxu0 0.0
  %653 = vmatpush.msra.mxu0 0.0
  %654 = vmatpush.msra.mxu0 0.0
  %655 = vmatpush.msra.mxu0 0.0
  %656 = vmatpush.msra.mxu0 0.0
  %657 = vmatpush.msra.mxu0 0.0
  %658 = vmatpush.msra.mxu0 0.0
  %659 = vmatpush.msra.mxu0 0.0
  %660 = vmatpush.msra.mxu0 0.0
  %661 = vmatpush.msra.mxu0 0.0
  %662 = vmatpush.msra.mxu0 0.0
  %663 = vmatpush.msra.mxu0 %v280
  %664 = vmatpush.msra.mxu0 %v279
  %665 = vmatpush.msra.mxu0 %v278
  %666 = vmatpush.msra.mxu0 %v277
  %667 = vmatmul.f32.gmra.mxu0 %v649
  %v668 = vpop.f32.mrf.mxu0
  %v669 = vadd.f32 0.0, %v668
  %670 = vdwg.mxu0
  %v671 = vadd.f32 %v647, %v669
  %s672 = scalar_lea.vmem [#allocation4], 6
  %v673 = vld [vmem:[%s672] sm:$0x3]
  %674 = vmatpush.msra.mxu0 0.0
  %675 = vmatpush.msra.mxu0 0.0
  %676 = vmatpush.msra.mxu0 0.0
  %677 = vmatpush.msra.mxu0 0.0
  %678 = vmatpush.msra.mxu0 0.0
  %679 = vmatpush.msra.mxu0 0.0
  %680 = vmatpush.msra.mxu0 0.0
  %681 = vmatpush.msra.mxu0 0.0
  %682 = vmatpush.msra.mxu0 0.0
  %683 = vmatpush.msra.mxu0 0.0
  %684 = vmatpush.msra.mxu0 0.0
  %685 = vmatpush.msra.mxu0 0.0
  %686 = vmatpush.msra.mxu0 %v285
  %687 = vmatpush.msra.mxu0 %v284
  %688 = vmatpush.msra.mxu0 %v283
  %689 = vmatpush.msra.mxu0 %v282
  %690 = vmatmul.f32.gmra.mxu0 %v649
  %v691 = vpop.f32.mrf.mxu0
  %v692 = vadd.f32 0.0, %v691
  %693 = vdwg.mxu0
  %v694 = vadd.f32 %v673, %v692
  %695 = vmatpush.msra.mxu0 0.0
  %696 = vmatpush.msra.mxu0 0.0
  %697 = vmatpush.msra.mxu0 0.0
  %698 = vmatpush.msra.mxu0 0.0
  %699 = vmatpush.msra.mxu0 0.0
  %700 = vmatpush.msra.mxu0 0.0
  %701 = vmatpush.msra.mxu0 0.0
  %702 = vmatpush.msra.mxu0 0.0
  %703 = vmatpush.msra.mxu0 0.0
  %704 = vmatpush.msra.mxu0 0.0
  %705 = vmatpush.msra.mxu0 0.0
  %706 = vmatpush.msra.mxu0 0.0
  %707 = vmatpush.msra.mxu0 %v290
  %708 = vmatpush.msra.mxu0 %v289
  %709 = vmatpush.msra.mxu0 %v288
  %710 = vmatpush.msra.mxu0 %v287
  %711 = vmatmul.f32.gmra.mxu0 %v649
  %v712 = vpop.f32.mrf.mxu0
  %v713 = vadd.f32 %v293, %v712
  %714 = vdwg.mxu0
  %v715 = vxor.u32 %v671, 2147483648
  %v716 = vmul.f32 %v715, 1.442695
  %v717 = vpow.pop %v716
  %v718 = vadd.f32 %v717, 1.0
  %v719 = vrcp.pop %v718
  %v720 = vmul.f32 %v718, %v719
  %v721 = vsub.f32 1.0, %v720
  %v722 = vmul.f32 %v719, %v721
  %v723 = vadd.f32 %v719, %v722
  %vm724 = vweird.f32 %v718
  %vm725 = vweird.f32 %v719
  %vm726 = vmor %vm724, %vm725
  %v727 = vsel %vm726, %v719, %v723
  %v728 = vand.u32 2147483647, %v718
  %vm729 = vcmp.eq.f32.partialorder %v728, 8.507059e+37
  %v730 = vand.u32 %v718, 2147483648
  %v731 = vor.u32 1.1754944e-38, %v730
  %v732 = vsel %vm729, %v731, %v727
  %v733 = vmul.f32 1.0, %v732
  %v734 = vxor.u32 %v694, 2147483648
  %v735 = vmul.f32 %v734, 1.442695
  %v736 = vpow.pop %v735
  %v737 = vadd.f32 %v736, 1.0
  %v738 = vrcp.pop %v737
  %v739 = vmul.f32 %v737, %v738
  %v740 = vsub.f32 1.0, %v739
  %v741 = vmul.f32 %v738, %v740
  %v742 = vadd.f32 %v738, %v741
  %vm743 = vweird.f32 %v737
  %vm744 = vweird.f32 %v738
  %vm745 = vmor %vm743, %vm744
  %v746 = vsel %vm745, %v738, %v742
  %v747 = vand.u32 2147483647, %v737
  %vm748 = vcmp.eq.f32.partialorder %v747, 8.507059e+37
  %v749 = vand.u32 %v737, 2147483648
  %v750 = vor.u32 1.1754944e-38, %v749
  %v751 = vsel %vm748, %v750, %v746
  %v752 = vmul.f32 1.0, %v751
  %s753 = scalar_lea.vmem [#allocation5], 6
  %v754 = vld [vmem:[%s753] sm:$0x3]
  %v755 = vmul.f32 %v733, %v713
  %v756 = vadd.f32 %v754, %v755
  %v757 = vtanh.pop %v756
  %v758 = vsub.f32 1.0, %v752
  %v759 = vmul.f32 %v758, %v757
  %v760 = vmul.f32 %v752, %v643
  %v761 = vadd.f32 %v759, %v760
  %s762 = scalar_lea.vmem [#allocation2], 6
  %763 = vst.msk [vmem:[%s762] sm:$0x3] %vm116, %v761
  %s764 = scalar_lea.vmem [#allocation3], 8
  %v765 = vld [vmem:[%s764] sm:$0x3]
  %v767 = vsel %vm296, %v761, 0
  %769 = vmatpush.msra.mxu0 0.0
  %770 = vmatpush.msra.mxu0 0.0
  %771 = vmatpush.msra.mxu0 0.0
  %772 = vmatpush.msra.mxu0 0.0
  %773 = vmatpush.msra.mxu0 0.0
  %774 = vmatpush.msra.mxu0 0.0
  %775 = vmatpush.msra.mxu0 0.0
  %776 = vmatpush.msra.mxu0 0.0
  %777 = vmatpush.msra.mxu0 0.0
  %778 = vmatpush.msra.mxu0 0.0
  %779 = vmatpush.msra.mxu0 0.0
  %780 = vmatpush.msra.mxu0 0.0
  %781 = vmatpush.msra.mxu0 %v280
  %782 = vmatpush.msra.mxu0 %v279
  %783 = vmatpush.msra.mxu0 %v278
  %784 = vmatpush.msra.mxu0 %v277
  %785 = vmatmul.f32.gmra.mxu0 %v767
  %v786 = vpop.f32.mrf.mxu0
  %v787 = vadd.f32 0.0, %v786
  %788 = vdwg.mxu0
  %v789 = vadd.f32 %v765, %v787
  %s790 = scalar_lea.vmem [#allocation4], 8
  %v791 = vld [vmem:[%s790] sm:$0x3]
  %792 = vmatpush.msra.mxu0 0.0
  %793 = vmatpush.msra.mxu0 0.0
  %794 = vmatpush.msra.mxu0 0.0
  %795 = vmatpush.msra.mxu0 0.0
  %796 = vmatpush.msra.mxu0 0.0
  %797 = vmatpush.msra.mxu0 0.0
  %798 = vmatpush.msra.mxu0 0.0
  %799 = vmatpush.msra.mxu0 0.0
  %800 = vmatpush.msra.mxu0 0.0
  %801 = vmatpush.msra.mxu0 0.0
  %802 = vmatpush.msra.mxu0 0.0
  %803 = vmatpush.msra.mxu0 0.0
  %804 = vmatpush.msra.mxu0 %v285
  %805 = vmatpush.msra.mxu0 %v284
  %806 = vmatpush.msra.mxu0 %v283
  %807 = vmatpush.msra.mxu0 %v282
  %808 = vmatmul.f32.gmra.mxu0 %v767
  %v809 = vpop.f32.mrf.mxu0
  %v810 = vadd.f32 0.0, %v809
  %811 = vdwg.mxu0
  %v812 = vadd.f32 %v791, %v810
  %813 = vmatpush.msra.mxu0 0.0
  %814 = vmatpush.msra.mxu0 0.0
  %815 = vmatpush.msra.mxu0 0.0
  %816 = vmatpush.msra.mxu0 0.0
  %817 = vmatpush.msra.mxu0 0.0
  %818 = vmatpush.msra.mxu0 0.0
  %819 = vmatpush.msra.mxu0 0.0
  %820 = vmatpush.msra.mxu0 0.0
  %821 = vmatpush.msra.mxu0 0.0
  %822 = vmatpush.msra.mxu0 0.0
  %823 = vmatpush.msra.mxu0 0.0
  %824 = vmatpush.msra.mxu0 0.0
  %825 = vmatpush.msra.mxu0 %v290
  %826 = vmatpush.msra.mxu0 %v289
  %827 = vmatpush.msra.mxu0 %v288
  %828 = vmatpush.msra.mxu0 %v287
  %829 = vmatmul.f32.gmra.mxu0 %v767
  %v830 = vpop.f32.mrf.mxu0
  %v831 = vadd.f32 %v293, %v830
  %832 = vdwg.mxu0
  %v833 = vxor.u32 %v789, 2147483648
  %v834 = vmul.f32 %v833, 1.442695
  %v835 = vpow.pop %v834
  %v836 = vadd.f32 %v835, 1.0
  %v837 = vrcp.pop %v836
  %v838 = vmul.f32 %v836, %v837
  %v839 = vsub.f32 1.0, %v838
  %v840 = vmul.f32 %v837, %v839
  %v841 = vadd.f32 %v837, %v840
  %vm842 = vweird.f32 %v836
  %vm843 = vweird.f32 %v837
  %vm844 = vmor %vm842, %vm843
  %v845 = vsel %vm844, %v837, %v841
  %v846 = vand.u32 2147483647, %v836
  %vm847 = vcmp.eq.f32.partialorder %v846, 8.507059e+37
  %v848 = vand.u32 %v836, 2147483648
  %v849 = vor.u32 1.1754944e-38, %v848
  %v850 = vsel %vm847, %v849, %v845
  %v851 = vmul.f32 1.0, %v850
  %v852 = vxor.u32 %v812, 2147483648
  %v853 = vmul.f32 %v852, 1.442695
  %v854 = vpow.pop %v853
  %v855 = vadd.f32 %v854, 1.0
  %v856 = vrcp.pop %v855
  %v857 = vmul.f32 %v855, %v856
  %v858 = vsub.f32 1.0, %v857
  %v859 = vmul.f32 %v856, %v858
  %v860 = vadd.f32 %v856, %v859
  %vm861 = vweird.f32 %v855
  %vm862 = vweird.f32 %v856
  %vm863 = vmor %vm861, %vm862
  %v864 = vsel %vm863, %v856, %v860
  %v865 = vand.u32 2147483647, %v855
  %vm866 = vcmp.eq.f32.partialorder %v865, 8.507059e+37
  %v867 = vand.u32 %v855, 2147483648
  %v868 = vor.u32 1.1754944e-38, %v867
  %v869 = vsel %vm866, %v868, %v864
  %v870 = vmul.f32 1.0, %v869
  %s871 = scalar_lea.vmem [#allocation5], 8
  %v872 = vld [vmem:[%s871] sm:$0x3]
  %v873 = vmul.f32 %v851, %v831
  %v874 = vadd.f32 %v872, %v873
  %v875 = vtanh.pop %v874
  %v876 = vsub.f32 1.0, %v870
  %v877 = vmul.f32 %v876, %v875
  %v878 = vmul.f32 %v870, %v761
  %v879 = vadd.f32 %v877, %v878
  %s880 = scalar_lea.vmem [#allocation2], 8
  %881 = vst.msk [vmem:[%s880] sm:$0x3] %vm116, %v879
  %s882 = scalar_lea.vmem [#allocation3], 10
  %v883 = vld [vmem:[%s882] sm:$0x3]
  %v885 = vsel %vm296, %v879, 0
  %887 = vmatpush.msra.mxu0 0.0
  %888 = vmatpush.msra.mxu0 0.0
  %889 = vmatpush.msra.mxu0 0.0
  %890 = vmatpush.msra.mxu0 0.0
  %891 = vmatpush.msra.mxu0 0.0
  %892 = vmatpush.msra.mxu0 0.0
  %893 = vmatpush.msra.mxu0 0.0
  %894 = vmatpush.msra.mxu0 0.0
  %895 = vmatpush.msra.mxu0 0.0
  %896 = vmatpush.msra.mxu0 0.0
  %897 = vmatpush.msra.mxu0 0.0
  %898 = vmatpush.msra.mxu0 0.0
  %899 = vmatpush.msra.mxu0 %v280
  %900 = vmatpush.msra.mxu0 %v279
  %901 = vmatpush.msra.mxu0 %v278
  %902 = vmatpush.msra.mxu0 %v277
  %903 = vmatmul.f32.gmra.mxu0 %v885
  %v904 = vpop.f32.mrf.mxu0
  %v905 = vadd.f32 0.0, %v904
  %906 = vdwg.mxu0
  %v907 = vadd.f32 %v883, %v905
  %s908 = scalar_lea.vmem [#allocation4], 10
  %v909 = vld [vmem:[%s908] sm:$0x3]
  %910 = vmatpush.msra.mxu0 0.0
  %911 = vmatpush.msra.mxu0 0.0
  %912 = vmatpush.msra.mxu0 0.0
  %913 = vmatpush.msra.mxu0 0.0
  %914 = vmatpush.msra.mxu0 0.0
  %915 = vmatpush.msra.mxu0 0.0
  %916 = vmatpush.msra.mxu0 0.0
  %917 = vmatpush.msra.mxu0 0.0
  %918 = vmatpush.msra.mxu0 0.0
  %919 = vmatpush.msra.mxu0 0.0
  %920 = vmatpush.msra.mxu0 0.0
  %921 = vmatpush.msra.mxu0 0.0
  %922 = vmatpush.msra.mxu0 %v285
  %923 = vmatpush.msra.mxu0 %v284
  %924 = vmatpush.msra.mxu0 %v283
  %925 = vmatpush.msra.mxu0 %v282
  %926 = vmatmul.f32.gmra.mxu0 %v885
  %v927 = vpop.f32.mrf.mxu0
  %v928 = vadd.f32 0.0, %v927
  %929 = vdwg.mxu0
  %v930 = vadd.f32 %v909, %v928
  %931 = vmatpush.msra.mxu0 0.0
  %932 = vmatpush.msra.mxu0 0.0
  %933 = vmatpush.msra.mxu0 0.0
  %934 = vmatpush.msra.mxu0 0.0
  %935 = vmatpush.msra.mxu0 0.0
  %936 = vmatpush.msra.mxu0 0.0
  %937 = vmatpush.msra.mxu0 0.0
  %938 = vmatpush.msra.mxu0 0.0
  %939 = vmatpush.msra.mxu0 0.0
  %940 = vmatpush.msra.mxu0 0.0
  %941 = vmatpush.msra.mxu0 0.0
  %942 = vmatpush.msra.mxu0 0.0
  %943 = vmatpush.msra.mxu0 %v290
  %944 = vmatpush.msra.mxu0 %v289
  %945 = vmatpush.msra.mxu0 %v288
  %946 = vmatpush.msra.mxu0 %v287
  %947 = vmatmul.f32.gmra.mxu0 %v885
  %v948 = vpop.f32.mrf.mxu0
  %v949 = vadd.f32 %v293, %v948
  %950 = vdwg.mxu0
  %v951 = vxor.u32 %v907, 2147483648
  %v952 = vmul.f32 %v951, 1.442695
  %v953 = vpow.pop %v952
  %v954 = vadd.f32 %v953, 1.0
  %v955 = vrcp.pop %v954
  %v956 = vmul.f32 %v954, %v955
  %v957 = vsub.f32 1.0, %v956
  %v958 = vmul.f32 %v955, %v957
  %v959 = vadd.f32 %v955, %v958
  %vm960 = vweird.f32 %v954
  %vm961 = vweird.f32 %v955
  %vm962 = vmor %vm960, %vm961
  %v963 = vsel %vm962, %v955, %v959
  %v964 = vand.u32 2147483647, %v954
  %vm965 = vcmp.eq.f32.partialorder %v964, 8.507059e+37
  %v966 = vand.u32 %v954, 2147483648
  %v967 = vor.u32 1.1754944e-38, %v966
  %v968 = vsel %vm965, %v967, %v963
  %v969 = vmul.f32 1.0, %v968
  %v970 = vxor.u32 %v930, 2147483648
  %v971 = vmul.f32 %v970, 1.442695
  %v972 = vpow.pop %v971
  %v973 = vadd.f32 %v972, 1.0
  %v974 = vrcp.pop %v973
  %v975 = vmul.f32 %v973, %v974
  %v976 = vsub.f32 1.0, %v975
  %v977 = vmul.f32 %v974, %v976
  %v978 = vadd.f32 %v974, %v977
  %vm979 = vweird.f32 %v973
  %vm980 = vweird.f32 %v974
  %vm981 = vmor %vm979, %vm980
  %v982 = vsel %vm981, %v974, %v978
  %v983 = vand.u32 2147483647, %v973
  %vm984 = vcmp.eq.f32.partialorder %v983, 8.507059e+37
  %v985 = vand.u32 %v973, 2147483648
  %v986 = vor.u32 1.1754944e-38, %v985
  %v987 = vsel %vm984, %v986, %v982
  %v988 = vmul.f32 1.0, %v987
  %s989 = scalar_lea.vmem [#allocation5], 10
  %v990 = vld [vmem:[%s989] sm:$0x3]
  %v991 = vmul.f32 %v969, %v949
  %v992 = vadd.f32 %v990, %v991
  %v993 = vtanh.pop %v992
  %v994 = vsub.f32 1.0, %v988
  %v995 = vmul.f32 %v994, %v993
  %v996 = vmul.f32 %v988, %v879
  %v997 = vadd.f32 %v995, %v996
  %s998 = scalar_lea.vmem [#allocation2], 10
  %999 = vst.msk [vmem:[%s998] sm:$0x3] %vm116, %v997
  %s1000 = scalar_lea.vmem [#allocation3], 12
  %v1001 = vld [vmem:[%s1000] sm:$0x3]
  %v1003 = vsel %vm296, %v997, 0
  %1005 = vmatpush.msra.mxu0 0.0
  %1006 = vmatpush.msra.mxu0 0.0
  %1007 = vmatpush.msra.mxu0 0.0
  %1008 = vmatpush.msra.mxu0 0.0
  %1009 = vmatpush.msra.mxu0 0.0
  %1010 = vmatpush.msra.mxu0 0.0
  %1011 = vmatpush.msra.mxu0 0.0
  %1012 = vmatpush.msra.mxu0 0.0
  %1013 = vmatpush.msra.mxu0 0.0
  %1014 = vmatpush.msra.mxu0 0.0
  %1015 = vmatpush.msra.mxu0 0.0
  %1016 = vmatpush.msra.mxu0 0.0
  %1017 = vmatpush.msra.mxu0 %v280
  %1018 = vmatpush.msra.mxu0 %v279
  %1019 = vmatpush.msra.mxu0 %v278
  %1020 = vmatpush.msra.mxu0 %v277
  %1021 = vmatmul.f32.gmra.mxu0 %v1003
  %v1022 = vpop.f32.mrf.mxu0
  %v1023 = vadd.f32 0.0, %v1022
  %1024 = vdwg.mxu0
  %v1025 = vadd.f32 %v1001, %v1023
  %s1026 = scalar_lea.vmem [#allocation4], 12
  %v1027 = vld [vmem:[%s1026] sm:$0x3]
  %1028 = vmatpush.msra.mxu0 0.0
  %1029 = vmatpush.msra.mxu0 0.0
  %1030 = vmatpush.msra.mxu0 0.0
  %1031 = vmatpush.msra.mxu0 0.0
  %1032 = vmatpush.msra.mxu0 0.0
  %1033 = vmatpush.msra.mxu0 0.0
  %1034 = vmatpush.msra.mxu0 0.0
  %1035 = vmatpush.msra.mxu0 0.0
  %1036 = vmatpush.msra.mxu0 0.0
  %1037 = vmatpush.msra.mxu0 0.0
  %1038 = vmatpush.msra.mxu0 0.0
  %1039 = vmatpush.msra.mxu0 0.0
  %1040 = vmatpush.msra.mxu0 %v285
  %1041 = vmatpush.msra.mxu0 %v284
  %1042 = vmatpush.msra.mxu0 %v283
  %1043 = vmatpush.msra.mxu0 %v282
  %1044 = vmatmul.f32.gmra.mxu0 %v1003
  %v1045 = vpop.f32.mrf.mxu0
  %v1046 = vadd.f32 0.0, %v1045
  %1047 = vdwg.mxu0
  %v1048 = vadd.f32 %v1027, %v1046
  %1049 = vmatpush.msra.mxu0 0.0
  %1050 = vmatpush.msra.mxu0 0.0
  %1051 = vmatpush.msra.mxu0 0.0
  %1052 = vmatpush.msra.mxu0 0.0
  %1053 = vmatpush.msra.mxu0 0.0
  %1054 = vmatpush.msra.mxu0 0.0
  %1055 = vmatpush.msra.mxu0 0.0
  %1056 = vmatpush.msra.mxu0 0.0
  %1057 = vmatpush.msra.mxu0 0.0
  %1058 = vmatpush.msra.mxu0 0.0
  %1059 = vmatpush.msra.mxu0 0.0
  %1060 = vmatpush.msra.mxu0 0.0
  %1061 = vmatpush.msra.mxu0 %v290
  %1062 = vmatpush.msra.mxu0 %v289
  %1063 = vmatpush.msra.mxu0 %v288
  %1064 = vmatpush.msra.mxu0 %v287
  %1065 = vmatmul.f32.gmra.mxu0 %v1003
  %v1066 = vpop.f32.mrf.mxu0
  %v1067 = vadd.f32 %v293, %v1066
  %1068 = vdwg.mxu0
  %v1069 = vxor.u32 %v1025, 2147483648
  %v1070 = vmul.f32 %v1069, 1.442695
  %v1071 = vpow.pop %v1070
  %v1072 = vadd.f32 %v1071, 1.0
  %v1073 = vrcp.pop %v1072
  %v1074 = vmul.f32 %v1072, %v1073
  %v1075 = vsub.f32 1.0, %v1074
  %v1076 = vmul.f32 %v1073, %v1075
  %v1077 = vadd.f32 %v1073, %v1076
  %vm1078 = vweird.f32 %v1072
  %vm1079 = vweird.f32 %v1073
  %vm1080 = vmor %vm1078, %vm1079
  %v1081 = vsel %vm1080, %v1073, %v1077
  %v1082 = vand.u32 2147483647, %v1072
  %vm1083 = vcmp.eq.f32.partialorder %v1082, 8.507059e+37
  %v1084 = vand.u32 %v1072, 2147483648
  %v1085 = vor.u32 1.1754944e-38, %v1084
  %v1086 = vsel %vm1083, %v1085, %v1081
  %v1087 = vmul.f32 1.0, %v1086
  %v1088 = vxor.u32 %v1048, 2147483648
  %v1089 = vmul.f32 %v1088, 1.442695
  %v1090 = vpow.pop %v1089
  %v1091 = vadd.f32 %v1090, 1.0
  %v1092 = vrcp.pop %v1091
  %v1093 = vmul.f32 %v1091, %v1092
  %v1094 = vsub.f32 1.0, %v1093
  %v1095 = vmul.f32 %v1092, %v1094
  %v1096 = vadd.f32 %v1092, %v1095
  %vm1097 = vweird.f32 %v1091
  %vm1098 = vweird.f32 %v1092
  %vm1099 = vmor %vm1097, %vm1098
  %v1100 = vsel %vm1099, %v1092, %v1096
  %v1101 = vand.u32 2147483647, %v1091
  %vm1102 = vcmp.eq.f32.partialorder %v1101, 8.507059e+37
  %v1103 = vand.u32 %v1091, 2147483648
  %v1104 = vor.u32 1.1754944e-38, %v1103
  %v1105 = vsel %vm1102, %v1104, %v1100
  %v1106 = vmul.f32 1.0, %v1105
  %s1107 = scalar_lea.vmem [#allocation5], 12
  %v1108 = vld [vmem:[%s1107] sm:$0x3]
  %v1109 = vmul.f32 %v1087, %v1067
  %v1110 = vadd.f32 %v1108, %v1109
  %v1111 = vtanh.pop %v1110
  %v1112 = vsub.f32 1.0, %v1106
  %v1113 = vmul.f32 %v1112, %v1111
  %v1114 = vmul.f32 %v1106, %v997
  %v1115 = vadd.f32 %v1113, %v1114
  %s1116 = scalar_lea.vmem [#allocation2], 12
  %1117 = vst.msk [vmem:[%s1116] sm:$0x3] %vm116, %v1115
  %s1118 = scalar_lea.vmem [#allocation3], 14
  %v1119 = vld [vmem:[%s1118] sm:$0x3]
  %v1121 = vsel %vm296, %v1115, 0
  %1123 = vmatpush.msra.mxu0 0.0
  %1124 = vmatpush.msra.mxu0 0.0
  %1125 = vmatpush.msra.mxu0 0.0
  %1126 = vmatpush.msra.mxu0 0.0
  %1127 = vmatpush.msra.mxu0 0.0
  %1128 = vmatpush.msra.mxu0 0.0
  %1129 = vmatpush.msra.mxu0 0.0
  %1130 = vmatpush.msra.mxu0 0.0
  %1131 = vmatpush.msra.mxu0 0.0
  %1132 = vmatpush.msra.mxu0 0.0
  %1133 = vmatpush.msra.mxu0 0.0
  %1134 = vmatpush.msra.mxu0 0.0
  %1135 = vmatpush.msra.mxu0 %v280
  %1136 = vmatpush.msra.mxu0 %v279
  %1137 = vmatpush.msra.mxu0 %v278
  %1138 = vmatpush.msra.mxu0 %v277
  %1139 = vmatmul.f32.gmra.mxu0 %v1121
  %v1140 = vpop.f32.mrf.mxu0
  %v1141 = vadd.f32 0.0, %v1140
  %1142 = vdwg.mxu0
  %v1143 = vadd.f32 %v1119, %v1141
  %s1144 = scalar_lea.vmem [#allocation4], 14
  %v1145 = vld [vmem:[%s1144] sm:$0x3]
  %1146 = vmatpush.msra.mxu0 0.0
  %1147 = vmatpush.msra.mxu0 0.0
  %1148 = vmatpush.msra.mxu0 0.0
  %1149 = vmatpush.msra.mxu0 0.0
  %1150 = vmatpush.msra.mxu0 0.0
  %1151 = vmatpush.msra.mxu0 0.0
  %1152 = vmatpush.msra.mxu0 0.0
  %1153 = vmatpush.msra.mxu0 0.0
  %1154 = vmatpush.msra.mxu0 0.0
  %1155 = vmatpush.msra.mxu0 0.0
  %1156 = vmatpush.msra.mxu0 0.0
  %1157 = vmatpush.msra.mxu0 0.0
  %1158 = vmatpush.msra.mxu0 %v285
  %1159 = vmatpush.msra.mxu0 %v284
  %1160 = vmatpush.msra.mxu0 %v283
  %1161 = vmatpush.msra.mxu0 %v282
  %1162 = vmatmul.f32.gmra.mxu0 %v1121
  %v1163 = vpop.f32.mrf.mxu0
  %v1164 = vadd.f32 0.0, %v1163
  %1165 = vdwg.mxu0
  %v1166 = vadd.f32 %v1145, %v1164
  %1167 = vmatpush.msra.mxu0 0.0
  %1168 = vmatpush.msra.mxu0 0.0
  %1169 = vmatpush.msra.mxu0 0.0
  %1170 = vmatpush.msra.mxu0 0.0
  %1171 = vmatpush.msra.mxu0 0.0
  %1172 = vmatpush.msra.mxu0 0.0
  %1173 = vmatpush.msra.mxu0 0.0
  %1174 = vmatpush.msra.mxu0 0.0
  %1175 = vmatpush.msra.mxu0 0.0
  %1176 = vmatpush.msra.mxu0 0.0
  %1177 = vmatpush.msra.mxu0 0.0
  %1178 = vmatpush.msra.mxu0 0.0
  %1179 = vmatpush.msra.mxu0 %v290
  %1180 = vmatpush.msra.mxu0 %v289
  %1181 = vmatpush.msra.mxu0 %v288
  %1182 = vmatpush.msra.mxu0 %v287
  %1183 = vmatmul.f32.gmra.mxu0 %v1121
  %v1184 = vpop.f32.mrf.mxu0
  %v1185 = vadd.f32 %v293, %v1184
  %1186 = vdwg.mxu0
  %v1187 = vxor.u32 %v1143, 2147483648
  %v1188 = vmul.f32 %v1187, 1.442695
  %v1189 = vpow.pop %v1188
  %v1190 = vadd.f32 %v1189, 1.0
  %v1191 = vrcp.pop %v1190
  %v1192 = vmul.f32 %v1190, %v1191
  %v1193 = vsub.f32 1.0, %v1192
  %v1194 = vmul.f32 %v1191, %v1193
  %v1195 = vadd.f32 %v1191, %v1194
  %vm1196 = vweird.f32 %v1190
  %vm1197 = vweird.f32 %v1191
  %vm1198 = vmor %vm1196, %vm1197
  %v1199 = vsel %vm1198, %v1191, %v1195
  %v1200 = vand.u32 2147483647, %v1190
  %vm1201 = vcmp.eq.f32.partialorder %v1200, 8.507059e+37
  %v1202 = vand.u32 %v1190, 2147483648
  %v1203 = vor.u32 1.1754944e-38, %v1202
  %v1204 = vsel %vm1201, %v1203, %v1199
  %v1205 = vmul.f32 1.0, %v1204
  %v1206 = vxor.u32 %v1166, 2147483648
  %v1207 = vmul.f32 %v1206, 1.442695
  %v1208 = vpow.pop %v1207
  %v1209 = vadd.f32 %v1208, 1.0
  %v1210 = vrcp.pop %v1209
  %v1211 = vmul.f32 %v1209, %v1210
  %v1212 = vsub.f32 1.0, %v1211
  %v1213 = vmul.f32 %v1210, %v1212
  %v1214 = vadd.f32 %v1210, %v1213
  %vm1215 = vweird.f32 %v1209
  %vm1216 = vweird.f32 %v1210
  %vm1217 = vmor %vm1215, %vm1216
  %v1218 = vsel %vm1217, %v1210, %v1214
  %v1219 = vand.u32 2147483647, %v1209
  %vm1220 = vcmp.eq.f32.partialorder %v1219, 8.507059e+37
  %v1221 = vand.u32 %v1209, 2147483648
  %v1222 = vor.u32 1.1754944e-38, %v1221
  %v1223 = vsel %vm1220, %v1222, %v1218
  %v1224 = vmul.f32 1.0, %v1223
  %s1225 = scalar_lea.vmem [#allocation5], 14
  %v1226 = vld [vmem:[%s1225] sm:$0x3]
  %v1227 = vmul.f32 %v1205, %v1185
  %v1228 = vadd.f32 %v1226, %v1227
  %v1229 = vtanh.pop %v1228
  %v1230 = vsub.f32 1.0, %v1224
  %v1231 = vmul.f32 %v1230, %v1229
  %v1232 = vmul.f32 %v1224, %v1115
  %v1233 = vadd.f32 %v1231, %v1232
  %s1234 = scalar_lea.vmem [#allocation2], 14
  %1235 = vst.msk [vmem:[%s1234] sm:$0x3] %vm116, %v1233
  %v1236 = vld [vmem:[#allocation2] sm:$0x3]
  %v1237 = vld [vmem:[#allocation2 + $0x2] sm:$0x3]
  %v1238 = vld [vmem:[#allocation2 + $0x4] sm:$0x3]
  %v1239 = vld [vmem:[#allocation2 + $0x6] sm:$0x3]
  %v1240 = vld [vmem:[#allocation2 + $0x8] sm:$0x3]
  %v1241 = vld [vmem:[#allocation2 + $0xa] sm:$0x3]
  %v1242 = vld [vmem:[#allocation2 + $0xc] sm:$0x3]
  %v1243 = vld [vmem:[#allocation2 + $0xe] sm:$0x3]
  %v1244 = vld [vmem:[%s5] sm:$0xff]
  %v1245 = vld [vmem:[%s5 + $0x8] sm:$0xff]
  %v1246 = vld [vmem:[%s5 + $0x10] sm:$0xff]
  %v1247 = vld [vmem:[%s5 + $0x18] sm:$0xff]
  %v1248 = vld [vmem:[%s7] sm:$0x1]
  %v1250 = vperm.slane %v1248, 0
  %1260 = vst [vmem:[#allocation1] ss:$4 sm:$0xff] %v1236
  %s1261 = scalar_lea.vmem [#allocation1], 1
  %1262 = vst [vmem:[%s1261] ss:$4 sm:$0xff] %v1237
  %s1263 = scalar_lea.vmem [#allocation1], 2
  %1264 = vst [vmem:[%s1263] ss:$4 sm:$0xff] %v1238
  %s1265 = scalar_lea.vmem [#allocation1], 3
  %1266 = vst [vmem:[%s1265] ss:$4 sm:$0xff] %v1239
  %s1267 = scalar_lea.vmem [#allocation1], 32
  %1268 = vst [vmem:[%s1267] ss:$4 sm:$0xff] %v1240
  %s1269 = scalar_lea.vmem [#allocation1], 33
  %1270 = vst [vmem:[%s1269] ss:$4 sm:$0xff] %v1241
  %s1271 = scalar_lea.vmem [#allocation1], 34
  %1272 = vst [vmem:[%s1271] ss:$4 sm:$0xff] %v1242
  %s1273 = scalar_lea.vmem [#allocation1], 35
  %1274 = vst [vmem:[%s1273] ss:$4 sm:$0xff] %v1243
  %v1275 = vld.sshfl [vmem:[#allocation1] sm:$0xff pattern:$0x73625140]
  %v1276 = vld.sshfl [vmem:[#allocation1 + $0x20] sm:$0xff pattern:$0x73625140]
  %v1277 = vsel %vm296, %v1275, 0
  %v1279 = vsel %vm296, %v1276, 0
  %1281 = vmatpush.msra.mxu0 0.0
  %1282 = vmatpush.msra.mxu0 0.0
  %1283 = vmatpush.msra.mxu0 0.0
  %1284 = vmatpush.msra.mxu0 0.0
  %1285 = vmatpush.msra.mxu0 0.0
  %1286 = vmatpush.msra.mxu0 0.0
  %1287 = vmatpush.msra.mxu0 0.0
  %1288 = vmatpush.msra.mxu0 0.0
  %1289 = vmatpush.msra.mxu0 0.0
  %1290 = vmatpush.msra.mxu0 0.0
  %1291 = vmatpush.msra.mxu0 0.0
  %1292 = vmatpush.msra.mxu0 0.0
  %1293 = vmatpush.msra.mxu0 %v1247
  %1294 = vmatpush.msra.mxu0 %v1246
  %1295 = vmatpush.msra.mxu0 %v1245
  %1296 = vmatpush.msra.mxu0 %v1244
  %1297 = vmatmul.f32.gmra.mxu0 %v1277
  %v1298 = vpop.f32.mrf.mxu0
  %v1299 = vadd.f32 %v1250, %v1298
  %1300 = vmatmul.f32.gmra.mxu0 %v1279
  %v1301 = vpop.f32.mrf.mxu0
  %v1302 = vadd.f32 %v1250, %v1301
  %1303 = vdwg.mxu0
  %v1306 = vrot.slane %v1299, 2
  %v1307 = vrot.slane %v1299, 4
  %v1308 = vrot.slane %v1299, 6
  %v1309 = vrot.slane %v1302, 2
  %v1310 = vrot.slane %v1302, 4
  %v1311 = vrot.slane %v1302, 6
  %1318 = vst.msk [vmem:[#allocation3] sm:$0x3] %vm116, %v1299
  %1319 = vst.msk [vmem:[#allocation3 + $0x2] sm:$0x3] %vm116, %v1306
  %1320 = vst.msk [vmem:[#allocation3 + $0x4] sm:$0x3] %vm116, %v1307
  %1321 = vst.msk [vmem:[#allocation3 + $0x6] sm:$0x3] %vm116, %v1308
  %1322 = vst.msk [vmem:[#allocation3 + $0x8] sm:$0x3] %vm116, %v1302
  %1323 = vst.msk [vmem:[#allocation3 + $0xa] sm:$0x3] %vm116, %v1309
  %1324 = vst.msk [vmem:[#allocation3 + $0xc] sm:$0x3] %vm116, %v1310
  %1325 = vst.msk [vmem:[#allocation3 + $0xe] sm:$0x3] %vm116, %v1311
  %s1326 = scalar_lea.vmem %s5, 32
  %v1327 = vld [vmem:[%s1326] sm:$0xff]
  %v1328 = vld [vmem:[%s1326 + $0x8] sm:$0xff]
  %v1329 = vld [vmem:[%s1326 + $0x10] sm:$0xff]
  %v1330 = vld [vmem:[%s1326 + $0x18] sm:$0xff]
  %s1331 = scalar_lea.vmem %s7, 1
  %v1332 = vld [vmem:[%s1331] sm:$0x1]
  %v1334 = vperm.slane %v1332, 0
  %1336 = vst [vmem:[#allocation1] ss:$4 sm:$0xff] %v1236
  %s1337 = scalar_lea.vmem [#allocation1], 1
  %1338 = vst [vmem:[%s1337] ss:$4 sm:$0xff] %v1237
  %s1339 = scalar_lea.vmem [#allocation1], 2
  %1340 = vst [vmem:[%s1339] ss:$4 sm:$0xff] %v1238
  %s1341 = scalar_lea.vmem [#allocation1], 3
  %1342 = vst [vmem:[%s1341] ss:$4 sm:$0xff] %v1239
  %s1343 = scalar_lea.vmem [#allocation1], 32
  %1344 = vst [vmem:[%s1343] ss:$4 sm:$0xff] %v1240
  %s1345 = scalar_lea.vmem [#allocation1], 33
  %1346 = vst [vmem:[%s1345] ss:$4 sm:$0xff] %v1241
  %s1347 = scalar_lea.vmem [#allocation1], 34
  %1348 = vst [vmem:[%s1347] ss:$4 sm:$0xff] %v1242
  %s1349 = scalar_lea.vmem [#allocation1], 35
  %1350 = vst [vmem:[%s1349] ss:$4 sm:$0xff] %v1243
  %v1351 = vld.sshfl [vmem:[#allocation1] sm:$0xff pattern:$0x73625140]
  %v1352 = vld.sshfl [vmem:[#allocation1 + $0x20] sm:$0xff pattern:$0x73625140]
  %v1353 = vsel %vm296, %v1351, 0
  %v1355 = vsel %vm296, %v1352, 0
  %1357 = vmatpush.msra.mxu0 0.0
  %1358 = vmatpush.msra.mxu0 0.0
  %1359 = vmatpush.msra.mxu0 0.0
  %1360 = vmatpush.msra.mxu0 0.0
  %1361 = vmatpush.msra.mxu0 0.0
  %1362 = vmatpush.msra.mxu0 0.0
  %1363 = vmatpush.msra.mxu0 0.0
  %1364 = vmatpush.msra.mxu0 0.0
  %1365 = vmatpush.msra.mxu0 0.0
  %1366 = vmatpush.msra.mxu0 0.0
  %1367 = vmatpush.msra.mxu0 0.0
  %1368 = vmatpush.msra.mxu0 0.0
  %1369 = vmatpush.msra.mxu0 %v1330
  %1370 = vmatpush.msra.mxu0 %v1329
  %1371 = vmatpush.msra.mxu0 %v1328
  %1372 = vmatpush.msra.mxu0 %v1327
  %1373 = vmatmul.f32.gmra.mxu0 %v1353
  %v1374 = vpop.f32.mrf.mxu0
  %v1375 = vadd.f32 %v1334, %v1374
  %1376 = vmatmul.f32.gmra.mxu0 %v1355
  %v1377 = vpop.f32.mrf.mxu0
  %v1378 = vadd.f32 %v1334, %v1377
  %1379 = vdwg.mxu0
  %v1382 = vrot.slane %v1375, 2
  %v1383 = vrot.slane %v1375, 4
  %v1384 = vrot.slane %v1375, 6
  %v1385 = vrot.slane %v1378, 2
  %v1386 = vrot.slane %v1378, 4
  %v1387 = vrot.slane %v1378, 6
  %1394 = vst.msk [vmem:[#allocation4] sm:$0x3] %vm116, %v1375
  %1395 = vst.msk [vmem:[#allocation4 + $0x2] sm:$0x3] %vm116, %v1382
  %1396 = vst.msk [vmem:[#allocation4 + $0x4] sm:$0x3] %vm116, %v1383
  %1397 = vst.msk [vmem:[#allocation4 + $0x6] sm:$0x3] %vm116, %v1384
  %1398 = vst.msk [vmem:[#allocation4 + $0x8] sm:$0x3] %vm116, %v1378
  %1399 = vst.msk [vmem:[#allocation4 + $0xa] sm:$0x3] %vm116, %v1385
  %1400 = vst.msk [vmem:[#allocation4 + $0xc] sm:$0x3] %vm116, %v1386
  %1401 = vst.msk [vmem:[#allocation4 + $0xe] sm:$0x3] %vm116, %v1387
  %s1402 = scalar_lea.vmem %s5, 64
  %v1403 = vld [vmem:[%s1402] sm:$0xff]
  %v1404 = vld [vmem:[%s1402 + $0x8] sm:$0xff]
  %v1405 = vld [vmem:[%s1402 + $0x10] sm:$0xff]
  %v1406 = vld [vmem:[%s1402 + $0x18] sm:$0xff]
  %s1407 = scalar_lea.vmem %s7, 2
  %v1408 = vld [vmem:[%s1407] sm:$0x1]
  %v1410 = vperm.slane %v1408, 0
  %1412 = vst [vmem:[#allocation1] ss:$4 sm:$0xff] %v1236
  %s1413 = scalar_lea.vmem [#allocation1], 1
  %1414 = vst [vmem:[%s1413] ss:$4 sm:$0xff] %v1237
  %s1415 = scalar_lea.vmem [#allocation1], 2
  %1416 = vst [vmem:[%s1415] ss:$4 sm:$0xff] %v1238
  %s1417 = scalar_lea.vmem [#allocation1], 3
  %1418 = vst [vmem:[%s1417] ss:$4 sm:$0xff] %v1239
  %s1419 = scalar_lea.vmem [#allocation1], 32
  %1420 = vst [vmem:[%s1419] ss:$4 sm:$0xff] %v1240
  %s1421 = scalar_lea.vmem [#allocation1], 33
  %1422 = vst [vmem:[%s1421] ss:$4 sm:$0xff] %v1241
  %s1423 = scalar_lea.vmem [#allocation1], 34
  %1424 = vst [vmem:[%s1423] ss:$4 sm:$0xff] %v1242
  %s1425 = scalar_lea.vmem [#allocation1], 35
  %1426 = vst [vmem:[%s1425] ss:$4 sm:$0xff] %v1243
  %v1427 = vld.sshfl [vmem:[#allocation1] sm:$0xff pattern:$0x73625140]
  %v1428 = vld.sshfl [vmem:[#allocation1 + $0x20] sm:$0xff pattern:$0x73625140]
  %v1429 = vsel %vm296, %v1427, 0
  %v1431 = vsel %vm296, %v1428, 0
  %1433 = vmatpush.msra.mxu0 0.0
  %1434 = vmatpush.msra.mxu0 0.0
  %1435 = vmatpush.msra.mxu0 0.0
  %1436 = vmatpush.msra.mxu0 0.0
  %1437 = vmatpush.msra.mxu0 0.0
  %1438 = vmatpush.msra.mxu0 0.0
  %1439 = vmatpush.msra.mxu0 0.0
  %1440 = vmatpush.msra.mxu0 0.0
  %1441 = vmatpush.msra.mxu0 0.0
  %1442 = vmatpush.msra.mxu0 0.0
  %1443 = vmatpush.msra.mxu0 0.0
  %1444 = vmatpush.msra.mxu0 0.0
  %1445 = vmatpush.msra.mxu0 %v1406
  %1446 = vmatpush.msra.mxu0 %v1405
  %1447 = vmatpush.msra.mxu0 %v1404
  %1448 = vmatpush.msra.mxu0 %v1403
  %1449 = vmatmul.f32.gmra.mxu0 %v1429
  %v1450 = vpop.f32.mrf.mxu0
  %v1451 = vadd.f32 %v1410, %v1450
  %1452 = vmatmul.f32.gmra.mxu0 %v1431
  %v1453 = vpop.f32.mrf.mxu0
  %v1454 = vadd.f32 %v1410, %v1453
  %1455 = vdwg.mxu0
  %v1458 = vrot.slane %v1451, 2
  %v1459 = vrot.slane %v1451, 4
  %v1460 = vrot.slane %v1451, 6
  %v1461 = vrot.slane %v1454, 2
  %v1462 = vrot.slane %v1454, 4
  %v1463 = vrot.slane %v1454, 6
  %1470 = vst.msk [vmem:[#allocation5] sm:$0x3] %vm116, %v1451
  %1471 = vst.msk [vmem:[#allocation5 + $0x2] sm:$0x3] %vm116, %v1458
  %1472 = vst.msk [vmem:[#allocation5 + $0x4] sm:$0x3] %vm116, %v1459
  %1473 = vst.msk [vmem:[#allocation5 + $0x6] sm:$0x3] %vm116, %v1460
  %1474 = vst.msk [vmem:[#allocation5 + $0x8] sm:$0x3] %vm116, %v1454
  %1475 = vst.msk [vmem:[#allocation5 + $0xa] sm:$0x3] %vm116, %v1461
  %1476 = vst.msk [vmem:[#allocation5 + $0xc] sm:$0x3] %vm116, %v1462
  %1477 = vst.msk [vmem:[#allocation5 + $0xe] sm:$0x3] %vm116, %v1463
  %v1478 = vld [vmem:[%s6] sm:$0xff]
  %v1479 = vld [vmem:[%s6 + $0x8] sm:$0xff]
  %v1480 = vld [vmem:[%s6 + $0x10] sm:$0xff]
  %v1481 = vld [vmem:[%s6 + $0x18] sm:$0xff]
  %s1482 = scalar_lea.vmem %s6, 32
  %v1483 = vld [vmem:[%s1482] sm:$0xff]
  %v1484 = vld [vmem:[%s1482 + $0x8] sm:$0xff]
  %v1485 = vld [vmem:[%s1482 + $0x10] sm:$0xff]
  %v1486 = vld [vmem:[%s1482 + $0x18] sm:$0xff]
  %s1487 = scalar_lea.vmem %s6, 64
  %v1488 = vld [vmem:[%s1487] sm:$0xff]
  %v1489 = vld [vmem:[%s1487 + $0x8] sm:$0xff]
  %v1490 = vld [vmem:[%s1487 + $0x10] sm:$0xff]
  %v1491 = vld [vmem:[%s1487 + $0x18] sm:$0xff]
  %v1492 = vld [vmem:[%s8] sm:$0x1]
  %v1494 = vperm.slane %v1492, 0
  %v1496 = vld [vmem:[#allocation3] sm:$0x3]
  %1497 = vmatpush.msra.mxu0 0.0
  %1498 = vmatpush.msra.mxu0 0.0
  %1499 = vmatpush.msra.mxu0 0.0
  %1500 = vmatpush.msra.mxu0 0.0
  %1501 = vmatpush.msra.mxu0 0.0
  %1502 = vmatpush.msra.mxu0 0.0
  %1503 = vmatpush.msra.mxu0 0.0
  %1504 = vmatpush.msra.mxu0 0.0
  %1505 = vmatpush.msra.mxu0 0.0
  %1506 = vmatpush.msra.mxu0 0.0
  %1507 = vmatpush.msra.mxu0 0.0
  %1508 = vmatpush.msra.mxu0 0.0
  %1509 = vmatpush.msra.mxu0 %v1481
  %1510 = vmatpush.msra.mxu0 %v1480
  %1511 = vmatpush.msra.mxu0 %v1479
  %1512 = vmatpush.msra.mxu0 %v1478
  %1513 = vmatmul.f32.gmra.mxu0 %v298
  %v1514 = vpop.f32.mrf.mxu0
  %v1515 = vadd.f32 0.0, %v1514
  %1516 = vdwg.mxu0
  %v1517 = vadd.f32 %v1496, %v1515
  %v1518 = vld [vmem:[#allocation4] sm:$0x3]
  %1519 = vmatpush.msra.mxu0 0.0
  %1520 = vmatpush.msra.mxu0 0.0
  %1521 = vmatpush.msra.mxu0 0.0
  %1522 = vmatpush.msra.mxu0 0.0
  %1523 = vmatpush.msra.mxu0 0.0
  %1524 = vmatpush.msra.mxu0 0.0
  %1525 = vmatpush.msra.mxu0 0.0
  %1526 = vmatpush.msra.mxu0 0.0
  %1527 = vmatpush.msra.mxu0 0.0
  %1528 = vmatpush.msra.mxu0 0.0
  %1529 = vmatpush.msra.mxu0 0.0
  %1530 = vmatpush.msra.mxu0 0.0
  %1531 = vmatpush.msra.mxu0 %v1486
  %1532 = vmatpush.msra.mxu0 %v1485
  %1533 = vmatpush.msra.mxu0 %v1484
  %1534 = vmatpush.msra.mxu0 %v1483
  %1535 = vmatmul.f32.gmra.mxu0 %v298
  %v1536 = vpop.f32.mrf.mxu0
  %v1537 = vadd.f32 0.0, %v1536
  %1538 = vdwg.mxu0
  %v1539 = vadd.f32 %v1518, %v1537
  %1540 = vmatpush.msra.mxu0 0.0
  %1541 = vmatpush.msra.mxu0 0.0
  %1542 = vmatpush.msra.mxu0 0.0
  %1543 = vmatpush.msra.mxu0 0.0
  %1544 = vmatpush.msra.mxu0 0.0
  %1545 = vmatpush.msra.mxu0 0.0
  %1546 = vmatpush.msra.mxu0 0.0
  %1547 = vmatpush.msra.mxu0 0.0
  %1548 = vmatpush.msra.mxu0 0.0
  %1549 = vmatpush.msra.mxu0 0.0
  %1550 = vmatpush.msra.mxu0 0.0
  %1551 = vmatpush.msra.mxu0 0.0
  %1552 = vmatpush.msra.mxu0 %v1491
  %1553 = vmatpush.msra.mxu0 %v1490
  %1554 = vmatpush.msra.mxu0 %v1489
  %1555 = vmatpush.msra.mxu0 %v1488
  %1556 = vmatmul.f32.gmra.mxu0 %v298
  %v1557 = vpop.f32.mrf.mxu0
  %v1558 = vadd.f32 %v1494, %v1557
  %1559 = vdwg.mxu0
  %v1560 = vxor.u32 %v1517, 2147483648
  %v1561 = vmul.f32 %v1560, 1.442695
  %v1562 = vpow.pop %v1561
  %v1563 = vadd.f32 %v1562, 1.0
  %v1564 = vrcp.pop %v1563
  %v1565 = vmul.f32 %v1563, %v1564
  %v1566 = vsub.f32 1.0, %v1565
  %v1567 = vmul.f32 %v1564, %v1566
  %v1568 = vadd.f32 %v1564, %v1567
  %vm1569 = vweird.f32 %v1563
  %vm1570 = vweird.f32 %v1564
  %vm1571 = vmor %vm1569, %vm1570
  %v1572 = vsel %vm1571, %v1564, %v1568
  %v1573 = vand.u32 2147483647, %v1563
  %vm1574 = vcmp.eq.f32.partialorder %v1573, 8.507059e+37
  %v1575 = vand.u32 %v1563, 2147483648
  %v1576 = vor.u32 1.1754944e-38, %v1575
  %v1577 = vsel %vm1574, %v1576, %v1572
  %v1578 = vmul.f32 1.0, %v1577
  %v1579 = vxor.u32 %v1539, 2147483648
  %v1580 = vmul.f32 %v1579, 1.442695
  %v1581 = vpow.pop %v1580
  %v1582 = vadd.f32 %v1581, 1.0
  %v1583 = vrcp.pop %v1582
  %v1584 = vmul.f32 %v1582, %v1583
  %v1585 = vsub.f32 1.0, %v1584
  %v1586 = vmul.f32 %v1583, %v1585
  %v1587 = vadd.f32 %v1583, %v1586
  %vm1588 = vweird.f32 %v1582
  %vm1589 = vweird.f32 %v1583
  %vm1590 = vmor %vm1588, %vm1589
  %v1591 = vsel %vm1590, %v1583, %v1587
  %v1592 = vand.u32 2147483647, %v1582
  %vm1593 = vcmp.eq.f32.partialorder %v1592, 8.507059e+37
  %v1594 = vand.u32 %v1582, 2147483648
  %v1595 = vor.u32 1.1754944e-38, %v1594
  %v1596 = vsel %vm1593, %v1595, %v1591
  %v1597 = vmul.f32 1.0, %v1596
  %v1598 = vld [vmem:[#allocation5] sm:$0x3]
  %v1599 = vmul.f32 %v1578, %v1558
  %v1600 = vadd.f32 %v1598, %v1599
  %v1601 = vtanh.pop %v1600
  %v1602 = vsub.f32 1.0, %v1597
  %v1603 = vmul.f32 %v1602, %v1601
  %v1604 = vmul.f32 %v1597, 0.0
  %v1605 = vadd.f32 %v1603, %v1604
  %1606 = vst.msk [vmem:[%s9] sm:$0x3] %vm116, %v1605
  %v1607 = vld [vmem:[%s410] sm:$0x3]
  %v1609 = vsel %vm296, %v1605, 0
  %1611 = vmatpush.msra.mxu0 0.0
  %1612 = vmatpush.msra.mxu0 0.0
  %1613 = vmatpush.msra.mxu0 0.0
  %1614 = vmatpush.msra.mxu0 0.0
  %1615 = vmatpush.msra.mxu0 0.0
  %1616 = vmatpush.msra.mxu0 0.0
  %1617 = vmatpush.msra.mxu0 0.0
  %1618 = vmatpush.msra.mxu0 0.0
  %1619 = vmatpush.msra.mxu0 0.0
  %1620 = vmatpush.msra.mxu0 0.0
  %1621 = vmatpush.msra.mxu0 0.0
  %1622 = vmatpush.msra.mxu0 0.0
  %1623 = vmatpush.msra.mxu0 %v1481
  %1624 = vmatpush.msra.mxu0 %v1480
  %1625 = vmatpush.msra.mxu0 %v1479
  %1626 = vmatpush.msra.mxu0 %v1478
  %1627 = vmatmul.f32.gmra.mxu0 %v1609
  %v1628 = vpop.f32.mrf.mxu0
  %v1629 = vadd.f32 0.0, %v1628
  %1630 = vdwg.mxu0
  %v1631 = vadd.f32 %v1607, %v1629
  %v1632 = vld [vmem:[%s436] sm:$0x3]
  %1633 = vmatpush.msra.mxu0 0.0
  %1634 = vmatpush.msra.mxu0 0.0
  %1635 = vmatpush.msra.mxu0 0.0
  %1636 = vmatpush.msra.mxu0 0.0
  %1637 = vmatpush.msra.mxu0 0.0
  %1638 = vmatpush.msra.mxu0 0.0
  %1639 = vmatpush.msra.mxu0 0.0
  %1640 = vmatpush.msra.mxu0 0.0
  %1641 = vmatpush.msra.mxu0 0.0
  %1642 = vmatpush.msra.mxu0 0.0
  %1643 = vmatpush.msra.mxu0 0.0
  %1644 = vmatpush.msra.mxu0 0.0
  %1645 = vmatpush.msra.mxu0 %v1486
  %1646 = vmatpush.msra.mxu0 %v1485
  %1647 = vmatpush.msra.mxu0 %v1484
  %1648 = vmatpush.msra.mxu0 %v1483
  %1649 = vmatmul.f32.gmra.mxu0 %v1609
  %v1650 = vpop.f32.mrf.mxu0
  %v1651 = vadd.f32 0.0, %v1650
  %1652 = vdwg.mxu0
  %v1653 = vadd.f32 %v1632, %v1651
  %1654 = vmatpush.msra.mxu0 0.0
  %1655 = vmatpush.msra.mxu0 0.0
  %1656 = vmatpush.msra.mxu0 0.0
  %1657 = vmatpush.msra.mxu0 0.0
  %1658 = vmatpush.msra.mxu0 0.0
  %1659 = vmatpush.msra.mxu0 0.0
  %1660 = vmatpush.msra.mxu0 0.0
  %1661 = vmatpush.msra.mxu0 0.0
  %1662 = vmatpush.msra.mxu0 0.0
  %1663 = vmatpush.msra.mxu0 0.0
  %1664 = vmatpush.msra.mxu0 0.0
  %1665 = vmatpush.msra.mxu0 0.0
  %1666 = vmatpush.msra.mxu0 %v1491
  %1667 = vmatpush.msra.mxu0 %v1490
  %1668 = vmatpush.msra.mxu0 %v1489
  %1669 = vmatpush.msra.mxu0 %v1488
  %1670 = vmatmul.f32.gmra.mxu0 %v1609
  %v1671 = vpop.f32.mrf.mxu0
  %v1672 = vadd.f32 %v1494, %v1671
  %1673 = vdwg.mxu0
  %v1674 = vxor.u32 %v1631, 2147483648
  %v1675 = vmul.f32 %v1674, 1.442695
  %v1676 = vpow.pop %v1675
  %v1677 = vadd.f32 %v1676, 1.0
  %v1678 = vrcp.pop %v1677
  %v1679 = vmul.f32 %v1677, %v1678
  %v1680 = vsub.f32 1.0, %v1679
  %v1681 = vmul.f32 %v1678, %v1680
  %v1682 = vadd.f32 %v1678, %v1681
  %vm1683 = vweird.f32 %v1677
  %vm1684 = vweird.f32 %v1678
  %vm1685 = vmor %vm1683, %vm1684
  %v1686 = vsel %vm1685, %v1678, %v1682
  %v1687 = vand.u32 2147483647, %v1677
  %vm1688 = vcmp.eq.f32.partialorder %v1687, 8.507059e+37
  %v1689 = vand.u32 %v1677, 2147483648
  %v1690 = vor.u32 1.1754944e-38, %v1689
  %v1691 = vsel %vm1688, %v1690, %v1686
  %v1692 = vmul.f32 1.0, %v1691
  %v1693 = vxor.u32 %v1653, 2147483648
  %v1694 = vmul.f32 %v1693, 1.442695
  %v1695 = vpow.pop %v1694
  %v1696 = vadd.f32 %v1695, 1.0
  %v1697 = vrcp.pop %v1696
  %v1698 = vmul.f32 %v1696, %v1697
  %v1699 = vsub.f32 1.0, %v1698
  %v1700 = vmul.f32 %v1697, %v1699
  %v1701 = vadd.f32 %v1697, %v1700
  %vm1702 = vweird.f32 %v1696
  %vm1703 = vweird.f32 %v1697
  %vm1704 = vmor %vm1702, %vm1703
  %v1705 = vsel %vm1704, %v1697, %v1701
  %v1706 = vand.u32 2147483647, %v1696
  %vm1707 = vcmp.eq.f32.partialorder %v1706, 8.507059e+37
  %v1708 = vand.u32 %v1696, 2147483648
  %v1709 = vor.u32 1.1754944e-38, %v1708
  %v1710 = vsel %vm1707, %v1709, %v1705
  %v1711 = vmul.f32 1.0, %v1710
  %v1712 = vld [vmem:[%s517] sm:$0x3]
  %v1713 = vmul.f32 %v1692, %v1672
  %v1714 = vadd.f32 %v1712, %v1713
  %v1715 = vtanh.pop %v1714
  %v1716 = vsub.f32 1.0, %v1711
  %v1717 = vmul.f32 %v1716, %v1715
  %v1718 = vmul.f32 %v1711, %v1605
  %v1719 = vadd.f32 %v1717, %v1718
  %s1720 = scalar_lea.vmem %s9, 2
  %1721 = vst.msk [vmem:[%s1720] sm:$0x3] %vm116, %v1719
  %v1722 = vld [vmem:[%s528] sm:$0x3]
  %v1724 = vsel %vm296, %v1719, 0
  %1726 = vmatpush.msra.mxu0 0.0
  %1727 = vmatpush.msra.mxu0 0.0
  %1728 = vmatpush.msra.mxu0 0.0
  %1729 = vmatpush.msra.mxu0 0.0
  %1730 = vmatpush.msra.mxu0 0.0
  %1731 = vmatpush.msra.mxu0 0.0
  %1732 = vmatpush.msra.mxu0 0.0
  %1733 = vmatpush.msra.mxu0 0.0
  %1734 = vmatpush.msra.mxu0 0.0
  %1735 = vmatpush.msra.mxu0 0.0
  %1736 = vmatpush.msra.mxu0 0.0
  %1737 = vmatpush.msra.mxu0 0.0
  %1738 = vmatpush.msra.mxu0 %v1481
  %1739 = vmatpush.msra.mxu0 %v1480
  %1740 = vmatpush.msra.mxu0 %v1479
  %1741 = vmatpush.msra.mxu0 %v1478
  %1742 = vmatmul.f32.gmra.mxu0 %v1724
  %v1743 = vpop.f32.mrf.mxu0
  %v1744 = vadd.f32 0.0, %v1743
  %1745 = vdwg.mxu0
  %v1746 = vadd.f32 %v1722, %v1744
  %v1747 = vld [vmem:[%s554] sm:$0x3]
  %1748 = vmatpush.msra.mxu0 0.0
  %1749 = vmatpush.msra.mxu0 0.0
  %1750 = vmatpush.msra.mxu0 0.0
  %1751 = vmatpush.msra.mxu0 0.0
  %1752 = vmatpush.msra.mxu0 0.0
  %1753 = vmatpush.msra.mxu0 0.0
  %1754 = vmatpush.msra.mxu0 0.0
  %1755 = vmatpush.msra.mxu0 0.0
  %1756 = vmatpush.msra.mxu0 0.0
  %1757 = vmatpush.msra.mxu0 0.0
  %1758 = vmatpush.msra.mxu0 0.0
  %1759 = vmatpush.msra.mxu0 0.0
  %1760 = vmatpush.msra.mxu0 %v1486
  %1761 = vmatpush.msra.mxu0 %v1485
  %1762 = vmatpush.msra.mxu0 %v1484
  %1763 = vmatpush.msra.mxu0 %v1483
  %1764 = vmatmul.f32.gmra.mxu0 %v1724
  %v1765 = vpop.f32.mrf.mxu0
  %v1766 = vadd.f32 0.0, %v1765
  %1767 = vdwg.mxu0
  %v1768 = vadd.f32 %v1747, %v1766
  %1769 = vmatpush.msra.mxu0 0.0
  %1770 = vmatpush.msra.mxu0 0.0
  %1771 = vmatpush.msra.mxu0 0.0
  %1772 = vmatpush.msra.mxu0 0.0
  %1773 = vmatpush.msra.mxu0 0.0
  %1774 = vmatpush.msra.mxu0 0.0
  %1775 = vmatpush.msra.mxu0 0.0
  %1776 = vmatpush.msra.mxu0 0.0
  %1777 = vmatpush.msra.mxu0 0.0
  %1778 = vmatpush.msra.mxu0 0.0
  %1779 = vmatpush.msra.mxu0 0.0
  %1780 = vmatpush.msra.mxu0 0.0
  %1781 = vmatpush.msra.mxu0 %v1491
  %1782 = vmatpush.msra.mxu0 %v1490
  %1783 = vmatpush.msra.mxu0 %v1489
  %1784 = vmatpush.msra.mxu0 %v1488
  %1785 = vmatmul.f32.gmra.mxu0 %v1724
  %v1786 = vpop.f32.mrf.mxu0
  %v1787 = vadd.f32 %v1494, %v1786
  %1788 = vdwg.mxu0
  %v1789 = vxor.u32 %v1746, 2147483648
  %v1790 = vmul.f32 %v1789, 1.442695
  %v1791 = vpow.pop %v1790
  %v1792 = vadd.f32 %v1791, 1.0
  %v1793 = vrcp.pop %v1792
  %v1794 = vmul.f32 %v1792, %v1793
  %v1795 = vsub.f32 1.0, %v1794
  %v1796 = vmul.f32 %v1793, %v1795
  %v1797 = vadd.f32 %v1793, %v1796
  %vm1798 = vweird.f32 %v1792
  %vm1799 = vweird.f32 %v1793
  %vm1800 = vmor %vm1798, %vm1799
  %v1801 = vsel %vm1800, %v1793, %v1797
  %v1802 = vand.u32 2147483647, %v1792
  %vm1803 = vcmp.eq.f32.partialorder %v1802, 8.507059e+37
  %v1804 = vand.u32 %v1792, 2147483648
  %v1805 = vor.u32 1.1754944e-38, %v1804
  %v1806 = vsel %vm1803, %v1805, %v1801
  %v1807 = vmul.f32 1.0, %v1806
  %v1808 = vxor.u32 %v1768, 2147483648
  %v1809 = vmul.f32 %v1808, 1.442695
  %v1810 = vpow.pop %v1809
  %v1811 = vadd.f32 %v1810, 1.0
  %v1812 = vrcp.pop %v1811
  %v1813 = vmul.f32 %v1811, %v1812
  %v1814 = vsub.f32 1.0, %v1813
  %v1815 = vmul.f32 %v1812, %v1814
  %v1816 = vadd.f32 %v1812, %v1815
  %vm1817 = vweird.f32 %v1811
  %vm1818 = vweird.f32 %v1812
  %vm1819 = vmor %vm1817, %vm1818
  %v1820 = vsel %vm1819, %v1812, %v1816
  %v1821 = vand.u32 2147483647, %v1811
  %vm1822 = vcmp.eq.f32.partialorder %v1821, 8.507059e+37
  %v1823 = vand.u32 %v1811, 2147483648
  %v1824 = vor.u32 1.1754944e-38, %v1823
  %v1825 = vsel %vm1822, %v1824, %v1820
  %v1826 = vmul.f32 1.0, %v1825
  %v1827 = vld [vmem:[%s635] sm:$0x3]
  %v1828 = vmul.f32 %v1807, %v1787
  %v1829 = vadd.f32 %v1827, %v1828
  %v1830 = vtanh.pop %v1829
  %v1831 = vsub.f32 1.0, %v1826
  %v1832 = vmul.f32 %v1831, %v1830
  %v1833 = vmul.f32 %v1826, %v1719
  %v1834 = vadd.f32 %v1832, %v1833
  %s1835 = scalar_lea.vmem %s9, 4
  %1836 = vst.msk [vmem:[%s1835] sm:$0x3] %vm116, %v1834
  %v1837 = vld [vmem:[%s646] sm:$0x3]
  %v1839 = vsel %vm296, %v1834, 0
  %1841 = vmatpush.msra.mxu0 0.0
  %1842 = vmatpush.msra.mxu0 0.0
  %1843 = vmatpush.msra.mxu0 0.0
  %1844 = vmatpush.msra.mxu0 0.0
  %1845 = vmatpush.msra.mxu0 0.0
  %1846 = vmatpush.msra.mxu0 0.0
  %1847 = vmatpush.msra.mxu0 0.0
  %1848 = vmatpush.msra.mxu0 0.0
  %1849 = vmatpush.msra.mxu0 0.0
  %1850 = vmatpush.msra.mxu0 0.0
  %1851 = vmatpush.msra.mxu0 0.0
  %1852 = vmatpush.msra.mxu0 0.0
  %1853 = vmatpush.msra.mxu0 %v1481
  %1854 = vmatpush.msra.mxu0 %v1480
  %1855 = vmatpush.msra.mxu0 %v1479
  %1856 = vmatpush.msra.mxu0 %v1478
  %1857 = vmatmul.f32.gmra.mxu0 %v1839
  %v1858 = vpop.f32.mrf.mxu0
  %v1859 = vadd.f32 0.0, %v1858
  %1860 = vdwg.mxu0
  %v1861 = vadd.f32 %v1837, %v1859
  %v1862 = vld [vmem:[%s672] sm:$0x3]
  %1863 = vmatpush.msra.mxu0 0.0
  %1864 = vmatpush.msra.mxu0 0.0
  %1865 = vmatpush.msra.mxu0 0.0
  %1866 = vmatpush.msra.mxu0 0.0
  %1867 = vmatpush.msra.mxu0 0.0
  %1868 = vmatpush.msra.mxu0 0.0
  %1869 = vmatpush.msra.mxu0 0.0
  %1870 = vmatpush.msra.mxu0 0.0
  %1871 = vmatpush.msra.mxu0 0.0
  %1872 = vmatpush.msra.mxu0 0.0
  %1873 = vmatpush.msra.mxu0 0.0
  %1874 = vmatpush.msra.mxu0 0.0
  %1875 = vmatpush.msra.mxu0 %v1486
  %1876 = vmatpush.msra.mxu0 %v1485
  %1877 = vmatpush.msra.mxu0 %v1484
  %1878 = vmatpush.msra.mxu0 %v1483
  %1879 = vmatmul.f32.gmra.mxu0 %v1839
  %v1880 = vpop.f32.mrf.mxu0
  %v1881 = vadd.f32 0.0, %v1880
  %1882 = vdwg.mxu0
  %v1883 = vadd.f32 %v1862, %v1881
  %1884 = vmatpush.msra.mxu0 0.0
  %1885 = vmatpush.msra.mxu0 0.0
  %1886 = vmatpush.msra.mxu0 0.0
  %1887 = vmatpush.msra.mxu0 0.0
  %1888 = vmatpush.msra.mxu0 0.0
  %1889 = vmatpush.msra.mxu0 0.0
  %1890 = vmatpush.msra.mxu0 0.0
  %1891 = vmatpush.msra.mxu0 0.0
  %1892 = vmatpush.msra.mxu0 0.0
  %1893 = vmatpush.msra.mxu0 0.0
  %1894 = vmatpush.msra.mxu0 0.0
  %1895 = vmatpush.msra.mxu0 0.0
  %1896 = vmatpush.msra.mxu0 %v1491
  %1897 = vmatpush.msra.mxu0 %v1490
  %1898 = vmatpush.msra.mxu0 %v1489
  %1899 = vmatpush.msra.mxu0 %v1488
  %1900 = vmatmul.f32.gmra.mxu0 %v1839
  %v1901 = vpop.f32.mrf.mxu0
  %v1902 = vadd.f32 %v1494, %v1901
  %1903 = vdwg.mxu0
  %v1904 = vxor.u32 %v1861, 2147483648
  %v1905 = vmul.f32 %v1904, 1.442695
  %v1906 = vpow.pop %v1905
  %v1907 = vadd.f32 %v1906, 1.0
  %v1908 = vrcp.pop %v1907
  %v1909 = vmul.f32 %v1907, %v1908
  %v1910 = vsub.f32 1.0, %v1909
  %v1911 = vmul.f32 %v1908, %v1910
  %v1912 = vadd.f32 %v1908, %v1911
  %vm1913 = vweird.f32 %v1907
  %vm1914 = vweird.f32 %v1908
  %vm1915 = vmor %vm1913, %vm1914
  %v1916 = vsel %vm1915, %v1908, %v1912
  %v1917 = vand.u32 2147483647, %v1907
  %vm1918 = vcmp.eq.f32.partialorder %v1917, 8.507059e+37
  %v1919 = vand.u32 %v1907, 2147483648
  %v1920 = vor.u32 1.1754944e-38, %v1919
  %v1921 = vsel %vm1918, %v1920, %v1916
  %v1922 = vmul.f32 1.0, %v1921
  %v1923 = vxor.u32 %v1883, 2147483648
  %v1924 = vmul.f32 %v1923, 1.442695
  %v1925 = vpow.pop %v1924
  %v1926 = vadd.f32 %v1925, 1.0
  %v1927 = vrcp.pop %v1926
  %v1928 = vmul.f32 %v1926, %v1927
  %v1929 = vsub.f32 1.0, %v1928
  %v1930 = vmul.f32 %v1927, %v1929
  %v1931 = vadd.f32 %v1927, %v1930
  %vm1932 = vweird.f32 %v1926
  %vm1933 = vweird.f32 %v1927
  %vm1934 = vmor %vm1932, %vm1933
  %v1935 = vsel %vm1934, %v1927, %v1931
  %v1936 = vand.u32 2147483647, %v1926
  %vm1937 = vcmp.eq.f32.partialorder %v1936, 8.507059e+37
  %v1938 = vand.u32 %v1926, 2147483648
  %v1939 = vor.u32 1.1754944e-38, %v1938
  %v1940 = vsel %vm1937, %v1939, %v1935
  %v1941 = vmul.f32 1.0, %v1940
  %v1942 = vld [vmem:[%s753] sm:$0x3]
  %v1943 = vmul.f32 %v1922, %v1902
  %v1944 = vadd.f32 %v1942, %v1943
  %v1945 = vtanh.pop %v1944
  %v1946 = vsub.f32 1.0, %v1941
  %v1947 = vmul.f32 %v1946, %v1945
  %v1948 = vmul.f32 %v1941, %v1834
  %v1949 = vadd.f32 %v1947, %v1948
  %s1950 = scalar_lea.vmem %s9, 6
  %1951 = vst.msk [vmem:[%s1950] sm:$0x3] %vm116, %v1949
  %v1952 = vld [vmem:[%s764] sm:$0x3]
  %v1954 = vsel %vm296, %v1949, 0
  %1956 = vmatpush.msra.mxu0 0.0
  %1957 = vmatpush.msra.mxu0 0.0
  %1958 = vmatpush.msra.mxu0 0.0
  %1959 = vmatpush.msra.mxu0 0.0
  %1960 = vmatpush.msra.mxu0 0.0
  %1961 = vmatpush.msra.mxu0 0.0
  %1962 = vmatpush.msra.mxu0 0.0
  %1963 = vmatpush.msra.mxu0 0.0
  %1964 = vmatpush.msra.mxu0 0.0
  %1965 = vmatpush.msra.mxu0 0.0
  %1966 = vmatpush.msra.mxu0 0.0
  %1967 = vmatpush.msra.mxu0 0.0
  %1968 = vmatpush.msra.mxu0 %v1481
  %1969 = vmatpush.msra.mxu0 %v1480
  %1970 = vmatpush.msra.mxu0 %v1479
  %1971 = vmatpush.msra.mxu0 %v1478
  %1972 = vmatmul.f32.gmra.mxu0 %v1954
  %v1973 = vpop.f32.mrf.mxu0
  %v1974 = vadd.f32 0.0, %v1973
  %1975 = vdwg.mxu0
  %v1976 = vadd.f32 %v1952, %v1974
  %v1977 = vld [vmem:[%s790] sm:$0x3]
  %1978 = vmatpush.msra.mxu0 0.0
  %1979 = vmatpush.msra.mxu0 0.0
  %1980 = vmatpush.msra.mxu0 0.0
  %1981 = vmatpush.msra.mxu0 0.0
  %1982 = vmatpush.msra.mxu0 0.0
  %1983 = vmatpush.msra.mxu0 0.0
  %1984 = vmatpush.msra.mxu0 0.0
  %1985 = vmatpush.msra.mxu0 0.0
  %1986 = vmatpush.msra.mxu0 0.0
  %1987 = vmatpush.msra.mxu0 0.0
  %1988 = vmatpush.msra.mxu0 0.0
  %1989 = vmatpush.msra.mxu0 0.0
  %1990 = vmatpush.msra.mxu0 %v1486
  %1991 = vmatpush.msra.mxu0 %v1485
  %1992 = vmatpush.msra.mxu0 %v1484
  %1993 = vmatpush.msra.mxu0 %v1483
  %1994 = vmatmul.f32.gmra.mxu0 %v1954
  %v1995 = vpop.f32.mrf.mxu0
  %v1996 = vadd.f32 0.0, %v1995
  %1997 = vdwg.mxu0
  %v1998 = vadd.f32 %v1977, %v1996
  %1999 = vmatpush.msra.mxu0 0.0
  %2000 = vmatpush.msra.mxu0 0.0
  %2001 = vmatpush.msra.mxu0 0.0
  %2002 = vmatpush.msra.mxu0 0.0
  %2003 = vmatpush.msra.mxu0 0.0
  %2004 = vmatpush.msra.mxu0 0.0
  %2005 = vmatpush.msra.mxu0 0.0
  %2006 = vmatpush.msra.mxu0 0.0
  %2007 = vmatpush.msra.mxu0 0.0
  %2008 = vmatpush.msra.mxu0 0.0
  %2009 = vmatpush.msra.mxu0 0.0
  %2010 = vmatpush.msra.mxu0 0.0
  %2011 = vmatpush.msra.mxu0 %v1491
  %2012 = vmatpush.msra.mxu0 %v1490
  %2013 = vmatpush.msra.mxu0 %v1489
  %2014 = vmatpush.msra.mxu0 %v1488
  %2015 = vmatmul.f32.gmra.mxu0 %v1954
  %v2016 = vpop.f32.mrf.mxu0
  %v2017 = vadd.f32 %v1494, %v2016
  %2018 = vdwg.mxu0
  %v2019 = vxor.u32 %v1976, 2147483648
  %v2020 = vmul.f32 %v2019, 1.442695
  %v2021 = vpow.pop %v2020
  %v2022 = vadd.f32 %v2021, 1.0
  %v2023 = vrcp.pop %v2022
  %v2024 = vmul.f32 %v2022, %v2023
  %v2025 = vsub.f32 1.0, %v2024
  %v2026 = vmul.f32 %v2023, %v2025
  %v2027 = vadd.f32 %v2023, %v2026
  %vm2028 = vweird.f32 %v2022
  %vm2029 = vweird.f32 %v2023
  %vm2030 = vmor %vm2028, %vm2029
  %v2031 = vsel %vm2030, %v2023, %v2027
  %v2032 = vand.u32 2147483647, %v2022
  %vm2033 = vcmp.eq.f32.partialorder %v2032, 8.507059e+37
  %v2034 = vand.u32 %v2022, 2147483648
  %v2035 = vor.u32 1.1754944e-38, %v2034
  %v2036 = vsel %vm2033, %v2035, %v2031
  %v2037 = vmul.f32 1.0, %v2036
  %v2038 = vxor.u32 %v1998, 2147483648
  %v2039 = vmul.f32 %v2038, 1.442695
  %v2040 = vpow.pop %v2039
  %v2041 = vadd.f32 %v2040, 1.0
  %v2042 = vrcp.pop %v2041
  %v2043 = vmul.f32 %v2041, %v2042
  %v2044 = vsub.f32 1.0, %v2043
  %v2045 = vmul.f32 %v2042, %v2044
  %v2046 = vadd.f32 %v2042, %v2045
  %vm2047 = vweird.f32 %v2041
  %vm2048 = vweird.f32 %v2042
  %vm2049 = vmor %vm2047, %vm2048
  %v2050 = vsel %vm2049, %v2042, %v2046
  %v2051 = vand.u32 2147483647, %v2041
  %vm2052 = vcmp.eq.f32.partialorder %v2051, 8.507059e+37
  %v2053 = vand.u32 %v2041, 2147483648
  %v2054 = vor.u32 1.1754944e-38, %v2053
  %v2055 = vsel %vm2052, %v2054, %v2050
  %v2056 = vmul.f32 1.0, %v2055
  %v2057 = vld [vmem:[%s871] sm:$0x3]
  %v2058 = vmul.f32 %v2037, %v2017
  %v2059 = vadd.f32 %v2057, %v2058
  %v2060 = vtanh.pop %v2059
  %v2061 = vsub.f32 1.0, %v2056
  %v2062 = vmul.f32 %v2061, %v2060
  %v2063 = vmul.f32 %v2056, %v1949
  %v2064 = vadd.f32 %v2062, %v2063
  %s2065 = scalar_lea.vmem %s9, 8
  %2066 = vst.msk [vmem:[%s2065] sm:$0x3] %vm116, %v2064
  %v2067 = vld [vmem:[%s882] sm:$0x3]
  %v2069 = vsel %vm296, %v2064, 0
  %2071 = vmatpush.msra.mxu0 0.0
  %2072 = vmatpush.msra.mxu0 0.0
  %2073 = vmatpush.msra.mxu0 0.0
  %2074 = vmatpush.msra.mxu0 0.0
  %2075 = vmatpush.msra.mxu0 0.0
  %2076 = vmatpush.msra.mxu0 0.0
  %2077 = vmatpush.msra.mxu0 0.0
  %2078 = vmatpush.msra.mxu0 0.0
  %2079 = vmatpush.msra.mxu0 0.0
  %2080 = vmatpush.msra.mxu0 0.0
  %2081 = vmatpush.msra.mxu0 0.0
  %2082 = vmatpush.msra.mxu0 0.0
  %2083 = vmatpush.msra.mxu0 %v1481
  %2084 = vmatpush.msra.mxu0 %v1480
  %2085 = vmatpush.msra.mxu0 %v1479
  %2086 = vmatpush.msra.mxu0 %v1478
  %2087 = vmatmul.f32.gmra.mxu0 %v2069
  %v2088 = vpop.f32.mrf.mxu0
  %v2089 = vadd.f32 0.0, %v2088
  %2090 = vdwg.mxu0
  %v2091 = vadd.f32 %v2067, %v2089
  %v2092 = vld [vmem:[%s908] sm:$0x3]
  %2093 = vmatpush.msra.mxu0 0.0
  %2094 = vmatpush.msra.mxu0 0.0
  %2095 = vmatpush.msra.mxu0 0.0
  %2096 = vmatpush.msra.mxu0 0.0
  %2097 = vmatpush.msra.mxu0 0.0
  %2098 = vmatpush.msra.mxu0 0.0
  %2099 = vmatpush.msra.mxu0 0.0
  %2100 = vmatpush.msra.mxu0 0.0
  %2101 = vmatpush.msra.mxu0 0.0
  %2102 = vmatpush.msra.mxu0 0.0
  %2103 = vmatpush.msra.mxu0 0.0
  %2104 = vmatpush.msra.mxu0 0.0
  %2105 = vmatpush.msra.mxu0 %v1486
  %2106 = vmatpush.msra.mxu0 %v1485
  %2107 = vmatpush.msra.mxu0 %v1484
  %2108 = vmatpush.msra.mxu0 %v1483
  %2109 = vmatmul.f32.gmra.mxu0 %v2069
  %v2110 = vpop.f32.mrf.mxu0
  %v2111 = vadd.f32 0.0, %v2110
  %2112 = vdwg.mxu0
  %v2113 = vadd.f32 %v2092, %v2111
  %2114 = vmatpush.msra.mxu0 0.0
  %2115 = vmatpush.msra.mxu0 0.0
  %2116 = vmatpush.msra.mxu0 0.0
  %2117 = vmatpush.msra.mxu0 0.0
  %2118 = vmatpush.msra.mxu0 0.0
  %2119 = vmatpush.msra.mxu0 0.0
  %2120 = vmatpush.msra.mxu0 0.0
  %2121 = vmatpush.msra.mxu0 0.0
  %2122 = vmatpush.msra.mxu0 0.0
  %2123 = vmatpush.msra.mxu0 0.0
  %2124 = vmatpush.msra.mxu0 0.0
  %2125 = vmatpush.msra.mxu0 0.0
  %2126 = vmatpush.msra.mxu0 %v1491
  %2127 = vmatpush.msra.mxu0 %v1490
  %2128 = vmatpush.msra.mxu0 %v1489
  %2129 = vmatpush.msra.mxu0 %v1488
  %2130 = vmatmul.f32.gmra.mxu0 %v2069
  %v2131 = vpop.f32.mrf.mxu0
  %v2132 = vadd.f32 %v1494, %v2131
  %2133 = vdwg.mxu0
  %v2134 = vxor.u32 %v2091, 2147483648
  %v2135 = vmul.f32 %v2134, 1.442695
  %v2136 = vpow.pop %v2135
  %v2137 = vadd.f32 %v2136, 1.0
  %v2138 = vrcp.pop %v2137
  %v2139 = vmul.f32 %v2137, %v2138
  %v2140 = vsub.f32 1.0, %v2139
  %v2141 = vmul.f32 %v2138, %v2140
  %v2142 = vadd.f32 %v2138, %v2141
  %vm2143 = vweird.f32 %v2137
  %vm2144 = vweird.f32 %v2138
  %vm2145 = vmor %vm2143, %vm2144
  %v2146 = vsel %vm2145, %v2138, %v2142
  %v2147 = vand.u32 2147483647, %v2137
  %vm2148 = vcmp.eq.f32.partialorder %v2147, 8.507059e+37
  %v2149 = vand.u32 %v2137, 2147483648
  %v2150 = vor.u32 1.1754944e-38, %v2149
  %v2151 = vsel %vm2148, %v2150, %v2146
  %v2152 = vmul.f32 1.0, %v2151
  %v2153 = vxor.u32 %v2113, 2147483648
  %v2154 = vmul.f32 %v2153, 1.442695
  %v2155 = vpow.pop %v2154
  %v2156 = vadd.f32 %v2155, 1.0
  %v2157 = vrcp.pop %v2156
  %v2158 = vmul.f32 %v2156, %v2157
  %v2159 = vsub.f32 1.0, %v2158
  %v2160 = vmul.f32 %v2157, %v2159
  %v2161 = vadd.f32 %v2157, %v2160
  %vm2162 = vweird.f32 %v2156
  %vm2163 = vweird.f32 %v2157
  %vm2164 = vmor %vm2162, %vm2163
  %v2165 = vsel %vm2164, %v2157, %v2161
  %v2166 = vand.u32 2147483647, %v2156
  %vm2167 = vcmp.eq.f32.partialorder %v2166, 8.507059e+37
  %v2168 = vand.u32 %v2156, 2147483648
  %v2169 = vor.u32 1.1754944e-38, %v2168
  %v2170 = vsel %vm2167, %v2169, %v2165
  %v2171 = vmul.f32 1.0, %v2170
  %v2172 = vld [vmem:[%s989] sm:$0x3]
  %v2173 = vmul.f32 %v2152, %v2132
  %v2174 = vadd.f32 %v2172, %v2173
  %v2175 = vtanh.pop %v2174
  %v2176 = vsub.f32 1.0, %v2171
  %v2177 = vmul.f32 %v2176, %v2175
  %v2178 = vmul.f32 %v2171, %v2064
  %v2179 = vadd.f32 %v2177, %v2178
  %s2180 = scalar_lea.vmem %s9, 10
  %2181 = vst.msk [vmem:[%s2180] sm:$0x3] %vm116, %v2179
  %v2182 = vld [vmem:[%s1000] sm:$0x3]
  %v2184 = vsel %vm296, %v2179, 0
  %2186 = vmatpush.msra.mxu0 0.0
  %2187 = vmatpush.msra.mxu0 0.0
  %2188 = vmatpush.msra.mxu0 0.0
  %2189 = vmatpush.msra.mxu0 0.0
  %2190 = vmatpush.msra.mxu0 0.0
  %2191 = vmatpush.msra.mxu0 0.0
  %2192 = vmatpush.msra.mxu0 0.0
  %2193 = vmatpush.msra.mxu0 0.0
  %2194 = vmatpush.msra.mxu0 0.0
  %2195 = vmatpush.msra.mxu0 0.0
  %2196 = vmatpush.msra.mxu0 0.0
  %2197 = vmatpush.msra.mxu0 0.0
  %2198 = vmatpush.msra.mxu0 %v1481
  %2199 = vmatpush.msra.mxu0 %v1480
  %2200 = vmatpush.msra.mxu0 %v1479
  %2201 = vmatpush.msra.mxu0 %v1478
  %2202 = vmatmul.f32.gmra.mxu0 %v2184
  %v2203 = vpop.f32.mrf.mxu0
  %v2204 = vadd.f32 0.0, %v2203
  %2205 = vdwg.mxu0
  %v2206 = vadd.f32 %v2182, %v2204
  %v2207 = vld [vmem:[%s1026] sm:$0x3]
  %2208 = vmatpush.msra.mxu0 0.0
  %2209 = vmatpush.msra.mxu0 0.0
  %2210 = vmatpush.msra.mxu0 0.0
  %2211 = vmatpush.msra.mxu0 0.0
  %2212 = vmatpush.msra.mxu0 0.0
  %2213 = vmatpush.msra.mxu0 0.0
  %2214 = vmatpush.msra.mxu0 0.0
  %2215 = vmatpush.msra.mxu0 0.0
  %2216 = vmatpush.msra.mxu0 0.0
  %2217 = vmatpush.msra.mxu0 0.0
  %2218 = vmatpush.msra.mxu0 0.0
  %2219 = vmatpush.msra.mxu0 0.0
  %2220 = vmatpush.msra.mxu0 %v1486
  %2221 = vmatpush.msra.mxu0 %v1485
  %2222 = vmatpush.msra.mxu0 %v1484
  %2223 = vmatpush.msra.mxu0 %v1483
  %2224 = vmatmul.f32.gmra.mxu0 %v2184
  %v2225 = vpop.f32.mrf.mxu0
  %v2226 = vadd.f32 0.0, %v2225
  %2227 = vdwg.mxu0
  %v2228 = vadd.f32 %v2207, %v2226
  %2229 = vmatpush.msra.mxu0 0.0
  %2230 = vmatpush.msra.mxu0 0.0
  %2231 = vmatpush.msra.mxu0 0.0
  %2232 = vmatpush.msra.mxu0 0.0
  %2233 = vmatpush.msra.mxu0 0.0
  %2234 = vmatpush.msra.mxu0 0.0
  %2235 = vmatpush.msra.mxu0 0.0
  %2236 = vmatpush.msra.mxu0 0.0
  %2237 = vmatpush.msra.mxu0 0.0
  %2238 = vmatpush.msra.mxu0 0.0
  %2239 = vmatpush.msra.mxu0 0.0
  %2240 = vmatpush.msra.mxu0 0.0
  %2241 = vmatpush.msra.mxu0 %v1491
  %2242 = vmatpush.msra.mxu0 %v1490
  %2243 = vmatpush.msra.mxu0 %v1489
  %2244 = vmatpush.msra.mxu0 %v1488
  %2245 = vmatmul.f32.gmra.mxu0 %v2184
  %v2246 = vpop.f32.mrf.mxu0
  %v2247 = vadd.f32 %v1494, %v2246
  %2248 = vdwg.mxu0
  %v2249 = vxor.u32 %v2206, 2147483648
  %v2250 = vmul.f32 %v2249, 1.442695
  %v2251 = vpow.pop %v2250
  %v2252 = vadd.f32 %v2251, 1.0
  %v2253 = vrcp.pop %v2252
  %v2254 = vmul.f32 %v2252, %v2253
  %v2255 = vsub.f32 1.0, %v2254
  %v2256 = vmul.f32 %v2253, %v2255
  %v2257 = vadd.f32 %v2253, %v2256
  %vm2258 = vweird.f32 %v2252
  %vm2259 = vweird.f32 %v2253
  %vm2260 = vmor %vm2258, %vm2259
  %v2261 = vsel %vm2260, %v2253, %v2257
  %v2262 = vand.u32 2147483647, %v2252
  %vm2263 = vcmp.eq.f32.partialorder %v2262, 8.507059e+37
  %v2264 = vand.u32 %v2252, 2147483648
  %v2265 = vor.u32 1.1754944e-38, %v2264
  %v2266 = vsel %vm2263, %v2265, %v2261
  %v2267 = vmul.f32 1.0, %v2266
  %v2268 = vxor.u32 %v2228, 2147483648
  %v2269 = vmul.f32 %v2268, 1.442695
  %v2270 = vpow.pop %v2269
  %v2271 = vadd.f32 %v2270, 1.0
  %v2272 = vrcp.pop %v2271
  %v2273 = vmul.f32 %v2271, %v2272
  %v2274 = vsub.f32 1.0, %v2273
  %v2275 = vmul.f32 %v2272, %v2274
  %v2276 = vadd.f32 %v2272, %v2275
  %vm2277 = vweird.f32 %v2271
  %vm2278 = vweird.f32 %v2272
  %vm2279 = vmor %vm2277, %vm2278
  %v2280 = vsel %vm2279, %v2272, %v2276
  %v2281 = vand.u32 2147483647, %v2271
  %vm2282 = vcmp.eq.f32.partialorder %v2281, 8.507059e+37
  %v2283 = vand.u32 %v2271, 2147483648
  %v2284 = vor.u32 1.1754944e-38, %v2283
  %v2285 = vsel %vm2282, %v2284, %v2280
  %v2286 = vmul.f32 1.0, %v2285
  %v2287 = vld [vmem:[%s1107] sm:$0x3]
  %v2288 = vmul.f32 %v2267, %v2247
  %v2289 = vadd.f32 %v2287, %v2288
  %v2290 = vtanh.pop %v2289
  %v2291 = vsub.f32 1.0, %v2286
  %v2292 = vmul.f32 %v2291, %v2290
  %v2293 = vmul.f32 %v2286, %v2179
  %v2294 = vadd.f32 %v2292, %v2293
  %s2295 = scalar_lea.vmem %s9, 12
  %2296 = vst.msk [vmem:[%s2295] sm:$0x3] %vm116, %v2294
  %v2297 = vld [vmem:[%s1118] sm:$0x3]
  %v2299 = vsel %vm296, %v2294, 0
  %2301 = vmatpush.msra.mxu0 0.0
  %2302 = vmatpush.msra.mxu0 0.0
  %2303 = vmatpush.msra.mxu0 0.0
  %2304 = vmatpush.msra.mxu0 0.0
  %2305 = vmatpush.msra.mxu0 0.0
  %2306 = vmatpush.msra.mxu0 0.0
  %2307 = vmatpush.msra.mxu0 0.0
  %2308 = vmatpush.msra.mxu0 0.0
  %2309 = vmatpush.msra.mxu0 0.0
  %2310 = vmatpush.msra.mxu0 0.0
  %2311 = vmatpush.msra.mxu0 0.0
  %2312 = vmatpush.msra.mxu0 0.0
  %2313 = vmatpush.msra.mxu0 %v1481
  %2314 = vmatpush.msra.mxu0 %v1480
  %2315 = vmatpush.msra.mxu0 %v1479
  %2316 = vmatpush.msra.mxu0 %v1478
  %2317 = vmatmul.f32.gmra.mxu0 %v2299
  %v2318 = vpop.f32.mrf.mxu0
  %v2319 = vadd.f32 0.0, %v2318
  %2320 = vdwg.mxu0
  %v2321 = vadd.f32 %v2297, %v2319
  %v2322 = vld [vmem:[%s1144] sm:$0x3]
  %2323 = vmatpush.msra.mxu0 0.0
  %2324 = vmatpush.msra.mxu0 0.0
  %2325 = vmatpush.msra.mxu0 0.0
  %2326 = vmatpush.msra.mxu0 0.0
  %2327 = vmatpush.msra.mxu0 0.0
  %2328 = vmatpush.msra.mxu0 0.0
  %2329 = vmatpush.msra.mxu0 0.0
  %2330 = vmatpush.msra.mxu0 0.0
  %2331 = vmatpush.msra.mxu0 0.0
  %2332 = vmatpush.msra.mxu0 0.0
  %2333 = vmatpush.msra.mxu0 0.0
  %2334 = vmatpush.msra.mxu0 0.0
  %2335 = vmatpush.msra.mxu0 %v1486
  %2336 = vmatpush.msra.mxu0 %v1485
  %2337 = vmatpush.msra.mxu0 %v1484
  %2338 = vmatpush.msra.mxu0 %v1483
  %2339 = vmatmul.f32.gmra.mxu0 %v2299
  %v2340 = vpop.f32.mrf.mxu0
  %v2341 = vadd.f32 0.0, %v2340
  %2342 = vdwg.mxu0
  %v2343 = vadd.f32 %v2322, %v2341
  %2344 = vmatpush.msra.mxu0 0.0
  %2345 = vmatpush.msra.mxu0 0.0
  %2346 = vmatpush.msra.mxu0 0.0
  %2347 = vmatpush.msra.mxu0 0.0
  %2348 = vmatpush.msra.mxu0 0.0
  %2349 = vmatpush.msra.mxu0 0.0
  %2350 = vmatpush.msra.mxu0 0.0
  %2351 = vmatpush.msra.mxu0 0.0
  %2352 = vmatpush.msra.mxu0 0.0
  %2353 = vmatpush.msra.mxu0 0.0
  %2354 = vmatpush.msra.mxu0 0.0
  %2355 = vmatpush.msra.mxu0 0.0
  %2356 = vmatpush.msra.mxu0 %v1491
  %2357 = vmatpush.msra.mxu0 %v1490
  %2358 = vmatpush.msra.mxu0 %v1489
  %2359 = vmatpush.msra.mxu0 %v1488
  %2360 = vmatmul.f32.gmra.mxu0 %v2299
  %v2361 = vpop.f32.mrf.mxu0
  %v2362 = vadd.f32 %v1494, %v2361
  %2363 = vdwg.mxu0
  %v2364 = vxor.u32 %v2321, 2147483648
  %v2365 = vmul.f32 %v2364, 1.442695
  %v2366 = vpow.pop %v2365
  %v2367 = vadd.f32 %v2366, 1.0
  %v2368 = vrcp.pop %v2367
  %v2369 = vmul.f32 %v2367, %v2368
  %v2370 = vsub.f32 1.0, %v2369
  %v2371 = vmul.f32 %v2368, %v2370
  %v2372 = vadd.f32 %v2368, %v2371
  %vm2373 = vweird.f32 %v2367
  %vm2374 = vweird.f32 %v2368
  %vm2375 = vmor %vm2373, %vm2374
  %v2376 = vsel %vm2375, %v2368, %v2372
  %v2377 = vand.u32 2147483647, %v2367
  %vm2378 = vcmp.eq.f32.partialorder %v2377, 8.507059e+37
  %v2379 = vand.u32 %v2367, 2147483648
  %v2380 = vor.u32 1.1754944e-38, %v2379
  %v2381 = vsel %vm2378, %v2380, %v2376
  %v2382 = vmul.f32 1.0, %v2381
  %v2383 = vxor.u32 %v2343, 2147483648
  %v2384 = vmul.f32 %v2383, 1.442695
  %v2385 = vpow.pop %v2384
  %v2386 = vadd.f32 %v2385, 1.0
  %v2387 = vrcp.pop %v2386
  %v2388 = vmul.f32 %v2386, %v2387
  %v2389 = vsub.f32 1.0, %v2388
  %v2390 = vmul.f32 %v2387, %v2389
  %v2391 = vadd.f32 %v2387, %v2390
  %vm2392 = vweird.f32 %v2386
  %vm2393 = vweird.f32 %v2387
  %vm2394 = vmor %vm2392, %vm2393
  %v2395 = vsel %vm2394, %v2387, %v2391
  %v2396 = vand.u32 2147483647, %v2386
  %vm2397 = vcmp.eq.f32.partialorder %v2396, 8.507059e+37
  %v2398 = vand.u32 %v2386, 2147483648
  %v2399 = vor.u32 1.1754944e-38, %v2398
  %v2400 = vsel %vm2397, %v2399, %v2395
  %v2401 = vmul.f32 1.0, %v2400
  %v2402 = vld [vmem:[%s1225] sm:$0x3]
  %v2403 = vmul.f32 %v2382, %v2362
  %v2404 = vadd.f32 %v2402, %v2403
  %v2405 = vtanh.pop %v2404
  %v2406 = vsub.f32 1.0, %v2401
  %v2407 = vmul.f32 %v2406, %v2405
  %v2408 = vmul.f32 %v2401, %v2294
  %v2409 = vadd.f32 %v2407, %v2408
  %s2410 = scalar_lea.vmem %s9, 14
  %2411 = vst.msk [vmem:[%s2410] sm:$0x3] %vm116, %v2409
  // Predicated region
  $region38: #{gru_layer_forward.1} parent=0 // pred_check
    _
  $region39: #{gru_layer_forward.1} parent=0 // pred_check_branch
    %2413 = sbr.rel (0) target = $region41
  $region40: #{gru_layer_forward.1} parent=0 // pred_region
    _
  $region41: #{gru_layer_forward.1} parent=0 // pred_fallthru
    _
  // Predicated region
  $region42: #{gru_layer_forward.1} parent=0 // pred_check
    _
  $region43: #{gru_layer_forward.1} parent=0 // pred_check_branch
    %2415 = sbr.rel (0) target = $region45
  $region44: #{gru_layer_forward.1} parent=0 // pred_region
    _
  $region45: #{gru_layer_forward.1} parent=0 // pred_fallthru
    _

</llo_original>
